<compile_context>
chip_gen: v7x
topology: tpu7x:2x2x1
jax: 0.10.0
libtpu: 0.0.40
codegen_flags: <defaults>
</compile_context>

<pallas_src>
import functools
import math

import jax
import jax.numpy as jnp
from jax.experimental import pallas as pl
from jax.experimental.pallas import tpu as pltpu


# ----------------------------------------------------------------------------
# in-kernel helpers (pure jnp on tiles that live in VMEM)
# ----------------------------------------------------------------------------
def _layer_norm(x, g, b, eps=1e-12):
    # ESPnet LayerNorm == torch.nn.LayerNorm(size, eps=1e-12) over last dim.
    mu = jnp.mean(x, axis=-1, keepdims=True)
    var = jnp.mean((x - mu) ** 2, axis=-1, keepdims=True)
    return (x - mu) * jax.lax.rsqrt(var + eps) * g + b


def _split_heads(x2d_bf, n_heads, dk, bt, t, offset=0):
    """(BT*T, >=offset+H*dk) bf16 -> (H*BT, T, dk) bf16 (head-major batch)."""
    parts = [x2d_bf[:, offset + h * dk: offset + (h + 1) * dk].reshape(bt, t, dk)
             for h in range(n_heads)]
    return jnp.concatenate(parts, axis=0)


def _merge_heads(ctx, n_heads, dk, bt, t):
    """(H*BT, T, dk) -> (BT*T, H*dk)."""
    parts = [ctx[h * bt:(h + 1) * bt].reshape(bt * t, dk)
             for h in range(n_heads)]
    return jnp.concatenate(parts, axis=-1)


def _attend(qh, kh, vh, keep, n_heads, bt, tq, tk, dk):
    """Masked softmax attention on head-major bf16 tiles.

    qh: (H*BT, Tq, dk) bf16 (already scaled by 1/sqrt(dk)),
    kh/vh: (H*BT, Tk, dk) bf16, keep: (BT, Tq, Tk) bool.
    Returns (BT*Tq, H*dk) bf16 context.
    """
    # one batched matmul over x = H*BT for every head / batch element
    s = jnp.einsum("xqd,xkd->xqk", qh, kh,
                   preferred_element_type=jnp.float32)       # (H*BT, Tq, Tk)
    s = s.reshape(n_heads, bt, tq, tk)
    keep4 = keep[None]                        # (1, BT, Tq, Tk) broadcast over H
    s = jnp.where(keep4, s, -1e30)

    # manual softmax: denominator reciprocal on the EUP (approx is plenty,
    # probs are cast to bf16 right after).  denom >= 1 always (max term is 1).
    m = jnp.max(s, axis=-1, keepdims=True)
    e = jnp.exp(s - m)
    denom = jnp.sum(e, axis=-1, keepdims=True)
    p = e * pl.reciprocal(denom, approx=True)
    p = jnp.where(keep4, p, 0.0)              # ESPnet zeroes fully-masked rows
    p = p.reshape(n_heads * bt, tq, tk).astype(jnp.bfloat16)

    ctx = jnp.einsum("xqk,xkd->xqd", p, vh,
                     preferred_element_type=jnp.float32)      # (H*BT, Tq, dk)
    return _merge_heads(ctx, n_heads, dk, bt, tq).astype(jnp.bfloat16)


# ----------------------------------------------------------------------------
# Pallas kernel: one grid step = one batch block, whole layer fused in VMEM
# ----------------------------------------------------------------------------
def decoder_layer_kernel(tgt_ref, tmask_ref, mem_ref, mmask_ref,
                         n1g, n1b, n2g, n2b, n3g, n3b,
                         w_qkv1, b_qkv1, wo1, bo1,
                         wq2, bq2, w_kv2, b_kv2, wo2, bo2,
                         ffw1, ffb1, ffw2, ffb2,
                         out_ref, *, n_heads):
    bt, tq, d = tgt_ref.shape
    tm = mem_ref.shape[1]
    dk = d // n_heads
    scale = 1.0 / math.sqrt(dk)

    x = tgt_ref[...].reshape(bt * tq, d)                       # (N, D) f32
    mem_bf = mem_ref[...].reshape(bt * tm, d).astype(jnp.bfloat16)

    # hoisted mask compares (reused pre- and post-softmax)
    tkeep = tmask_ref[...] > 0                                 # (BT, Tq, Tq)
    mkeep = mmask_ref[...] > 0                                 # (BT, Tq, Tm)

    # --- self-attention block (normalize_before=True, concat_after=False) ---
    residual = x
    xn = _layer_norm(x, n1g[...], n1b[...]).astype(jnp.bfloat16)
    qkv = jnp.dot(xn, w_qkv1[...],
                  preferred_element_type=jnp.float32) + b_qkv1[...]   # (N, 3D)
    q_bf = (qkv[:, :d] * scale).astype(jnp.bfloat16)
    kv_bf = qkv[:, d:].astype(jnp.bfloat16)                    # (N, 2D)
    qh = _split_heads(q_bf, n_heads, dk, bt, tq)
    kh = _split_heads(kv_bf, n_heads, dk, bt, tq, offset=0)
    vh = _split_heads(kv_bf, n_heads, dk, bt, tq, offset=d)
    ctx = _attend(qh, kh, vh, tkeep, n_heads, bt, tq, tq, dk)
    sa = jnp.dot(ctx, wo1[...], preferred_element_type=jnp.float32) + bo1[...]
    x = residual + sa          # dropout == identity at inference

    # --- source (cross) attention block ---
    residual = x
    xn = _layer_norm(x, n2g[...], n2b[...]).astype(jnp.bfloat16)
    q = jnp.dot(xn, wq2[...], preferred_element_type=jnp.float32) + bq2[...]
    kv = jnp.dot(mem_bf, w_kv2[...],
                 preferred_element_type=jnp.float32) + b_kv2[...]     # (Nk, 2D)
    q_bf = (q * scale).astype(jnp.bfloat16)
    kv_bf = kv.astype(jnp.bfloat16)
    qh = _split_heads(q_bf, n_heads, dk, bt, tq)
    kh = _split_heads(kv_bf, n_heads, dk, bt, tm, offset=0)
    vh = _split_heads(kv_bf, n_heads, dk, bt, tm, offset=d)
    ctx = _attend(qh, kh, vh, mkeep, n_heads, bt, tq, tm, dk)
    ca = jnp.dot(ctx, wo2[...], preferred_element_type=jnp.float32) + bo2[...]
    x = residual + ca

    # --- position-wise feed-forward block ---
    residual = x
    xn = _layer_norm(x, n3g[...], n3b[...]).astype(jnp.bfloat16)
    h = jax.nn.relu(jnp.dot(xn, ffw1[...],
                            preferred_element_type=jnp.float32) + ffb1[...])
    h = h.astype(jnp.bfloat16)
    ff = jnp.dot(h, ffw2[...], preferred_element_type=jnp.float32) + ffb2[...]
    x = residual + ff

    out_ref[...] = x.reshape(bt, tq, d).astype(out_ref.dtype)


# ----------------------------------------------------------------------------
# wrapper
# ----------------------------------------------------------------------------
def decoder_layer_forward(tgt, tgt_mask, memory, memory_mask, params, n_heads,
                          batch_block=8):
    B, Tq, D = tgt.shape
    Tm = memory.shape[1]
    bt = math.gcd(B, batch_block)          # batch elements folded per grid step
    grid = (B // bt,)
    ff_dim = params["ff_w1"].shape[1]

    # Fuse Q/K/V (self-attn) and K/V (cross-attn) projection weights so each
    # becomes a single MXU matmul in the kernel.  In a real deployment these
    # concatenations would be done once at load time.
    w_qkv1 = jnp.concatenate(
        [params["sa_wq"], params["sa_wk"], params["sa_wv"]], axis=1)
    b_qkv1 = jnp.concatenate(
        [params["sa_bq"], params["sa_bk"], params["sa_bv"]], axis=1)
    w_kv2 = jnp.concatenate([params["ca_wk"], params["ca_wv"]], axis=1)
    b_kv2 = jnp.concatenate([params["ca_bk"], params["ca_bv"]], axis=1)

    w_args = [
        params["n1_g"], params["n1_b"], params["n2_g"], params["n2_b"],
        params["n3_g"], params["n3_b"],
        w_qkv1, b_qkv1, params["sa_wo"], params["sa_bo"],
        params["ca_wq"], params["ca_bq"], w_kv2, b_kv2,
        params["ca_wo"], params["ca_bo"],
        params["ff_w1"], params["ff_b1"], params["ff_w2"], params["ff_b2"],
    ]

    tgt = tgt.astype(jnp.float32)
    memory = memory.astype(jnp.float32)
    tmask_bf = tgt_mask.astype(jnp.bfloat16)     # {0,1} exact in bf16
    mmask_bf = memory_mask.astype(jnp.bfloat16)

    def full_spec(arr):
        nd = arr.ndim
        return pl.BlockSpec(arr.shape, lambda b, _nd=nd: (0,) * _nd)

    in_specs = [
        pl.BlockSpec((bt, Tq, D), lambda b: (b, 0, 0)),     # tgt
        pl.BlockSpec((bt, Tq, Tq), lambda b: (b, 0, 0)),    # tgt_mask (bf16)
        pl.BlockSpec((bt, Tm, D), lambda b: (b, 0, 0)),     # memory
        pl.BlockSpec((bt, Tq, Tm), lambda b: (b, 0, 0)),    # memory_mask (bf16)
    ] + [full_spec(a) for a in w_args]

    # explicit scoped-VMEM budget (instead of the 16/32 MiB default), capped
    # at 64 MiB so it stays within v7x physical VMEM.
    blk = 4 * (2 * bt * Tq * D + bt * Tm * D) + 2 * bt * Tq * (Tq + Tm)
    wb = sum(int(math.prod(a.shape)) * a.dtype.itemsize for a in w_args)
    inter = 4 * (8 * bt * Tq * D + 3 * bt * Tm * D
                 + 3 * bt * n_heads * Tq * max(Tq, Tm) + 2 * bt * Tq * ff_dim)
    vmem_limit = int(min(max(2 * blk + 2 * wb + inter + (4 << 20), 32 << 20),
                         64 << 20))

    kernel = functools.partial(decoder_layer_kernel, n_heads=n_heads)
    out = pl.pallas_call(
        kernel,
        out_shape=jax.ShapeDtypeStruct((B, Tq, D), jnp.float32),
        grid_spec=pltpu.PrefetchScalarGridSpec(
            num_scalar_prefetch=0,
            grid=grid,
            in_specs=in_specs,
            out_specs=pl.BlockSpec((bt, Tq, D), lambda b: (b, 0, 0)),
        ),
        compiler_params=pltpu.CompilerParams(
            dimension_semantics=("parallel",),
            vmem_limit_bytes=vmem_limit),
    )(tgt, tmask_bf, memory, mmask_bf, *w_args)
    # forward() returns (x, tgt_mask, memory, memory_mask)
    return out, tgt_mask, memory, memory_mask


# ----------------------------------------------------------------------------
# pure-JAX reference (same mixed-precision recipe, no Pallas)
# ----------------------------------------------------------------------------
def ref_forward(tgt, tgt_mask, memory, memory_mask, p, n_heads):
    def ln(x, g, b, eps=1e-12):
        mu = jnp.mean(x, axis=-1, keepdims=True)
        var = jnp.mean((x - mu) ** 2, axis=-1, keepdims=True)
        return (x - mu) * jax.lax.rsqrt(var + eps) * g + b

    def mha(q_in, kv_in, mask, wq, bq, wk, bk, wv, bv, wo, bo):
        B, Tq, D = q_in.shape
        Tk = kv_in.shape[1]
        dk = D // n_heads
        scale = 1.0 / math.sqrt(dk)
        qb = q_in.astype(jnp.bfloat16)
        kvb = kv_in.astype(jnp.bfloat16)
        q = jnp.einsum("btd,de->bte", qb, wq,
                       preferred_element_type=jnp.float32) + bq
        k = jnp.einsum("btd,de->bte", kvb, wk,
                       preferred_element_type=jnp.float32) + bk
        v = jnp.einsum("btd,de->bte", kvb, wv,
                       preferred_element_type=jnp.float32) + bv
        qh = q.reshape(B, Tq, n_heads, dk).astype(jnp.bfloat16)
        kh = k.reshape(B, Tk, n_heads, dk).astype(jnp.bfloat16)
        vh = v.reshape(B, Tk, n_heads, dk).astype(jnp.bfloat16)
        s = jnp.einsum("bqhd,bkhd->bhqk", qh, kh,
                       preferred_element_type=jnp.float32) * scale
        keep = (mask > 0)[:, None, :, :]
        s = jnp.where(keep, s, -1e30)
        pr = jax.nn.softmax(s, axis=-1)
        pr = jnp.where(keep, pr, 0.0).astype(jnp.bfloat16)
        ctx = jnp.einsum("bhqk,bkhd->bqhd", pr, vh,
                         preferred_element_type=jnp.float32)
        ctx = ctx.reshape(B, Tq, D).astype(jnp.bfloat16)
        return jnp.einsum("btd,de->bte", ctx, wo,
                          preferred_element_type=jnp.float32) + bo

    x = tgt.astype(jnp.float32)
    mem = memory.astype(jnp.float32)

    r = x
    xn = ln(x, p["n1_g"], p["n1_b"])
    x = r + mha(xn, xn, tgt_mask,
                p["sa_wq"], p["sa_bq"], p["sa_wk"], p["sa_bk"],
                p["sa_wv"], p["sa_bv"], p["sa_wo"], p["sa_bo"])
    r = x
    xn = ln(x, p["n2_g"], p["n2_b"])
    x = r + mha(xn, mem, memory_mask,
                p["ca_wq"], p["ca_bq"], p["ca_wk"], p["ca_bk"],
                p["ca_wv"], p["ca_bv"], p["ca_wo"], p["ca_bo"])
    r = x
    xn = ln(x, p["n3_g"], p["n3_b"]).astype(jnp.bfloat16)
    h = jax.nn.relu(jnp.einsum("btd,df->btf", xn, p["ff_w1"],
                               preferred_element_type=jnp.float32) + p["ff_b1"])
    h = h.astype(jnp.bfloat16)
    ff = jnp.einsum("btf,fd->btd", h, p["ff_w2"],
                    preferred_element_type=jnp.float32) + p["ff_b2"]
    return r + ff


# ----------------------------------------------------------------------------
# deterministic parameter init (weights bf16, biases / LN params f32)
# ----------------------------------------------------------------------------
def make_params(key, size, ff_units):
    ks = jax.random.split(key, 16)
    std = 0.05

    def lin(k, din, dout):
        kw, kb = jax.random.split(k)
        w = (std * jax.random.normal(kw, (din, dout), jnp.float32)
             ).astype(jnp.bfloat16)
        b = std * jax.random.normal(kb, (1, dout), jnp.float32)
        return w, b

    p = {}
    p["n1_g"] = jnp.ones((1, size), jnp.float32) + 0.01 * jax.random.normal(ks[0], (1, size))
    p["n1_b"] = 0.01 * jax.random.normal(ks[1], (1, size), jnp.float32)
    p["n2_g"] = jnp.ones((1, size), jnp.float32) + 0.01 * jax.random.normal(ks[2], (1, size))
    p["n2_b"] = 0.01 * jax.random.normal(ks[3], (1, size), jnp.float32)
    p["n3_g"] = jnp.ones((1, size), jnp.float32) + 0.01 * jax.random.normal(ks[4], (1, size))
    p["n3_b"] = 0.01 * jax.random.normal(ks[5], (1, size), jnp.float32)
    p["sa_wq"], p["sa_bq"] = lin(ks[6], size, size)
    p["sa_wk"], p["sa_bk"] = lin(ks[7], size, size)
    p["sa_wv"], p["sa_bv"] = lin(ks[8], size, size)
    p["sa_wo"], p["sa_bo"] = lin(ks[9], size, size)
    p["ca_wq"], p["ca_bq"] = lin(ks[10], size, size)
    p["ca_wk"], p["ca_bk"] = lin(ks[11], size, size)
    p["ca_wv"], p["ca_bv"] = lin(ks[12], size, size)
    p["ca_wo"], p["ca_bo"] = lin(ks[13], size, size)
    p["ff_w1"], p["ff_b1"] = lin(ks[14], size, ff_units)
    p["ff_w2"], p["ff_b2"] = lin(ks[15], ff_units, size)
    return p


if __name__ == "__main__":
    B, Tq, Tm, D, H, FF = 2, 8, 16, 32, 4, 64

    key = jax.random.PRNGKey(0)
    k_tgt, k_mem, k_par = jax.random.split(key, 3)

    tgt = jax.random.normal(k_tgt, (B, Tq, D), jnp.float32)
    memory = jax.random.normal(k_mem, (B, Tm, D), jnp.float32)

    # causal self-attention mask (B, Tq, Tq), 1 = keep
    causal = jnp.tril(jnp.ones((Tq, Tq), jnp.float32))
    tgt_mask = jnp.broadcast_to(causal, (B, Tq, Tq))
    # memory mask (B, Tq, Tm): batch 1 has its last 3 encoder frames padded
    mmask = jnp.ones((B, Tq, Tm), jnp.float32)
    mmask = mmask.at[1, :, Tm - 3:].set(0.0)

    params = make_params(k_par, D, FF)

    out, _, _, _ = decoder_layer_forward(tgt, tgt_mask, memory, mmask,
                                         params, H)
    out = jax.block_until_ready(out)

    ref = jax.block_until_ready(
        ref_forward(tgt, tgt_mask, memory, mmask, params, H))
    assert out.shape == (B, Tq, D)
    max_err = float(jnp.max(jnp.abs(out - ref)))
    assert jnp.allclose(out, ref, atol=2e-2, rtol=2e-2), max_err

    print("KERNEL_OK")
</pallas_src>

<mosaic_0001>
module attributes {stable_mosaic.version = 11 : i64} {
  func.func @decoder_layer_kernel(%arg0: i32, %arg1: memref<2x8x32xf32, #tpu.memory_space<vmem>>, %arg2: memref<2x8x8xbf16, #tpu.memory_space<vmem>>, %arg3: memref<2x16x32xf32, #tpu.memory_space<vmem>>, %arg4: memref<2x8x16xbf16, #tpu.memory_space<vmem>>, %arg5: memref<1x32xf32, #tpu.memory_space<vmem>>, %arg6: memref<1x32xf32, #tpu.memory_space<vmem>>, %arg7: memref<1x32xf32, #tpu.memory_space<vmem>>, %arg8: memref<1x32xf32, #tpu.memory_space<vmem>>, %arg9: memref<1x32xf32, #tpu.memory_space<vmem>>, %arg10: memref<1x32xf32, #tpu.memory_space<vmem>>, %arg11: memref<32x96xbf16, #tpu.memory_space<vmem>>, %arg12: memref<1x96xf32, #tpu.memory_space<vmem>>, %arg13: memref<32x32xbf16, #tpu.memory_space<vmem>>, %arg14: memref<1x32xf32, #tpu.memory_space<vmem>>, %arg15: memref<32x32xbf16, #tpu.memory_space<vmem>>, %arg16: memref<1x32xf32, #tpu.memory_space<vmem>>, %arg17: memref<32x64xbf16, #tpu.memory_space<vmem>>, %arg18: memref<1x64xf32, #tpu.memory_space<vmem>>, %arg19: memref<32x32xbf16, #tpu.memory_space<vmem>>, %arg20: memref<1x32xf32, #tpu.memory_space<vmem>>, %arg21: memref<32x64xbf16, #tpu.memory_space<vmem>>, %arg22: memref<1x64xf32, #tpu.memory_space<vmem>>, %arg23: memref<64x32xbf16, #tpu.memory_space<vmem>>, %arg24: memref<1x32xf32, #tpu.memory_space<vmem>>, %arg25: memref<2x8x32xf32, #tpu.memory_space<vmem>>) attributes {dimension_semantics = [#tpu.dimension_semantics<parallel>], iteration_bounds = array<i64: 1>, scalar_prefetch = 0 : i64, scratch_operands = 0 : i64, tpu.core_type = #tpu.core_type<tc>, window_params = [{transform_indices = @transform_0, window_bounds = array<i64: 2, 8, 32>}, {transform_indices = @transform_1, window_bounds = array<i64: 2, 8, 8>}, {transform_indices = @transform_2, window_bounds = array<i64: 2, 16, 32>}, {transform_indices = @transform_3, window_bounds = array<i64: 2, 8, 16>}, {pipeline_mode = #tpu.pipeline_mode<synchronous>, transform_indices = @transform_4, window_bounds = array<i64: 1, 32>}, {pipeline_mode = #tpu.pipeline_mode<synchronous>, transform_indices = @transform_5, window_bounds = array<i64: 1, 32>}, {pipeline_mode = #tpu.pipeline_mode<synchronous>, transform_indices = @transform_6, window_bounds = array<i64: 1, 32>}, {pipeline_mode = #tpu.pipeline_mode<synchronous>, transform_indices = @transform_7, window_bounds = array<i64: 1, 32>}, {pipeline_mode = #tpu.pipeline_mode<synchronous>, transform_indices = @transform_8, window_bounds = array<i64: 1, 32>}, {pipeline_mode = #tpu.pipeline_mode<synchronous>, transform_indices = @transform_9, window_bounds = array<i64: 1, 32>}, {pipeline_mode = #tpu.pipeline_mode<synchronous>, transform_indices = @transform_10, window_bounds = array<i64: 32, 96>}, {pipeline_mode = #tpu.pipeline_mode<synchronous>, transform_indices = @transform_11, window_bounds = array<i64: 1, 96>}, {pipeline_mode = #tpu.pipeline_mode<synchronous>, transform_indices = @transform_12, window_bounds = array<i64: 32, 32>}, {pipeline_mode = #tpu.pipeline_mode<synchronous>, transform_indices = @transform_13, window_bounds = array<i64: 1, 32>}, {pipeline_mode = #tpu.pipeline_mode<synchronous>, transform_indices = @transform_14, window_bounds = array<i64: 32, 32>}, {pipeline_mode = #tpu.pipeline_mode<synchronous>, transform_indices = @transform_15, window_bounds = array<i64: 1, 32>}, {pipeline_mode = #tpu.pipeline_mode<synchronous>, transform_indices = @transform_16, window_bounds = array<i64: 32, 64>}, {pipeline_mode = #tpu.pipeline_mode<synchronous>, transform_indices = @transform_17, window_bounds = array<i64: 1, 64>}, {pipeline_mode = #tpu.pipeline_mode<synchronous>, transform_indices = @transform_18, window_bounds = array<i64: 32, 32>}, {pipeline_mode = #tpu.pipeline_mode<synchronous>, transform_indices = @transform_19, window_bounds = array<i64: 1, 32>}, {pipeline_mode = #tpu.pipeline_mode<synchronous>, transform_indices = @transform_20, window_bounds = array<i64: 32, 64>}, {pipeline_mode = #tpu.pipeline_mode<synchronous>, transform_indices = @transform_21, window_bounds = array<i64: 1, 64>}, {pipeline_mode = #tpu.pipeline_mode<synchronous>, transform_indices = @transform_22, window_bounds = array<i64: 64, 32>}, {pipeline_mode = #tpu.pipeline_mode<synchronous>, transform_indices = @transform_23, window_bounds = array<i64: 1, 32>}, {transform_indices = @transform_24, window_bounds = array<i64: 2, 8, 32>}]} {
    %c0 = arith.constant 0 : index
    %c0_0 = arith.constant 0 : index
    %c0_1 = arith.constant 0 : index
    %0 = vector.load %arg1[%c0, %c0_0, %c0_1] : memref<2x8x32xf32, #tpu.memory_space<vmem>>, vector<2x8x32xf32>
    %1 = vector.shape_cast %0 : vector<2x8x32xf32> to vector<16x32xf32>
    %c0_2 = arith.constant 0 : index
    %c0_3 = arith.constant 0 : index
    %c0_4 = arith.constant 0 : index
    %2 = vector.load %arg3[%c0_2, %c0_3, %c0_4] : memref<2x16x32xf32, #tpu.memory_space<vmem>>, vector<2x16x32xf32>
    %3 = vector.shape_cast %2 : vector<2x16x32xf32> to vector<32x32xf32>
    %4 = arith.truncf %3 : vector<32x32xf32> to vector<32x32xbf16>
    %c0_5 = arith.constant 0 : index
    %c0_6 = arith.constant 0 : index
    %c0_7 = arith.constant 0 : index
    %5 = vector.load %arg2[%c0_5, %c0_6, %c0_7] : memref<2x8x8xbf16, #tpu.memory_space<vmem>>, vector<2x8x8xbf16>
    %cst = arith.constant 0.000000e+00 : bf16
    %6 = vector.broadcast %cst : bf16 to vector<2x8x8xbf16>
    %7 = arith.cmpf ogt, %5, %6 : vector<2x8x8xbf16>
    %c0_8 = arith.constant 0 : index
    %c0_9 = arith.constant 0 : index
    %c0_10 = arith.constant 0 : index
    %8 = vector.load %arg4[%c0_8, %c0_9, %c0_10] : memref<2x8x16xbf16, #tpu.memory_space<vmem>>, vector<2x8x16xbf16>
    %cst_11 = arith.constant 0.000000e+00 : bf16
    %9 = vector.broadcast %cst_11 : bf16 to vector<2x8x16xbf16>
    %10 = arith.cmpf ogt, %8, %9 : vector<2x8x16xbf16>
    %c0_12 = arith.constant 0 : index
    %c0_13 = arith.constant 0 : index
    %11 = vector.load %arg5[%c0_12, %c0_13] : memref<1x32xf32, #tpu.memory_space<vmem>>, vector<1x32xf32>
    %c0_14 = arith.constant 0 : index
    %c0_15 = arith.constant 0 : index
    %12 = vector.load %arg6[%c0_14, %c0_15] : memref<1x32xf32, #tpu.memory_space<vmem>>, vector<1x32xf32>
    %cst_16 = arith.constant dense<0.000000e+00> : vector<16xf32>
    %13 = vector.multi_reduction <add>, %1, %cst_16 [1] : vector<16x32xf32> to vector<16xf32>
    %14 = vector.shape_cast %13 : vector<16xf32> to vector<16x1xf32>
    %cst_17 = arith.constant 3.200000e+01 : f32
    %15 = vector.broadcast %cst_17 : f32 to vector<16x1xf32>
    %16 = arith.divf %14, %15 : vector<16x1xf32>
    %17 = vector.broadcast %16 : vector<16x1xf32> to vector<16x32xf32>
    %18 = arith.subf %1, %17 : vector<16x32xf32>
    %19 = arith.mulf %18, %18 : vector<16x32xf32>
    %cst_18 = arith.constant dense<0.000000e+00> : vector<16xf32>
    %20 = vector.multi_reduction <add>, %19, %cst_18 [1] : vector<16x32xf32> to vector<16xf32>
    %21 = vector.shape_cast %20 : vector<16xf32> to vector<16x1xf32>
    %cst_19 = arith.constant 3.200000e+01 : f32
    %22 = vector.broadcast %cst_19 : f32 to vector<16x1xf32>
    %23 = arith.divf %21, %22 : vector<16x1xf32>
    %24 = vector.broadcast %16 : vector<16x1xf32> to vector<16x32xf32>
    %25 = arith.subf %1, %24 : vector<16x32xf32>
    %cst_20 = arith.constant 9.99999996E-13 : f32
    %26 = vector.broadcast %cst_20 : f32 to vector<16x1xf32>
    %27 = arith.addf %23, %26 : vector<16x1xf32>
    %28 = math.rsqrt %27 : vector<16x1xf32>
    %29 = vector.broadcast %28 : vector<16x1xf32> to vector<16x32xf32>
    %30 = arith.mulf %25, %29 : vector<16x32xf32>
    %31 = vector.broadcast %11 : vector<1x32xf32> to vector<16x32xf32>
    %32 = arith.mulf %30, %31 : vector<16x32xf32>
    %33 = vector.broadcast %12 : vector<1x32xf32> to vector<16x32xf32>
    %34 = arith.addf %32, %33 : vector<16x32xf32>
    %35 = arith.truncf %34 : vector<16x32xf32> to vector<16x32xbf16>
    %c0_21 = arith.constant 0 : index
    %c0_22 = arith.constant 0 : index
    %36 = vector.load %arg11[%c0_21, %c0_22] : memref<32x96xbf16, #tpu.memory_space<vmem>>, vector<32x96xbf16>
    %cst_23 = arith.constant dense<0.000000e+00> : vector<16x96xf32>
    %37 = tpu.matmul %35, %36, %cst_23 {dimension_numbers = #tpu.dot_dimension_numbers<[1], [0], [0], [1], [0, 0, 1, 1], [], []>} : vector<16x32xbf16>, vector<32x96xbf16>, vector<16x96xf32> -> vector<16x96xf32>
    %c0_24 = arith.constant 0 : index
    %c0_25 = arith.constant 0 : index
    %38 = vector.load %arg12[%c0_24, %c0_25] : memref<1x96xf32, #tpu.memory_space<vmem>>, vector<1x96xf32>
    %39 = vector.broadcast %38 : vector<1x96xf32> to vector<16x96xf32>
    %40 = arith.addf %37, %39 : vector<16x96xf32>
    %41 = vector.extract_strided_slice %40 {offsets = [0, 0], sizes = [16, 32], strides = [1, 1]} : vector<16x96xf32> to vector<16x32xf32>
    %cst_26 = arith.constant 0.353553385 : f32
    %42 = vector.broadcast %cst_26 : f32 to vector<16x32xf32>
    %43 = arith.mulf %41, %42 : vector<16x32xf32>
    %44 = arith.truncf %43 : vector<16x32xf32> to vector<16x32xbf16>
    %45 = vector.extract_strided_slice %40 {offsets = [0, 32], sizes = [16, 64], strides = [1, 1]} : vector<16x96xf32> to vector<16x64xf32>
    %46 = arith.truncf %45 : vector<16x64xf32> to vector<16x64xbf16>
    %47 = vector.extract_strided_slice %44 {offsets = [0, 0], sizes = [16, 8], strides = [1, 1]} : vector<16x32xbf16> to vector<16x8xbf16>
    %48 = vector.shape_cast %47 : vector<16x8xbf16> to vector<2x8x8xbf16>
    %49 = vector.extract_strided_slice %44 {offsets = [0, 8], sizes = [16, 8], strides = [1, 1]} : vector<16x32xbf16> to vector<16x8xbf16>
    %50 = vector.shape_cast %49 : vector<16x8xbf16> to vector<2x8x8xbf16>
    %51 = vector.extract_strided_slice %44 {offsets = [0, 16], sizes = [16, 8], strides = [1, 1]} : vector<16x32xbf16> to vector<16x8xbf16>
    %52 = vector.shape_cast %51 : vector<16x8xbf16> to vector<2x8x8xbf16>
    %53 = vector.extract_strided_slice %44 {offsets = [0, 24], sizes = [16, 8], strides = [1, 1]} : vector<16x32xbf16> to vector<16x8xbf16>
    %54 = vector.shape_cast %53 : vector<16x8xbf16> to vector<2x8x8xbf16>
    %55 = tpu.concatenate %48, %50, %52, %54 in 0 : vector<2x8x8xbf16>, vector<2x8x8xbf16>, vector<2x8x8xbf16>, vector<2x8x8xbf16> -> vector<8x8x8xbf16>
    %56 = vector.extract_strided_slice %46 {offsets = [0, 0], sizes = [16, 8], strides = [1, 1]} : vector<16x64xbf16> to vector<16x8xbf16>
    %57 = vector.shape_cast %56 : vector<16x8xbf16> to vector<2x8x8xbf16>
    %58 = vector.extract_strided_slice %46 {offsets = [0, 8], sizes = [16, 8], strides = [1, 1]} : vector<16x64xbf16> to vector<16x8xbf16>
    %59 = vector.shape_cast %58 : vector<16x8xbf16> to vector<2x8x8xbf16>
    %60 = vector.extract_strided_slice %46 {offsets = [0, 16], sizes = [16, 8], strides = [1, 1]} : vector<16x64xbf16> to vector<16x8xbf16>
    %61 = vector.shape_cast %60 : vector<16x8xbf16> to vector<2x8x8xbf16>
    %62 = vector.extract_strided_slice %46 {offsets = [0, 24], sizes = [16, 8], strides = [1, 1]} : vector<16x64xbf16> to vector<16x8xbf16>
    %63 = vector.shape_cast %62 : vector<16x8xbf16> to vector<2x8x8xbf16>
    %64 = tpu.concatenate %57, %59, %61, %63 in 0 : vector<2x8x8xbf16>, vector<2x8x8xbf16>, vector<2x8x8xbf16>, vector<2x8x8xbf16> -> vector<8x8x8xbf16>
    %65 = vector.extract_strided_slice %46 {offsets = [0, 32], sizes = [16, 8], strides = [1, 1]} : vector<16x64xbf16> to vector<16x8xbf16>
    %66 = vector.shape_cast %65 : vector<16x8xbf16> to vector<2x8x8xbf16>
    %67 = vector.extract_strided_slice %46 {offsets = [0, 40], sizes = [16, 8], strides = [1, 1]} : vector<16x64xbf16> to vector<16x8xbf16>
    %68 = vector.shape_cast %67 : vector<16x8xbf16> to vector<2x8x8xbf16>
    %69 = vector.extract_strided_slice %46 {offsets = [0, 48], sizes = [16, 8], strides = [1, 1]} : vector<16x64xbf16> to vector<16x8xbf16>
    %70 = vector.shape_cast %69 : vector<16x8xbf16> to vector<2x8x8xbf16>
    %71 = vector.extract_strided_slice %46 {offsets = [0, 56], sizes = [16, 8], strides = [1, 1]} : vector<16x64xbf16> to vector<16x8xbf16>
    %72 = vector.shape_cast %71 : vector<16x8xbf16> to vector<2x8x8xbf16>
    %73 = tpu.concatenate %66, %68, %70, %72 in 0 : vector<2x8x8xbf16>, vector<2x8x8xbf16>, vector<2x8x8xbf16>, vector<2x8x8xbf16> -> vector<8x8x8xbf16>
    "tpu.trace_start"() <{level = 10 : i32, message = "xqd,xkd->xqk"}> : () -> ()
    %cst_27 = arith.constant dense<0.000000e+00> : vector<8x8x8xf32>
    %74 = tpu.matmul %55, %64, %cst_27 {dimension_numbers = #tpu.dot_dimension_numbers<[2], [2], [1], [1], [0, 0, 0, 1, 1, 1], [0], [0]>} : vector<8x8x8xbf16>, vector<8x8x8xbf16>, vector<8x8x8xf32> -> vector<8x8x8xf32>
    "tpu.trace_stop"() : () -> ()
    %75 = vector.shape_cast %74 : vector<8x8x8xf32> to vector<4x2x8x8xf32>
    %76 = vector.shape_cast %7 : vector<2x8x8xi1> to vector<1x2x8x8xi1>
    %cst_28 = arith.constant -1.000000e+30 : f32
    %77 = vector.shape_cast %76 : vector<1x2x8x8xi1> to vector<1x2x8x8xi1>
    %78 = vector.broadcast %77 : vector<1x2x8x8xi1> to vector<4x2x8x8xi1>
    %79 = vector.broadcast %cst_28 : f32 to vector<4x2x8x8xf32>
    %80 = arith.select %78, %75, %79 : vector<4x2x8x8xi1>, vector<4x2x8x8xf32>
    %cst_29 = arith.constant dense<0xFF800000> : vector<4x2x8xf32>
    %81 = vector.multi_reduction <maximumf>, %80, %cst_29 [3] : vector<4x2x8x8xf32> to vector<4x2x8xf32>
    %82 = vector.shape_cast %81 : vector<4x2x8xf32> to vector<4x2x8x1xf32>
    %83 = vector.broadcast %82 : vector<4x2x8x1xf32> to vector<4x2x8x8xf32>
    %84 = arith.subf %80, %83 : vector<4x2x8x8xf32>
    %85 = math.exp %84 : vector<4x2x8x8xf32>
    %cst_30 = arith.constant dense<0.000000e+00> : vector<4x2x8xf32>
    %86 = vector.multi_reduction <add>, %85, %cst_30 [3] : vector<4x2x8x8xf32> to vector<4x2x8xf32>
    %87 = vector.shape_cast %86 : vector<4x2x8xf32> to vector<4x2x8x1xf32>
    %88 = tpu.reciprocal %87 {approx = true} : vector<4x2x8x1xf32> -> vector<4x2x8x1xf32>
    %89 = vector.broadcast %88 : vector<4x2x8x1xf32> to vector<4x2x8x8xf32>
    %90 = arith.mulf %85, %89 : vector<4x2x8x8xf32>
    %cst_31 = arith.constant 0.000000e+00 : f32
    %91 = vector.shape_cast %76 : vector<1x2x8x8xi1> to vector<1x2x8x8xi1>
    %92 = vector.broadcast %91 : vector<1x2x8x8xi1> to vector<4x2x8x8xi1>
    %93 = vector.broadcast %cst_31 : f32 to vector<4x2x8x8xf32>
    %94 = arith.select %92, %90, %93 : vector<4x2x8x8xi1>, vector<4x2x8x8xf32>
    %95 = vector.shape_cast %94 : vector<4x2x8x8xf32> to vector<8x8x8xf32>
    %96 = arith.truncf %95 : vector<8x8x8xf32> to vector<8x8x8xbf16>
    "tpu.trace_start"() <{level = 10 : i32, message = "xqk,xkd->xqd"}> : () -> ()
    %cst_32 = arith.constant dense<0.000000e+00> : vector<8x8x8xf32>
    %97 = tpu.matmul %96, %73, %cst_32 {dimension_numbers = #tpu.dot_dimension_numbers<[2], [1], [1], [2], [0, 0, 0, 1, 1, 2], [0], [0]>} : vector<8x8x8xbf16>, vector<8x8x8xbf16>, vector<8x8x8xf32> -> vector<8x8x8xf32>
    "tpu.trace_stop"() : () -> ()
    %98 = vector.extract_strided_slice %97 {offsets = [0, 0, 0], sizes = [2, 8, 8], strides = [1, 1, 1]} : vector<8x8x8xf32> to vector<2x8x8xf32>
    %99 = vector.shape_cast %98 : vector<2x8x8xf32> to vector<16x8xf32>
    %100 = vector.extract_strided_slice %97 {offsets = [2, 0, 0], sizes = [2, 8, 8], strides = [1, 1, 1]} : vector<8x8x8xf32> to vector<2x8x8xf32>
    %101 = vector.shape_cast %100 : vector<2x8x8xf32> to vector<16x8xf32>
    %102 = vector.extract_strided_slice %97 {offsets = [4, 0, 0], sizes = [2, 8, 8], strides = [1, 1, 1]} : vector<8x8x8xf32> to vector<2x8x8xf32>
    %103 = vector.shape_cast %102 : vector<2x8x8xf32> to vector<16x8xf32>
    %104 = vector.extract_strided_slice %97 {offsets = [6, 0, 0], sizes = [2, 8, 8], strides = [1, 1, 1]} : vector<8x8x8xf32> to vector<2x8x8xf32>
    %105 = vector.shape_cast %104 : vector<2x8x8xf32> to vector<16x8xf32>
    %106 = tpu.concatenate %99, %101, %103, %105 in 1 : vector<16x8xf32>, vector<16x8xf32>, vector<16x8xf32>, vector<16x8xf32> -> vector<16x32xf32>
    %107 = arith.truncf %106 : vector<16x32xf32> to vector<16x32xbf16>
    %c0_33 = arith.constant 0 : index
    %c0_34 = arith.constant 0 : index
    %108 = vector.load %arg13[%c0_33, %c0_34] : memref<32x32xbf16, #tpu.memory_space<vmem>>, vector<32x32xbf16>
    %cst_35 = arith.constant dense<0.000000e+00> : vector<16x32xf32>
    %109 = tpu.matmul %107, %108, %cst_35 {dimension_numbers = #tpu.dot_dimension_numbers<[1], [0], [0], [1], [0, 0, 1, 1], [], []>} : vector<16x32xbf16>, vector<32x32xbf16>, vector<16x32xf32> -> vector<16x32xf32>
    %c0_36 = arith.constant 0 : index
    %c0_37 = arith.constant 0 : index
    %110 = vector.load %arg14[%c0_36, %c0_37] : memref<1x32xf32, #tpu.memory_space<vmem>>, vector<1x32xf32>
    %111 = vector.broadcast %110 : vector<1x32xf32> to vector<16x32xf32>
    %112 = arith.addf %109, %111 : vector<16x32xf32>
    %113 = arith.addf %1, %112 : vector<16x32xf32>
    %c0_38 = arith.constant 0 : index
    %c0_39 = arith.constant 0 : index
    %114 = vector.load %arg7[%c0_38, %c0_39] : memref<1x32xf32, #tpu.memory_space<vmem>>, vector<1x32xf32>
    %c0_40 = arith.constant 0 : index
    %c0_41 = arith.constant 0 : index
    %115 = vector.load %arg8[%c0_40, %c0_41] : memref<1x32xf32, #tpu.memory_space<vmem>>, vector<1x32xf32>
    %cst_42 = arith.constant dense<0.000000e+00> : vector<16xf32>
    %116 = vector.multi_reduction <add>, %113, %cst_42 [1] : vector<16x32xf32> to vector<16xf32>
    %117 = vector.shape_cast %116 : vector<16xf32> to vector<16x1xf32>
    %cst_43 = arith.constant 3.200000e+01 : f32
    %118 = vector.broadcast %cst_43 : f32 to vector<16x1xf32>
    %119 = arith.divf %117, %118 : vector<16x1xf32>
    %120 = vector.broadcast %119 : vector<16x1xf32> to vector<16x32xf32>
    %121 = arith.subf %113, %120 : vector<16x32xf32>
    %122 = arith.mulf %121, %121 : vector<16x32xf32>
    %cst_44 = arith.constant dense<0.000000e+00> : vector<16xf32>
    %123 = vector.multi_reduction <add>, %122, %cst_44 [1] : vector<16x32xf32> to vector<16xf32>
    %124 = vector.shape_cast %123 : vector<16xf32> to vector<16x1xf32>
    %cst_45 = arith.constant 3.200000e+01 : f32
    %125 = vector.broadcast %cst_45 : f32 to vector<16x1xf32>
    %126 = arith.divf %124, %125 : vector<16x1xf32>
    %127 = vector.broadcast %119 : vector<16x1xf32> to vector<16x32xf32>
    %128 = arith.subf %113, %127 : vector<16x32xf32>
    %cst_46 = arith.constant 9.99999996E-13 : f32
    %129 = vector.broadcast %cst_46 : f32 to vector<16x1xf32>
    %130 = arith.addf %126, %129 : vector<16x1xf32>
    %131 = math.rsqrt %130 : vector<16x1xf32>
    %132 = vector.broadcast %131 : vector<16x1xf32> to vector<16x32xf32>
    %133 = arith.mulf %128, %132 : vector<16x32xf32>
    %134 = vector.broadcast %114 : vector<1x32xf32> to vector<16x32xf32>
    %135 = arith.mulf %133, %134 : vector<16x32xf32>
    %136 = vector.broadcast %115 : vector<1x32xf32> to vector<16x32xf32>
    %137 = arith.addf %135, %136 : vector<16x32xf32>
    %138 = arith.truncf %137 : vector<16x32xf32> to vector<16x32xbf16>
    %c0_47 = arith.constant 0 : index
    %c0_48 = arith.constant 0 : index
    %139 = vector.load %arg15[%c0_47, %c0_48] : memref<32x32xbf16, #tpu.memory_space<vmem>>, vector<32x32xbf16>
    %cst_49 = arith.constant dense<0.000000e+00> : vector<16x32xf32>
    %140 = tpu.matmul %138, %139, %cst_49 {dimension_numbers = #tpu.dot_dimension_numbers<[1], [0], [0], [1], [0, 0, 1, 1], [], []>} : vector<16x32xbf16>, vector<32x32xbf16>, vector<16x32xf32> -> vector<16x32xf32>
    %c0_50 = arith.constant 0 : index
    %c0_51 = arith.constant 0 : index
    %141 = vector.load %arg16[%c0_50, %c0_51] : memref<1x32xf32, #tpu.memory_space<vmem>>, vector<1x32xf32>
    %142 = vector.broadcast %141 : vector<1x32xf32> to vector<16x32xf32>
    %143 = arith.addf %140, %142 : vector<16x32xf32>
    %c0_52 = arith.constant 0 : index
    %c0_53 = arith.constant 0 : index
    %144 = vector.load %arg17[%c0_52, %c0_53] : memref<32x64xbf16, #tpu.memory_space<vmem>>, vector<32x64xbf16>
    %cst_54 = arith.constant dense<0.000000e+00> : vector<32x64xf32>
    %145 = tpu.matmul %4, %144, %cst_54 {dimension_numbers = #tpu.dot_dimension_numbers<[1], [0], [0], [1], [0, 0, 1, 1], [], []>} : vector<32x32xbf16>, vector<32x64xbf16>, vector<32x64xf32> -> vector<32x64xf32>
    %c0_55 = arith.constant 0 : index
    %c0_56 = arith.constant 0 : index
    %146 = vector.load %arg18[%c0_55, %c0_56] : memref<1x64xf32, #tpu.memory_space<vmem>>, vector<1x64xf32>
    %147 = vector.broadcast %146 : vector<1x64xf32> to vector<32x64xf32>
    %148 = arith.addf %145, %147 : vector<32x64xf32>
    %cst_57 = arith.constant 0.353553385 : f32
    %149 = vector.broadcast %cst_57 : f32 to vector<16x32xf32>
    %150 = arith.mulf %143, %149 : vector<16x32xf32>
    %151 = arith.truncf %150 : vector<16x32xf32> to vector<16x32xbf16>
    %152 = arith.truncf %148 : vector<32x64xf32> to vector<32x64xbf16>
    %153 = vector.extract_strided_slice %151 {offsets = [0, 0], sizes = [16, 8], strides = [1, 1]} : vector<16x32xbf16> to vector<16x8xbf16>
    %154 = vector.shape_cast %153 : vector<16x8xbf16> to vector<2x8x8xbf16>
    %155 = vector.extract_strided_slice %151 {offsets = [0, 8], sizes = [16, 8], strides = [1, 1]} : vector<16x32xbf16> to vector<16x8xbf16>
    %156 = vector.shape_cast %155 : vector<16x8xbf16> to vector<2x8x8xbf16>
    %157 = vector.extract_strided_slice %151 {offsets = [0, 16], sizes = [16, 8], strides = [1, 1]} : vector<16x32xbf16> to vector<16x8xbf16>
    %158 = vector.shape_cast %157 : vector<16x8xbf16> to vector<2x8x8xbf16>
    %159 = vector.extract_strided_slice %151 {offsets = [0, 24], sizes = [16, 8], strides = [1, 1]} : vector<16x32xbf16> to vector<16x8xbf16>
    %160 = vector.shape_cast %159 : vector<16x8xbf16> to vector<2x8x8xbf16>
    %161 = tpu.concatenate %154, %156, %158, %160 in 0 : vector<2x8x8xbf16>, vector<2x8x8xbf16>, vector<2x8x8xbf16>, vector<2x8x8xbf16> -> vector<8x8x8xbf16>
    %162 = vector.extract_strided_slice %152 {offsets = [0, 0], sizes = [32, 8], strides = [1, 1]} : vector<32x64xbf16> to vector<32x8xbf16>
    %163 = vector.shape_cast %162 : vector<32x8xbf16> to vector<2x16x8xbf16>
    %164 = vector.extract_strided_slice %152 {offsets = [0, 8], sizes = [32, 8], strides = [1, 1]} : vector<32x64xbf16> to vector<32x8xbf16>
    %165 = vector.shape_cast %164 : vector<32x8xbf16> to vector<2x16x8xbf16>
    %166 = vector.extract_strided_slice %152 {offsets = [0, 16], sizes = [32, 8], strides = [1, 1]} : vector<32x64xbf16> to vector<32x8xbf16>
    %167 = vector.shape_cast %166 : vector<32x8xbf16> to vector<2x16x8xbf16>
    %168 = vector.extract_strided_slice %152 {offsets = [0, 24], sizes = [32, 8], strides = [1, 1]} : vector<32x64xbf16> to vector<32x8xbf16>
    %169 = vector.shape_cast %168 : vector<32x8xbf16> to vector<2x16x8xbf16>
    %170 = tpu.concatenate %163, %165, %167, %169 in 0 : vector<2x16x8xbf16>, vector<2x16x8xbf16>, vector<2x16x8xbf16>, vector<2x16x8xbf16> -> vector<8x16x8xbf16>
    %171 = vector.extract_strided_slice %152 {offsets = [0, 32], sizes = [32, 8], strides = [1, 1]} : vector<32x64xbf16> to vector<32x8xbf16>
    %172 = vector.shape_cast %171 : vector<32x8xbf16> to vector<2x16x8xbf16>
    %173 = vector.extract_strided_slice %152 {offsets = [0, 40], sizes = [32, 8], strides = [1, 1]} : vector<32x64xbf16> to vector<32x8xbf16>
    %174 = vector.shape_cast %173 : vector<32x8xbf16> to vector<2x16x8xbf16>
    %175 = vector.extract_strided_slice %152 {offsets = [0, 48], sizes = [32, 8], strides = [1, 1]} : vector<32x64xbf16> to vector<32x8xbf16>
    %176 = vector.shape_cast %175 : vector<32x8xbf16> to vector<2x16x8xbf16>
    %177 = vector.extract_strided_slice %152 {offsets = [0, 56], sizes = [32, 8], strides = [1, 1]} : vector<32x64xbf16> to vector<32x8xbf16>
    %178 = vector.shape_cast %177 : vector<32x8xbf16> to vector<2x16x8xbf16>
    %179 = tpu.concatenate %172, %174, %176, %178 in 0 : vector<2x16x8xbf16>, vector<2x16x8xbf16>, vector<2x16x8xbf16>, vector<2x16x8xbf16> -> vector<8x16x8xbf16>
    "tpu.trace_start"() <{level = 10 : i32, message = "xqd,xkd->xqk"}> : () -> ()
    %cst_58 = arith.constant dense<0.000000e+00> : vector<8x8x16xf32>
    %180 = tpu.matmul %161, %170, %cst_58 {dimension_numbers = #tpu.dot_dimension_numbers<[2], [2], [1], [1], [0, 0, 0, 1, 1, 1], [0], [0]>} : vector<8x8x8xbf16>, vector<8x16x8xbf16>, vector<8x8x16xf32> -> vector<8x8x16xf32>
    "tpu.trace_stop"() : () -> ()
    %181 = vector.shape_cast %180 : vector<8x8x16xf32> to vector<4x2x8x16xf32>
    %182 = vector.shape_cast %10 : vector<2x8x16xi1> to vector<1x2x8x16xi1>
    %cst_59 = arith.constant -1.000000e+30 : f32
    %183 = vector.shape_cast %182 : vector<1x2x8x16xi1> to vector<1x2x8x16xi1>
    %184 = vector.broadcast %183 : vector<1x2x8x16xi1> to vector<4x2x8x16xi1>
    %185 = vector.broadcast %cst_59 : f32 to vector<4x2x8x16xf32>
    %186 = arith.select %184, %181, %185 : vector<4x2x8x16xi1>, vector<4x2x8x16xf32>
    %cst_60 = arith.constant dense<0xFF800000> : vector<4x2x8xf32>
    %187 = vector.multi_reduction <maximumf>, %186, %cst_60 [3] : vector<4x2x8x16xf32> to vector<4x2x8xf32>
    %188 = vector.shape_cast %187 : vector<4x2x8xf32> to vector<4x2x8x1xf32>
    %189 = vector.broadcast %188 : vector<4x2x8x1xf32> to vector<4x2x8x16xf32>
    %190 = arith.subf %186, %189 : vector<4x2x8x16xf32>
    %191 = math.exp %190 : vector<4x2x8x16xf32>
    %cst_61 = arith.constant dense<0.000000e+00> : vector<4x2x8xf32>
    %192 = vector.multi_reduction <add>, %191, %cst_61 [3] : vector<4x2x8x16xf32> to vector<4x2x8xf32>
    %193 = vector.shape_cast %192 : vector<4x2x8xf32> to vector<4x2x8x1xf32>
    %194 = tpu.reciprocal %193 {approx = true} : vector<4x2x8x1xf32> -> vector<4x2x8x1xf32>
    %195 = vector.broadcast %194 : vector<4x2x8x1xf32> to vector<4x2x8x16xf32>
    %196 = arith.mulf %191, %195 : vector<4x2x8x16xf32>
    %cst_62 = arith.constant 0.000000e+00 : f32
    %197 = vector.shape_cast %182 : vector<1x2x8x16xi1> to vector<1x2x8x16xi1>
    %198 = vector.broadcast %197 : vector<1x2x8x16xi1> to vector<4x2x8x16xi1>
    %199 = vector.broadcast %cst_62 : f32 to vector<4x2x8x16xf32>
    %200 = arith.select %198, %196, %199 : vector<4x2x8x16xi1>, vector<4x2x8x16xf32>
    %201 = vector.shape_cast %200 : vector<4x2x8x16xf32> to vector<8x8x16xf32>
    %202 = arith.truncf %201 : vector<8x8x16xf32> to vector<8x8x16xbf16>
    "tpu.trace_start"() <{level = 10 : i32, message = "xqk,xkd->xqd"}> : () -> ()
    %cst_63 = arith.constant dense<0.000000e+00> : vector<8x8x8xf32>
    %203 = tpu.matmul %202, %179, %cst_63 {dimension_numbers = #tpu.dot_dimension_numbers<[2], [1], [1], [2], [0, 0, 0, 1, 1, 2], [0], [0]>} : vector<8x8x16xbf16>, vector<8x16x8xbf16>, vector<8x8x8xf32> -> vector<8x8x8xf32>
    "tpu.trace_stop"() : () -> ()
    %204 = vector.extract_strided_slice %203 {offsets = [0, 0, 0], sizes = [2, 8, 8], strides = [1, 1, 1]} : vector<8x8x8xf32> to vector<2x8x8xf32>
    %205 = vector.shape_cast %204 : vector<2x8x8xf32> to vector<16x8xf32>
    %206 = vector.extract_strided_slice %203 {offsets = [2, 0, 0], sizes = [2, 8, 8], strides = [1, 1, 1]} : vector<8x8x8xf32> to vector<2x8x8xf32>
    %207 = vector.shape_cast %206 : vector<2x8x8xf32> to vector<16x8xf32>
    %208 = vector.extract_strided_slice %203 {offsets = [4, 0, 0], sizes = [2, 8, 8], strides = [1, 1, 1]} : vector<8x8x8xf32> to vector<2x8x8xf32>
    %209 = vector.shape_cast %208 : vector<2x8x8xf32> to vector<16x8xf32>
    %210 = vector.extract_strided_slice %203 {offsets = [6, 0, 0], sizes = [2, 8, 8], strides = [1, 1, 1]} : vector<8x8x8xf32> to vector<2x8x8xf32>
    %211 = vector.shape_cast %210 : vector<2x8x8xf32> to vector<16x8xf32>
    %212 = tpu.concatenate %205, %207, %209, %211 in 1 : vector<16x8xf32>, vector<16x8xf32>, vector<16x8xf32>, vector<16x8xf32> -> vector<16x32xf32>
    %213 = arith.truncf %212 : vector<16x32xf32> to vector<16x32xbf16>
    %c0_64 = arith.constant 0 : index
    %c0_65 = arith.constant 0 : index
    %214 = vector.load %arg19[%c0_64, %c0_65] : memref<32x32xbf16, #tpu.memory_space<vmem>>, vector<32x32xbf16>
    %cst_66 = arith.constant dense<0.000000e+00> : vector<16x32xf32>
    %215 = tpu.matmul %213, %214, %cst_66 {dimension_numbers = #tpu.dot_dimension_numbers<[1], [0], [0], [1], [0, 0, 1, 1], [], []>} : vector<16x32xbf16>, vector<32x32xbf16>, vector<16x32xf32> -> vector<16x32xf32>
    %c0_67 = arith.constant 0 : index
    %c0_68 = arith.constant 0 : index
    %216 = vector.load %arg20[%c0_67, %c0_68] : memref<1x32xf32, #tpu.memory_space<vmem>>, vector<1x32xf32>
    %217 = vector.broadcast %216 : vector<1x32xf32> to vector<16x32xf32>
    %218 = arith.addf %215, %217 : vector<16x32xf32>
    %219 = arith.addf %113, %218 : vector<16x32xf32>
    %c0_69 = arith.constant 0 : index
    %c0_70 = arith.constant 0 : index
    %220 = vector.load %arg9[%c0_69, %c0_70] : memref<1x32xf32, #tpu.memory_space<vmem>>, vector<1x32xf32>
    %c0_71 = arith.constant 0 : index
    %c0_72 = arith.constant 0 : index
    %221 = vector.load %arg10[%c0_71, %c0_72] : memref<1x32xf32, #tpu.memory_space<vmem>>, vector<1x32xf32>
    %cst_73 = arith.constant dense<0.000000e+00> : vector<16xf32>
    %222 = vector.multi_reduction <add>, %219, %cst_73 [1] : vector<16x32xf32> to vector<16xf32>
    %223 = vector.shape_cast %222 : vector<16xf32> to vector<16x1xf32>
    %cst_74 = arith.constant 3.200000e+01 : f32
    %224 = vector.broadcast %cst_74 : f32 to vector<16x1xf32>
    %225 = arith.divf %223, %224 : vector<16x1xf32>
    %226 = vector.broadcast %225 : vector<16x1xf32> to vector<16x32xf32>
    %227 = arith.subf %219, %226 : vector<16x32xf32>
    %228 = arith.mulf %227, %227 : vector<16x32xf32>
    %cst_75 = arith.constant dense<0.000000e+00> : vector<16xf32>
    %229 = vector.multi_reduction <add>, %228, %cst_75 [1] : vector<16x32xf32> to vector<16xf32>
    %230 = vector.shape_cast %229 : vector<16xf32> to vector<16x1xf32>
    %cst_76 = arith.constant 3.200000e+01 : f32
    %231 = vector.broadcast %cst_76 : f32 to vector<16x1xf32>
    %232 = arith.divf %230, %231 : vector<16x1xf32>
    %233 = vector.broadcast %225 : vector<16x1xf32> to vector<16x32xf32>
    %234 = arith.subf %219, %233 : vector<16x32xf32>
    %cst_77 = arith.constant 9.99999996E-13 : f32
    %235 = vector.broadcast %cst_77 : f32 to vector<16x1xf32>
    %236 = arith.addf %232, %235 : vector<16x1xf32>
    %237 = math.rsqrt %236 : vector<16x1xf32>
    %238 = vector.broadcast %237 : vector<16x1xf32> to vector<16x32xf32>
    %239 = arith.mulf %234, %238 : vector<16x32xf32>
    %240 = vector.broadcast %220 : vector<1x32xf32> to vector<16x32xf32>
    %241 = arith.mulf %239, %240 : vector<16x32xf32>
    %242 = vector.broadcast %221 : vector<1x32xf32> to vector<16x32xf32>
    %243 = arith.addf %241, %242 : vector<16x32xf32>
    %244 = arith.truncf %243 : vector<16x32xf32> to vector<16x32xbf16>
    %c0_78 = arith.constant 0 : index
    %c0_79 = arith.constant 0 : index
    %245 = vector.load %arg21[%c0_78, %c0_79] : memref<32x64xbf16, #tpu.memory_space<vmem>>, vector<32x64xbf16>
    %cst_80 = arith.constant dense<0.000000e+00> : vector<16x64xf32>
    %246 = tpu.matmul %244, %245, %cst_80 {dimension_numbers = #tpu.dot_dimension_numbers<[1], [0], [0], [1], [0, 0, 1, 1], [], []>} : vector<16x32xbf16>, vector<32x64xbf16>, vector<16x64xf32> -> vector<16x64xf32>
    %c0_81 = arith.constant 0 : index
    %c0_82 = arith.constant 0 : index
    %247 = vector.load %arg22[%c0_81, %c0_82] : memref<1x64xf32, #tpu.memory_space<vmem>>, vector<1x64xf32>
    %248 = vector.broadcast %247 : vector<1x64xf32> to vector<16x64xf32>
    %249 = arith.addf %246, %248 : vector<16x64xf32>
    %cst_83 = arith.constant 0.000000e+00 : f32
    %250 = vector.broadcast %cst_83 : f32 to vector<16x64xf32>
    %251 = arith.maximumf %249, %250 : vector<16x64xf32>
    %252 = arith.truncf %251 : vector<16x64xf32> to vector<16x64xbf16>
    %c0_84 = arith.constant 0 : index
    %c0_85 = arith.constant 0 : index
    %253 = vector.load %arg23[%c0_84, %c0_85] : memref<64x32xbf16, #tpu.memory_space<vmem>>, vector<64x32xbf16>
    %cst_86 = arith.constant dense<0.000000e+00> : vector<16x32xf32>
    %254 = tpu.matmul %252, %253, %cst_86 {dimension_numbers = #tpu.dot_dimension_numbers<[1], [0], [0], [1], [0, 0, 1, 1], [], []>} : vector<16x64xbf16>, vector<64x32xbf16>, vector<16x32xf32> -> vector<16x32xf32>
    %c0_87 = arith.constant 0 : index
    %c0_88 = arith.constant 0 : index
    %255 = vector.load %arg24[%c0_87, %c0_88] : memref<1x32xf32, #tpu.memory_space<vmem>>, vector<1x32xf32>
    %256 = vector.broadcast %255 : vector<1x32xf32> to vector<16x32xf32>
    %257 = arith.addf %254, %256 : vector<16x32xf32>
    %258 = arith.addf %219, %257 : vector<16x32xf32>
    %259 = vector.shape_cast %258 : vector<16x32xf32> to vector<2x8x32xf32>
    %c0_89 = arith.constant 0 : index
    %c0_90 = arith.constant 0 : index
    %c0_91 = arith.constant 0 : index
    %260 = vector.load %arg25[%c0_89, %c0_90, %c0_91] : memref<2x8x32xf32, #tpu.memory_space<vmem>>, vector<2x8x32xf32>
    tpu.vector_store %arg25[%c0_89, %c0_90, %c0_91], %259 {strides = array<i32>} : memref<2x8x32xf32, #tpu.memory_space<vmem>>, vector<2x8x32xf32>,
    return
  }
  func.func @transform_0(%arg0: i32) -> (i32, i32, i32) {
    %c0_i32 = arith.constant 0 : i32
    %c0_i32_0 = arith.constant 0 : i32
    %c0_i32_1 = arith.constant 0 : i32
    return %arg0, %c0_i32, %c0_i32_0 : i32, i32, i32
  }
  func.func @transform_1(%arg0: i32) -> (i32, i32, i32) {
    %c0_i32 = arith.constant 0 : i32
    %c0_i32_0 = arith.constant 0 : i32
    %c0_i32_1 = arith.constant 0 : i32
    return %arg0, %c0_i32, %c0_i32_0 : i32, i32, i32
  }
  func.func @transform_2(%arg0: i32) -> (i32, i32, i32) {
    %c0_i32 = arith.constant 0 : i32
    %c0_i32_0 = arith.constant 0 : i32
    %c0_i32_1 = arith.constant 0 : i32
    return %arg0, %c0_i32, %c0_i32_0 : i32, i32, i32
  }
  func.func @transform_3(%arg0: i32) -> (i32, i32, i32) {
    %c0_i32 = arith.constant 0 : i32
    %c0_i32_0 = arith.constant 0 : i32
    %c0_i32_1 = arith.constant 0 : i32
    return %arg0, %c0_i32, %c0_i32_0 : i32, i32, i32
  }
  func.func @transform_4(%arg0: i32) -> (i32, i32) {
    %c0_i32 = arith.constant 0 : i32
    %c0_i32_0 = arith.constant 0 : i32
    %c0_i32_1 = arith.constant 0 : i32
    return %c0_i32, %c0_i32_0 : i32, i32
  }
  func.func @transform_5(%arg0: i32) -> (i32, i32) {
    %c0_i32 = arith.constant 0 : i32
    %c0_i32_0 = arith.constant 0 : i32
    %c0_i32_1 = arith.constant 0 : i32
    return %c0_i32, %c0_i32_0 : i32, i32
  }
  func.func @transform_6(%arg0: i32) -> (i32, i32) {
    %c0_i32 = arith.constant 0 : i32
    %c0_i32_0 = arith.constant 0 : i32
    %c0_i32_1 = arith.constant 0 : i32
    return %c0_i32, %c0_i32_0 : i32, i32
  }
  func.func @transform_7(%arg0: i32) -> (i32, i32) {
    %c0_i32 = arith.constant 0 : i32
    %c0_i32_0 = arith.constant 0 : i32
    %c0_i32_1 = arith.constant 0 : i32
    return %c0_i32, %c0_i32_0 : i32, i32
  }
  func.func @transform_8(%arg0: i32) -> (i32, i32) {
    %c0_i32 = arith.constant 0 : i32
    %c0_i32_0 = arith.constant 0 : i32
    %c0_i32_1 = arith.constant 0 : i32
    return %c0_i32, %c0_i32_0 : i32, i32
  }
  func.func @transform_9(%arg0: i32) -> (i32, i32) {
    %c0_i32 = arith.constant 0 : i32
    %c0_i32_0 = arith.constant 0 : i32
    %c0_i32_1 = arith.constant 0 : i32
    return %c0_i32, %c0_i32_0 : i32, i32
  }
  func.func @transform_10(%arg0: i32) -> (i32, i32) {
    %c0_i32 = arith.constant 0 : i32
    %c0_i32_0 = arith.constant 0 : i32
    %c0_i32_1 = arith.constant 0 : i32
    return %c0_i32, %c0_i32_0 : i32, i32
  }
  func.func @transform_11(%arg0: i32) -> (i32, i32) {
    %c0_i32 = arith.constant 0 : i32
    %c0_i32_0 = arith.constant 0 : i32
    %c0_i32_1 = arith.constant 0 : i32
    return %c0_i32, %c0_i32_0 : i32, i32
  }
  func.func @transform_12(%arg0: i32) -> (i32, i32) {
    %c0_i32 = arith.constant 0 : i32
    %c0_i32_0 = arith.constant 0 : i32
    %c0_i32_1 = arith.constant 0 : i32
    return %c0_i32, %c0_i32_0 : i32, i32
  }
  func.func @transform_13(%arg0: i32) -> (i32, i32) {
    %c0_i32 = arith.constant 0 : i32
    %c0_i32_0 = arith.constant 0 : i32
    %c0_i32_1 = arith.constant 0 : i32
    return %c0_i32, %c0_i32_0 : i32, i32
  }
  func.func @transform_14(%arg0: i32) -> (i32, i32) {
    %c0_i32 = arith.constant 0 : i32
    %c0_i32_0 = arith.constant 0 : i32
    %c0_i32_1 = arith.constant 0 : i32
    return %c0_i32, %c0_i32_0 : i32, i32
  }
  func.func @transform_15(%arg0: i32) -> (i32, i32) {
    %c0_i32 = arith.constant 0 : i32
    %c0_i32_0 = arith.constant 0 : i32
    %c0_i32_1 = arith.constant 0 : i32
    return %c0_i32, %c0_i32_0 : i32, i32
  }
  func.func @transform_16(%arg0: i32) -> (i32, i32) {
    %c0_i32 = arith.constant 0 : i32
    %c0_i32_0 = arith.constant 0 : i32
    %c0_i32_1 = arith.constant 0 : i32
    return %c0_i32, %c0_i32_0 : i32, i32
  }
  func.func @transform_17(%arg0: i32) -> (i32, i32) {
    %c0_i32 = arith.constant 0 : i32
    %c0_i32_0 = arith.constant 0 : i32
    %c0_i32_1 = arith.constant 0 : i32
    return %c0_i32, %c0_i32_0 : i32, i32
  }
  func.func @transform_18(%arg0: i32) -> (i32, i32) {
    %c0_i32 = arith.constant 0 : i32
    %c0_i32_0 = arith.constant 0 : i32
    %c0_i32_1 = arith.constant 0 : i32
    return %c0_i32, %c0_i32_0 : i32, i32
  }
  func.func @transform_19(%arg0: i32) -> (i32, i32) {
    %c0_i32 = arith.constant 0 : i32
    %c0_i32_0 = arith.constant 0 : i32
    %c0_i32_1 = arith.constant 0 : i32
    return %c0_i32, %c0_i32_0 : i32, i32
  }
  func.func @transform_20(%arg0: i32) -> (i32, i32) {
    %c0_i32 = arith.constant 0 : i32
    %c0_i32_0 = arith.constant 0 : i32
    %c0_i32_1 = arith.constant 0 : i32
    return %c0_i32, %c0_i32_0 : i32, i32
  }
  func.func @transform_21(%arg0: i32) -> (i32, i32) {
    %c0_i32 = arith.constant 0 : i32
    %c0_i32_0 = arith.constant 0 : i32
    %c0_i32_1 = arith.constant 0 : i32
    return %c0_i32, %c0_i32_0 : i32, i32
  }
  func.func @transform_22(%arg0: i32) -> (i32, i32) {
    %c0_i32 = arith.constant 0 : i32
    %c0_i32_0 = arith.constant 0 : i32
    %c0_i32_1 = arith.constant 0 : i32
    return %c0_i32, %c0_i32_0 : i32, i32
  }
  func.func @transform_23(%arg0: i32) -> (i32, i32) {
    %c0_i32 = arith.constant 0 : i32
    %c0_i32_0 = arith.constant 0 : i32
    %c0_i32_1 = arith.constant 0 : i32
    return %c0_i32, %c0_i32_0 : i32, i32
  }
  func.func @transform_24(%arg0: i32) -> (i32, i32, i32) {
    %c0_i32 = arith.constant 0 : i32
    %c0_i32_0 = arith.constant 0 : i32
    %c0_i32_1 = arith.constant 0 : i32
    return %arg0, %c0_i32, %c0_i32_0 : i32, i32, i32
  }
}

</mosaic_0001>

<llo_original>
// kernel: tpu_custom_call.1
$region0: #{tpu_custom_call.1}
  #allocation0 [shape = 'u32[]', space=smem, size = 0x4, offset = 0x4, fixed_abs, tag = 'smem constant byte address 0x4 - core index']
  #allocation1 [shape = 'u32[144,128]{1,0:T(1,128)}', space=vmem, size = 0x12000, scoped, tag = 'internal scratch']
  %s0 = inlined_call_operand.vmem [shape: f32[2,8,32], index: 0, kind: input, shape index: {}]
  %s1 = inlined_call_operand.hbm [shape: bf16[2,8,8], index: 1, kind: input, shape index: {}]
  %s2 = inlined_call_operand.vmem [shape: f32[2,16,32], index: 2, kind: input, shape index: {}]
  %s3 = inlined_call_operand.hbm [shape: bf16[2,8,16], index: 3, kind: input, shape index: {}]
  %s4 = inlined_call_operand.hbm [shape: f32[1,32], index: 4, kind: input, shape index: {}]
  %s5 = inlined_call_operand.hbm [shape: f32[1,32], index: 5, kind: input, shape index: {}]
  %s6 = inlined_call_operand.hbm [shape: f32[1,32], index: 6, kind: input, shape index: {}]
  %s7 = inlined_call_operand.hbm [shape: f32[1,32], index: 7, kind: input, shape index: {}]
  %s8 = inlined_call_operand.hbm [shape: f32[1,32], index: 8, kind: input, shape index: {}]
  %s9 = inlined_call_operand.hbm [shape: f32[1,32], index: 9, kind: input, shape index: {}]
  %s10 = inlined_call_operand.vmem [shape: bf16[32,96], index: 10, kind: input, shape index: {}]
  %s11 = inlined_call_operand.hbm [shape: f32[1,96], index: 11, kind: input, shape index: {}]
  %s12 = inlined_call_operand.hbm [shape: bf16[32,32], index: 12, kind: input, shape index: {}]
  %s13 = inlined_call_operand.hbm [shape: f32[1,32], index: 13, kind: input, shape index: {}]
  %s14 = inlined_call_operand.vmem [shape: bf16[32,32], index: 14, kind: input, shape index: {}]
  %s15 = inlined_call_operand.hbm [shape: f32[1,32], index: 15, kind: input, shape index: {}]
  %s16 = inlined_call_operand.hbm [shape: bf16[32,64], index: 16, kind: input, shape index: {}]
  %s17 = inlined_call_operand.hbm [shape: f32[1,64], index: 17, kind: input, shape index: {}]
  %s18 = inlined_call_operand.vmem [shape: bf16[32,32], index: 18, kind: input, shape index: {}]
  %s19 = inlined_call_operand.vmem [shape: f32[1,32], index: 19, kind: input, shape index: {}]
  %s20 = inlined_call_operand.hbm [shape: bf16[32,64], index: 20, kind: input, shape index: {}]
  %s21 = inlined_call_operand.vmem [shape: f32[1,64], index: 21, kind: input, shape index: {}]
  %s22 = inlined_call_operand.vmem [shape: bf16[64,32], index: 22, kind: input, shape index: {}]
  %s23 = inlined_call_operand.vmem [shape: f32[1,32], index: 23, kind: input, shape index: {}]
  %s24 = inlined_call_operand.hbm [shape: f32[2,8,32], index: 24, kind: output, shape index: {}]
  %s25 = sld [smem:[#allocation0]]
  $region166: #{tpu_custom_call.1} parent=0
    _
  %s27 = ssub.s32 1, %s25
  %s28 = scalar_select 0, %s27, %s25
  $region1: #{tpu_custom_call.1} parent=0
    #allocation2 [shape = 'u8[4096]{0}', space=vmem, size = 0x1000, scoped, tag = 'input window, operand 1, single buffered']
    #allocation3 [shape = 's32[1]{0}', space=sflag, size = 0x4, scoped, tag = 'scoped memory for tpu_custom_call.1']
    #allocation4 [shape = 's32[1]{0}', space=sflag, size = 0x4, scoped, tag = 'scoped memory for tpu_custom_call.1']
    #allocation5 [shape = 'u8[4096]{0}', space=vmem, size = 0x1000, scoped, tag = 'input window, operand 3, single buffered']
    #allocation6 [shape = 's32[1]{0}', space=sflag, size = 0x4, scoped, tag = 'scoped memory for tpu_custom_call.1']
    #allocation7 [shape = 'u8[512]{0}', space=vmem, size = 0x400, scoped, tag = 'input window, operand 4, single buffered']
    #allocation8 [shape = 'u8[512]{0}', space=vmem, size = 0x400, scoped, tag = 'input window, operand 5, single buffered']
    #allocation9 [shape = 's32[1]{0}', space=sflag, size = 0x4, scoped, tag = 'scoped memory for tpu_custom_call.1']
    #allocation10 [shape = 'u8[512]{0}', space=vmem, size = 0x400, scoped, tag = 'input window, operand 6, single buffered']
    #allocation11 [shape = 'u8[512]{0}', space=vmem, size = 0x400, scoped, tag = 'input window, operand 7, single buffered']
    #allocation12 [shape = 's32[1]{0}', space=sflag, size = 0x4, scoped, tag = 'scoped memory for tpu_custom_call.1']
    #allocation13 [shape = 'u8[512]{0}', space=vmem, size = 0x400, scoped, tag = 'input window, operand 8, single buffered']
    #allocation14 [shape = 'u8[512]{0}', space=vmem, size = 0x400, scoped, tag = 'input window, operand 9, single buffered']
    #allocation15 [shape = 's32[1]{0}', space=sflag, size = 0x4, scoped, tag = 'scoped memory for tpu_custom_call.1']
    #allocation16 [shape = 'u8[512]{0}', space=vmem, size = 0x400, scoped, tag = 'input window, operand 11, single buffered']
    #allocation17 [shape = 'u8[8192]{0}', space=vmem, size = 0x2000, scoped, tag = 'input window, operand 12, single buffered']
    #allocation18 [shape = 's32[1]{0}', space=sflag, size = 0x4, scoped, tag = 'scoped memory for tpu_custom_call.1']
    #allocation19 [shape = 'u8[512]{0}', space=vmem, size = 0x400, scoped, tag = 'input window, operand 13, single buffered']
    #allocation20 [shape = 'u8[512]{0}', space=vmem, size = 0x400, scoped, tag = 'input window, operand 15, single buffered']
    #allocation21 [shape = 's32[1]{0}', space=sflag, size = 0x4, scoped, tag = 'scoped memory for tpu_custom_call.1']
    #allocation22 [shape = 'u8[8192]{0}', space=vmem, size = 0x2000, scoped, tag = 'input window, operand 16, single buffered']
    #allocation23 [shape = 'u8[512]{0}', space=vmem, size = 0x400, scoped, tag = 'input window, operand 17, single buffered']
    #allocation24 [shape = 's32[1]{0}', space=sflag, size = 0x4, scoped, tag = 'scoped memory for tpu_custom_call.1']
    #allocation25 [shape = 'u8[8192]{0}', space=vmem, size = 0x2000, scoped, tag = 'input window, operand 20, single buffered']
    #allocation26 [shape = 'u8[8192]{0}', space=vmem, size = 0x2000, scoped, tag = 'output window, operand 0, single buffered']
    %29 = vsyncpa [#allocation3], 0
    %30 = vsyncpa [#allocation6], 0
    %31 = vsyncpa [#allocation9], 0
    %32 = vsyncpa [#allocation12], 0
    %33 = vsyncpa [#allocation15], 0
    %34 = vsyncpa [#allocation18], 0
    %35 = vsyncpa [#allocation21], 0
    %36 = vsyncpa [#allocation24], 0
    %37 = vsyncpa [#allocation4], 0
    // Predicated region
    $region2: #{tpu_custom_call.1} parent=1 // pred_check
      _
    $region3: #{tpu_custom_call.1} parent=1 // pred_check_branch
      %39 = sbr.rel (0) target = $region5
    $region4: #{tpu_custom_call.1} parent=1 // pred_region
      _
    $region5: #{tpu_custom_call.1} parent=1 // pred_fallthru
      _
    // Predicated region
    $region6: #{tpu_custom_call.1} parent=1 // pred_check
      _
    $region7: #{tpu_custom_call.1} parent=1 // pred_check_branch
      %41 = sbr.rel (0) target = $region9
    $region8: #{tpu_custom_call.1} parent=1 // pred_region
      %s43 = ssub.s32 128, 128
      %44 = vsyncadd [#allocation3], %s43
      %s45 = sshll.u32 [#allocation2], 4
      %s46 = int_to_ptr.vmem [resolvable:$true] %s45
      %51 = dma.hbm_to_vmem [thread:$0]  %s1, 128, %s46, [#allocation3], 64, 64, 4
    $region9: #{tpu_custom_call.1} parent=1 // pred_fallthru
      _
    // Predicated region
    $region10: #{tpu_custom_call.1} parent=1 // pred_check
      _
    $region11: #{tpu_custom_call.1} parent=1 // pred_check_branch
      %53 = sbr.rel (0) target = $region13
    $region12: #{tpu_custom_call.1} parent=1 // pred_region
      _
    $region13: #{tpu_custom_call.1} parent=1 // pred_fallthru
      _
    // Predicated region
    $region14: #{tpu_custom_call.1} parent=1 // pred_check
      _
    $region15: #{tpu_custom_call.1} parent=1 // pred_check_branch
      %55 = sbr.rel (0) target = $region17
    $region16: #{tpu_custom_call.1} parent=1 // pred_region
      %s57 = ssub.s32 128, 128
      %58 = vsyncadd [#allocation6], %s57
      %s59 = sshll.u32 [#allocation5], 4
      %s60 = int_to_ptr.vmem [resolvable:$true] %s59
      %65 = dma.hbm_to_vmem [thread:$0]  %s3, 128, %s60, [#allocation6], 64, 64, 4
    $region17: #{tpu_custom_call.1} parent=1 // pred_fallthru
      _
    // Predicated region
    $region18: #{tpu_custom_call.1} parent=1 // pred_check
      _
    $region19: #{tpu_custom_call.1} parent=1 // pred_check_branch
      %67 = sbr.rel (0) target = $region21
    $region20: #{tpu_custom_call.1} parent=1 // pred_region
      %s69 = ssub.s32 16, 16
      %70 = vsyncadd [#allocation6], %s69
      %s72 = sshll.u32 [#allocation7], 4
      %s73 = int_to_ptr.vmem [resolvable:$true] %s72
      %75 = dma.hbm_to_vmem [thread:$0]  %s4, 16, %s73, [#allocation6]
    $region21: #{tpu_custom_call.1} parent=1 // pred_fallthru
      _
    // Predicated region
    $region22: #{tpu_custom_call.1} parent=1 // pred_check
      _
    $region23: #{tpu_custom_call.1} parent=1 // pred_check_branch
      %77 = sbr.rel (0) target = $region25
    $region24: #{tpu_custom_call.1} parent=1 // pred_region
      %s79 = ssub.s32 16, 16
      %80 = vsyncadd [#allocation9], %s79
      %s82 = sshll.u32 [#allocation8], 4
      %s83 = int_to_ptr.vmem [resolvable:$true] %s82
      %85 = dma.hbm_to_vmem [thread:$0]  %s5, 16, %s83, [#allocation9]
    $region25: #{tpu_custom_call.1} parent=1 // pred_fallthru
      _
    // Predicated region
    $region26: #{tpu_custom_call.1} parent=1 // pred_check
      _
    $region27: #{tpu_custom_call.1} parent=1 // pred_check_branch
      %87 = sbr.rel (0) target = $region29
    $region28: #{tpu_custom_call.1} parent=1 // pred_region
      %s89 = ssub.s32 16, 16
      %90 = vsyncadd [#allocation9], %s89
      %s92 = sshll.u32 [#allocation10], 4
      %s93 = int_to_ptr.vmem [resolvable:$true] %s92
      %95 = dma.hbm_to_vmem [thread:$0]  %s6, 16, %s93, [#allocation9]
    $region29: #{tpu_custom_call.1} parent=1 // pred_fallthru
      _
    // Predicated region
    $region30: #{tpu_custom_call.1} parent=1 // pred_check
      _
    $region31: #{tpu_custom_call.1} parent=1 // pred_check_branch
      %97 = sbr.rel (0) target = $region33
    $region32: #{tpu_custom_call.1} parent=1 // pred_region
      %s99 = ssub.s32 16, 16
      %100 = vsyncadd [#allocation12], %s99
      %s102 = sshll.u32 [#allocation11], 4
      %s103 = int_to_ptr.vmem [resolvable:$true] %s102
      %105 = dma.hbm_to_vmem [thread:$0]  %s7, 16, %s103, [#allocation12]
    $region33: #{tpu_custom_call.1} parent=1 // pred_fallthru
      _
    // Predicated region
    $region34: #{tpu_custom_call.1} parent=1 // pred_check
      _
    $region35: #{tpu_custom_call.1} parent=1 // pred_check_branch
      %107 = sbr.rel (0) target = $region37
    $region36: #{tpu_custom_call.1} parent=1 // pred_region
      %s109 = ssub.s32 16, 16
      %110 = vsyncadd [#allocation12], %s109
      %s112 = sshll.u32 [#allocation13], 4
      %s113 = int_to_ptr.vmem [resolvable:$true] %s112
      %115 = dma.hbm_to_vmem [thread:$0]  %s8, 16, %s113, [#allocation12]
    $region37: #{tpu_custom_call.1} parent=1 // pred_fallthru
      _
    // Predicated region
    $region38: #{tpu_custom_call.1} parent=1 // pred_check
      _
    $region39: #{tpu_custom_call.1} parent=1 // pred_check_branch
      %117 = sbr.rel (0) target = $region41
    $region40: #{tpu_custom_call.1} parent=1 // pred_region
      %s119 = ssub.s32 16, 16
      %120 = vsyncadd [#allocation15], %s119
      %s122 = sshll.u32 [#allocation14], 4
      %s123 = int_to_ptr.vmem [resolvable:$true] %s122
      %125 = dma.hbm_to_vmem [thread:$0]  %s9, 16, %s123, [#allocation15]
    $region41: #{tpu_custom_call.1} parent=1 // pred_fallthru
      _
    // Predicated region
    $region42: #{tpu_custom_call.1} parent=1 // pred_check
      _
    $region43: #{tpu_custom_call.1} parent=1 // pred_check_branch
      %127 = sbr.rel (0) target = $region45
    $region44: #{tpu_custom_call.1} parent=1 // pred_region
      _
    $region45: #{tpu_custom_call.1} parent=1 // pred_fallthru
      _
    // Predicated region
    $region46: #{tpu_custom_call.1} parent=1 // pred_check
      _
    $region47: #{tpu_custom_call.1} parent=1 // pred_check_branch
      %129 = sbr.rel (0) target = $region49
    $region48: #{tpu_custom_call.1} parent=1 // pred_region
      %s131 = ssub.s32 16, 16
      %132 = vsyncadd [#allocation15], %s131
      %s134 = sshll.u32 [#allocation16], 4
      %s135 = int_to_ptr.vmem [resolvable:$true] %s134
      %137 = dma.hbm_to_vmem [thread:$0]  %s11, 16, %s135, [#allocation15]
    $region49: #{tpu_custom_call.1} parent=1 // pred_fallthru
      _
    // Predicated region
    $region50: #{tpu_custom_call.1} parent=1 // pred_check
      _
    $region51: #{tpu_custom_call.1} parent=1 // pred_check_branch
      %139 = sbr.rel (0) target = $region53
    $region52: #{tpu_custom_call.1} parent=1 // pred_region
      %s141 = ssub.s32 256, 256
      %142 = vsyncadd [#allocation18], %s141
      %s143 = sshll.u32 [#allocation17], 4
      %s144 = int_to_ptr.vmem [resolvable:$true] %s143
      %149 = dma.hbm_to_vmem [thread:$0]  %s12, 256, %s144, [#allocation18], 64, 64, 4
    $region53: #{tpu_custom_call.1} parent=1 // pred_fallthru
      _
    // Predicated region
    $region54: #{tpu_custom_call.1} parent=1 // pred_check
      _
    $region55: #{tpu_custom_call.1} parent=1 // pred_check_branch
      %151 = sbr.rel (0) target = $region57
    $region56: #{tpu_custom_call.1} parent=1 // pred_region
      %s153 = ssub.s32 16, 16
      %154 = vsyncadd [#allocation18], %s153
      %s156 = sshll.u32 [#allocation19], 4
      %s157 = int_to_ptr.vmem [resolvable:$true] %s156
      %159 = dma.hbm_to_vmem [thread:$0]  %s13, 16, %s157, [#allocation18]
    $region57: #{tpu_custom_call.1} parent=1 // pred_fallthru
      _
    // Predicated region
    $region58: #{tpu_custom_call.1} parent=1 // pred_check
      _
    $region59: #{tpu_custom_call.1} parent=1 // pred_check_branch
      %161 = sbr.rel (0) target = $region61
    $region60: #{tpu_custom_call.1} parent=1 // pred_region
      _
    $region61: #{tpu_custom_call.1} parent=1 // pred_fallthru
      _
    // Predicated region
    $region62: #{tpu_custom_call.1} parent=1 // pred_check
      _
    $region63: #{tpu_custom_call.1} parent=1 // pred_check_branch
      %163 = sbr.rel (0) target = $region65
    $region64: #{tpu_custom_call.1} parent=1 // pred_region
      %s165 = ssub.s32 16, 16
      %166 = vsyncadd [#allocation21], %s165
      %s168 = sshll.u32 [#allocation20], 4
      %s169 = int_to_ptr.vmem [resolvable:$true] %s168
      %171 = dma.hbm_to_vmem [thread:$0]  %s15, 16, %s169, [#allocation21]
    $region65: #{tpu_custom_call.1} parent=1 // pred_fallthru
      _
    // Predicated region
    $region66: #{tpu_custom_call.1} parent=1 // pred_check
      _
    $region67: #{tpu_custom_call.1} parent=1 // pred_check_branch
      %173 = sbr.rel (0) target = $region69
    $region68: #{tpu_custom_call.1} parent=1 // pred_region
      %s175 = ssub.s32 256, 256
      %176 = vsyncadd [#allocation21], %s175
      %s177 = sshll.u32 [#allocation22], 4
      %s178 = int_to_ptr.vmem [resolvable:$true] %s177
      %183 = dma.hbm_to_vmem [thread:$0]  %s16, 256, %s178, [#allocation21], 64, 64, 4
    $region69: #{tpu_custom_call.1} parent=1 // pred_fallthru
      _
    // Predicated region
    $region70: #{tpu_custom_call.1} parent=1 // pred_check
      _
    $region71: #{tpu_custom_call.1} parent=1 // pred_check_branch
      %185 = sbr.rel (0) target = $region73
    $region72: #{tpu_custom_call.1} parent=1 // pred_region
      %s187 = ssub.s32 16, 16
      %188 = vsyncadd [#allocation24], %s187
      %s190 = sshll.u32 [#allocation23], 4
      %s191 = int_to_ptr.vmem [resolvable:$true] %s190
      %193 = dma.hbm_to_vmem [thread:$0]  %s17, 16, %s191, [#allocation24]
    $region73: #{tpu_custom_call.1} parent=1 // pred_fallthru
      _
    // Predicated region
    $region74: #{tpu_custom_call.1} parent=1 // pred_check
      _
    $region75: #{tpu_custom_call.1} parent=1 // pred_check_branch
      %195 = sbr.rel (0) target = $region77
    $region76: #{tpu_custom_call.1} parent=1 // pred_region
      _
    $region77: #{tpu_custom_call.1} parent=1 // pred_fallthru
      _
    // Predicated region
    $region78: #{tpu_custom_call.1} parent=1 // pred_check
      _
    $region79: #{tpu_custom_call.1} parent=1 // pred_check_branch
      %197 = sbr.rel (0) target = $region81
    $region80: #{tpu_custom_call.1} parent=1 // pred_region
      _
    $region81: #{tpu_custom_call.1} parent=1 // pred_fallthru
      _
    // Predicated region
    $region82: #{tpu_custom_call.1} parent=1 // pred_check
      _
    $region83: #{tpu_custom_call.1} parent=1 // pred_check_branch
      %199 = sbr.rel (0) target = $region85
    $region84: #{tpu_custom_call.1} parent=1 // pred_region
      %s201 = ssub.s32 256, 256
      %202 = vsyncadd [#allocation24], %s201
      %s203 = sshll.u32 [#allocation25], 4
      %s204 = int_to_ptr.vmem [resolvable:$true] %s203
      %209 = dma.hbm_to_vmem [thread:$0]  %s20, 256, %s204, [#allocation24], 64, 64, 4
    $region85: #{tpu_custom_call.1} parent=1 // pred_fallthru
      _
    // Predicated region
    $region86: #{tpu_custom_call.1} parent=1 // pred_check
      _
    $region87: #{tpu_custom_call.1} parent=1 // pred_check_branch
      %211 = sbr.rel (0) target = $region89
    $region88: #{tpu_custom_call.1} parent=1 // pred_region
      _
    $region89: #{tpu_custom_call.1} parent=1 // pred_fallthru
      _
    // Predicated region
    $region90: #{tpu_custom_call.1} parent=1 // pred_check
      _
    $region91: #{tpu_custom_call.1} parent=1 // pred_check_branch
      %213 = sbr.rel (0) target = $region93
    $region92: #{tpu_custom_call.1} parent=1 // pred_region
      _
    $region93: #{tpu_custom_call.1} parent=1 // pred_fallthru
      _
    // Predicated region
    $region94: #{tpu_custom_call.1} parent=1 // pred_check
      _
    $region95: #{tpu_custom_call.1} parent=1 // pred_check_branch
      %215 = sbr.rel (0) target = $region97
    $region96: #{tpu_custom_call.1} parent=1 // pred_region
      _
    $region97: #{tpu_custom_call.1} parent=1 // pred_fallthru
      _
    // Predicated region
    $region98: #{tpu_custom_call.1} parent=1 // pred_check
      _
    $region99: #{tpu_custom_call.1} parent=1 // pred_check_branch
      %217 = sbr.rel (0) target = $region101
    $region100: #{tpu_custom_call.1} parent=1 // pred_region
      %218 = dma.done [#allocation3], 128
    $region101: #{tpu_custom_call.1} parent=1 // pred_fallthru
      _
    // Predicated region
    $region102: #{tpu_custom_call.1} parent=1 // pred_check
      _
    $region103: #{tpu_custom_call.1} parent=1 // pred_check_branch
      %220 = sbr.rel (0) target = $region105
    $region104: #{tpu_custom_call.1} parent=1 // pred_region
      %221 = dma.done [#allocation6], 128
    $region105: #{tpu_custom_call.1} parent=1 // pred_fallthru
      _
    // Predicated region
    $region106: #{tpu_custom_call.1} parent=1 // pred_check
      _
    $region107: #{tpu_custom_call.1} parent=1 // pred_check_branch
      %223 = sbr.rel (0) target = $region109
    $region108: #{tpu_custom_call.1} parent=1 // pred_region
      %224 = dma.done [#allocation6], 16
    $region109: #{tpu_custom_call.1} parent=1 // pred_fallthru
      _
    // Predicated region
    $region110: #{tpu_custom_call.1} parent=1 // pred_check
      _
    $region111: #{tpu_custom_call.1} parent=1 // pred_check_branch
      %226 = sbr.rel (0) target = $region113
    $region112: #{tpu_custom_call.1} parent=1 // pred_region
      %227 = dma.done [#allocation9], 16
    $region113: #{tpu_custom_call.1} parent=1 // pred_fallthru
      _
    // Predicated region
    $region114: #{tpu_custom_call.1} parent=1 // pred_check
      _
    $region115: #{tpu_custom_call.1} parent=1 // pred_check_branch
      %229 = sbr.rel (0) target = $region117
    $region116: #{tpu_custom_call.1} parent=1 // pred_region
      %230 = dma.done [#allocation9], 16
    $region117: #{tpu_custom_call.1} parent=1 // pred_fallthru
      _
    // Predicated region
    $region118: #{tpu_custom_call.1} parent=1 // pred_check
      _
    $region119: #{tpu_custom_call.1} parent=1 // pred_check_branch
      %232 = sbr.rel (0) target = $region121
    $region120: #{tpu_custom_call.1} parent=1 // pred_region
      %233 = dma.done [#allocation12], 16
    $region121: #{tpu_custom_call.1} parent=1 // pred_fallthru
      _
    // Predicated region
    $region122: #{tpu_custom_call.1} parent=1 // pred_check
      _
    $region123: #{tpu_custom_call.1} parent=1 // pred_check_branch
      %235 = sbr.rel (0) target = $region125
    $region124: #{tpu_custom_call.1} parent=1 // pred_region
      %236 = dma.done [#allocation12], 16
    $region125: #{tpu_custom_call.1} parent=1 // pred_fallthru
      _
    // Predicated region
    $region126: #{tpu_custom_call.1} parent=1 // pred_check
      _
    $region127: #{tpu_custom_call.1} parent=1 // pred_check_branch
      %238 = sbr.rel (0) target = $region129
    $region128: #{tpu_custom_call.1} parent=1 // pred_region
      %239 = dma.done [#allocation15], 16
    $region129: #{tpu_custom_call.1} parent=1 // pred_fallthru
      _
    // Predicated region
    $region130: #{tpu_custom_call.1} parent=1 // pred_check
      _
    $region131: #{tpu_custom_call.1} parent=1 // pred_check_branch
      %241 = sbr.rel (0) target = $region133
    $region132: #{tpu_custom_call.1} parent=1 // pred_region
      %242 = dma.done [#allocation15], 16
    $region133: #{tpu_custom_call.1} parent=1 // pred_fallthru
      _
    // Predicated region
    $region134: #{tpu_custom_call.1} parent=1 // pred_check
      _
    $region135: #{tpu_custom_call.1} parent=1 // pred_check_branch
      %244 = sbr.rel (0) target = $region137
    $region136: #{tpu_custom_call.1} parent=1 // pred_region
      %245 = dma.done [#allocation18], 256
    $region137: #{tpu_custom_call.1} parent=1 // pred_fallthru
      _
    // Predicated region
    $region138: #{tpu_custom_call.1} parent=1 // pred_check
      _
    $region139: #{tpu_custom_call.1} parent=1 // pred_check_branch
      %247 = sbr.rel (0) target = $region141
    $region140: #{tpu_custom_call.1} parent=1 // pred_region
      %248 = dma.done [#allocation18], 16
    $region141: #{tpu_custom_call.1} parent=1 // pred_fallthru
      _
    // Predicated region
    $region142: #{tpu_custom_call.1} parent=1 // pred_check
      _
    $region143: #{tpu_custom_call.1} parent=1 // pred_check_branch
      %250 = sbr.rel (0) target = $region145
    $region144: #{tpu_custom_call.1} parent=1 // pred_region
      %251 = dma.done [#allocation21], 16
    $region145: #{tpu_custom_call.1} parent=1 // pred_fallthru
      _
    // Predicated region
    $region146: #{tpu_custom_call.1} parent=1 // pred_check
      _
    $region147: #{tpu_custom_call.1} parent=1 // pred_check_branch
      %253 = sbr.rel (0) target = $region149
    $region148: #{tpu_custom_call.1} parent=1 // pred_region
      %254 = dma.done [#allocation21], 256
    $region149: #{tpu_custom_call.1} parent=1 // pred_fallthru
      _
    // Predicated region
    $region150: #{tpu_custom_call.1} parent=1 // pred_check
      _
    $region151: #{tpu_custom_call.1} parent=1 // pred_check_branch
      %256 = sbr.rel (0) target = $region153
    $region152: #{tpu_custom_call.1} parent=1 // pred_region
      %257 = dma.done [#allocation24], 16
    $region153: #{tpu_custom_call.1} parent=1 // pred_fallthru
      _
    // Predicated region
    $region154: #{tpu_custom_call.1} parent=1 // pred_check
      _
    $region155: #{tpu_custom_call.1} parent=1 // pred_check_branch
      %259 = sbr.rel (0) target = $region157
    $region156: #{tpu_custom_call.1} parent=1 // pred_region
      %260 = dma.done [#allocation24], 256
    $region157: #{tpu_custom_call.1} parent=1 // pred_fallthru
      _
    %v264 = vld [vmem:[%s0] sm:$0xff]
    %v265 = vld [vmem:[%s0 + $0x8] sm:$0xff]
    %v266 = vld [vmem:[%s2] sm:$0xff]
    %v267 = vld [vmem:[%s2 + $0x8] sm:$0xff]
    %v268 = vld [vmem:[%s2 + $0x10] sm:$0xff]
    %v269 = vld [vmem:[%s2 + $0x18] sm:$0xff]
    %v270 = vpack.c.bf16 %v267, %v266
    %v271 = vpack.c.bf16 %v269, %v268
    %v272 = vld [vmem:[#allocation2] sm:$0xf]
    %v273 = vld [vmem:[#allocation2 + $0x4] sm:$0xf]
    %vm274 = vcmp.gt.bf16.partialorder %v272, 0
    %vm275 = vcmp.gt.bf16.partialorder %v273, 0
    %v276 = vld [vmem:[#allocation5] sm:$0xf]
    %v277 = vld [vmem:[#allocation5 + $0x4] sm:$0xf]
    %vm278 = vcmp.gt.bf16.partialorder %v276, 0
    %vm279 = vcmp.gt.bf16.partialorder %v277, 0
    %v280 = vld [vmem:[#allocation7] sm:$0x1]
    %v281 = vld [vmem:[#allocation8] sm:$0x1]
    %vm282 = vcmask 261120
    %v283 = vsel %vm282, %v264, 0.0
    %284 = vadd.xlane.f32.xlu0 %v283
    %v285 = vpop.xlane.xlu0 %284
    %v286 = vsel %vm282, %v265, 0.0
    %287 = vadd.xlane.f32.xlu0 %v286
    %v288 = vpop.xlane.xlu0 %287
    %v289 = vrcp.pop 32.0
    %v290 = vmul.f32 %v285, %v289
    %v291 = vmul.f32 %v288, %v289
    %v292 = vsub.f32 %v264, %v290
    %v293 = vsub.f32 %v265, %v291
    %v294 = vmul.f32 %v292, %v292
    %v295 = vmul.f32 %v293, %v293
    %v296 = vsel %vm282, %v294, 0.0
    %297 = vadd.xlane.f32.xlu0 %v296
    %v298 = vpop.xlane.xlu0 %297
    %v299 = vsel %vm282, %v295, 0.0
    %300 = vadd.xlane.f32.xlu0 %v299
    %v301 = vpop.xlane.xlu0 %300
    %v302 = vmul.f32 %v298, %v289
    %v303 = vmul.f32 %v301, %v289
    %v304 = vadd.f32 %v302, 1e-12
    %v305 = vadd.f32 %v303, 1e-12
    %v306 = vrsqrt.pop %v304
    %v307 = vrsqrt.pop %v305
    %v308 = vmul.f32 %v292, %v306
    %v309 = vmul.f32 %v293, %v307
    %v311 = vlaneseq
    %v312 = vshrl.u32 %v311, 7
    %v313 = vsub.s32 0, %v312
    %v314 = vrot.slane %v280, %v313
    %v316 = vmul.f32 %v308, %v314
    %v317 = vmul.f32 %v309, %v314
    %v319 = vlaneseq
    %v320 = vshrl.u32 %v319, 7
    %v321 = vsub.s32 0, %v320
    %v322 = vrot.slane %v281, %v321
    %v324 = vadd.f32 %v316, %v322
    %v325 = vadd.f32 %v317, %v322
    %v326 = vpack.c.bf16 %v325, %v324
    %v327 = vld [vmem:[%s10] sm:$0xf]
    %v328 = vld [vmem:[%s10 + $0x4] sm:$0xf]
    %v329 = vld [vmem:[%s10 + $0x8] sm:$0xf]
    %v330 = vld [vmem:[%s10 + $0xc] sm:$0xf]
    %v331 = vld [vmem:[#allocation16] sm:$0x1]
    %v333 = vlaneseq
    %v334 = vshrl.u32 %v333, 7
    %v335 = vsub.s32 0, %v334
    %v336 = vrot.slane %v331, %v335
    %v342 = vunpack.c.l.b16 %v327
    %v343 = vunpack.c.l.b16 %v328
    %v344 = vunpack.c.l.b16 %v329
    %v345 = vunpack.c.l.b16 %v330
    %v346 = vpack.c.b16 %v343, %v342
    %v347 = vpack.c.b16 %v345, %v344
    %v351 = vsel %vm282, %v326, 0
    %353 = vmatprep.subr.bf16.mxu0 0
    %354 = vmatpush1.bf16.msra.mxu0 %v346
    %355 = vmatprep.subr.bf16.mxu0 0
    %356 = vmatpush1.bf16.msra.mxu0 %v347
    %357 = vmatprep.subr.bf16.mxu0 0
    %358 = vmatpush1.bf16.msra.mxu0 0
    %359 = vmatprep.subr.bf16.mxu0 0
    %360 = vmatpush1.bf16.msra.mxu0 0
    %361 = vmatprep.subr.bf16.mxu0 0
    %362 = vmatpush1.bf16.msra.mxu0 0
    %363 = vmatprep.subr.bf16.mxu0 0
    %364 = vmatpush1.bf16.msra.mxu0 0
    %365 = vmatprep.subr.bf16.mxu0 0
    %366 = vmatpush1.bf16.msra.mxu0 0
    %367 = vmatprep.subr.bf16.mxu0 0
    %368 = vmatpush1.bf16.msra.mxu0 0
    %369 = vmatprep.subr.bf16.mxu0 0
    %370 = vmatpush1.bf16.msra.mxu0 0
    %371 = vmatprep.subr.bf16.mxu0 0
    %372 = vmatpush1.bf16.msra.mxu0 0
    %373 = vmatprep.subr.bf16.mxu0 0
    %374 = vmatpush1.bf16.msra.mxu0 0
    %375 = vmatprep.subr.bf16.mxu0 0
    %376 = vmatpush1.bf16.msra.mxu0 0
    %377 = vmatprep.subr.bf16.mxu0 0
    %378 = vmatpush1.bf16.msra.mxu0 0
    %379 = vmatprep.subr.bf16.mxu0 0
    %380 = vmatpush1.bf16.msra.mxu0 0
    %381 = vmatprep.subr.bf16.mxu0 0
    %382 = vmatpush1.bf16.msra.mxu0 0
    %383 = vmatprep.subr.bf16.mxu0 0
    %384 = vmatpush1.bf16.msra.mxu0 0
    %385 = vmatprep.mubr.bf16.mxu0 0
    %386 = vmatmul.mubr.bf16.gmra.mrb[0].mxu0 %v351
    %v387 = vpop.f32.mrb[0].mxu0
    %v388 = vadd.f32 %v336, %v387
    %v389 = vpop.f32.mrb[0].mxu0
    %v390 = vpop.f32.mrb[0].mxu0
    %v391 = vadd.f32 %v336, %v390
    %v392 = vpop.f32.mrb[0].mxu0
    %393 = vdwg.mxu0
    %v394 = vmul.f32 %v388, 0.35355338
    %v395 = vmul.f32 %v391, 0.35355338
    %v396 = vpack.c.bf16 %v395, %v394
    %v397 = vpack.c.bf16 %v391, %v388
    %v399 = vunpack.c.l.b16 %v396
    %v400 = vunpack.c.h.b16 %v396
    %v401 = vpack.c.b16 %v399, %v399
    %v402 = vpack.c.b16 %v400, %v400
    %403 = vrot.lane.b32.xlu0 %v401, 120
    %v404 = vpop.permute.xlu0 %403
    %405 = vrot.lane.b32.xlu0 %v402, 120
    %v406 = vpop.permute.xlu0 %405
    %407 = vrot.lane.b32.xlu0 %v401, 112
    %v408 = vpop.permute.xlu0 %407
    %409 = vrot.lane.b32.xlu0 %v402, 112
    %v410 = vpop.permute.xlu0 %409
    %411 = vrot.lane.b32.xlu0 %v401, 104
    %v412 = vpop.permute.xlu0 %411
    %413 = vrot.lane.b32.xlu0 %v402, 104
    %v414 = vpop.permute.xlu0 %413
    %v416 = vunpack.c.l.b16 %v397
    %v417 = vunpack.c.h.b16 %v397
    %v418 = vpack.c.b16 %v416, %v416
    %v419 = vpack.c.b16 %v417, %v417
    %420 = vrot.lane.b32.xlu0 %v418, 120
    %v421 = vpop.permute.xlu0 %420
    %422 = vrot.lane.b32.xlu0 %v419, 120
    %v423 = vpop.permute.xlu0 %422
    %424 = vrot.lane.b32.xlu0 %v418, 112
    %v425 = vpop.permute.xlu0 %424
    %426 = vrot.lane.b32.xlu0 %v419, 112
    %v427 = vpop.permute.xlu0 %426
    %428 = vrot.lane.b32.xlu0 %v418, 104
    %v429 = vpop.permute.xlu0 %428
    %430 = vrot.lane.b32.xlu0 %v419, 104
    %v431 = vpop.permute.xlu0 %430
    %432 = vrot.lane.b32.xlu0 %v418, 96
    %v433 = vpop.permute.xlu0 %432
    %vm434 = vcmask 64512
    %v436 = vsel %vm434, %v401, 0
    %v439 = vsel %vm434, %v433, 0
    %441 = vmatprep.subr.bf16.mxu0 0
    %442 = vmatpush1.bf16.xpose.msra.mxu0 %v439
    %443 = vmatprep.subr.bf16.mxu0 0
    %444 = vmatpush1.bf16.xpose.msra.mxu0 0
    %445 = vmatprep.subr.bf16.mxu0 0
    %446 = vmatpush1.bf16.xpose.msra.mxu0 0
    %447 = vmatprep.subr.bf16.mxu0 0
    %448 = vmatpush1.bf16.xpose.msra.mxu0 0
    %449 = vmatprep.subr.bf16.mxu0 0
    %450 = vmatpush1.bf16.xpose.msra.mxu0 0
    %451 = vmatprep.subr.bf16.mxu0 0
    %452 = vmatpush1.bf16.xpose.msra.mxu0 0
    %453 = vmatprep.subr.bf16.mxu0 0
    %454 = vmatpush1.bf16.xpose.msra.mxu0 0
    %455 = vmatprep.subr.bf16.mxu0 0
    %456 = vmatpush1.bf16.xpose.msra.mxu0 0
    %457 = vmatprep.subr.bf16.mxu0 0
    %458 = vmatpush1.bf16.xpose.msra.mxu0 0
    %459 = vmatprep.subr.bf16.mxu0 0
    %460 = vmatpush1.bf16.xpose.msra.mxu0 0
    %461 = vmatprep.subr.bf16.mxu0 0
    %462 = vmatpush1.bf16.xpose.msra.mxu0 0
    %463 = vmatprep.subr.bf16.mxu0 0
    %464 = vmatpush1.bf16.xpose.msra.mxu0 0
    %465 = vmatprep.subr.bf16.mxu0 0
    %466 = vmatpush1.bf16.xpose.msra.mxu0 0
    %467 = vmatprep.subr.bf16.mxu0 0
    %468 = vmatpush1.bf16.xpose.msra.mxu0 0
    %469 = vmatprep.subr.bf16.mxu0 0
    %470 = vmatpush1.bf16.xpose.msra.mxu0 0
    %471 = vmatprep.subr.bf16.mxu0 0
    %472 = vmatpush1.bf16.xpose.msra.mxu0 0
    %473 = vmatprep.mubr.bf16.mxu0 0
    %474 = vmatmul.mubr.bf16.gmra.mrb[0].mxu0 %v436
    %v475 = vpop.f32.mrb[0].mxu0
    %v476 = vadd.f32 0.0, %v475
    %v477 = vpop.f32.mrb[0].mxu0
    %v478 = vpop.f32.mrb[0].mxu0
    %v479 = vpop.f32.mrb[0].mxu0
    %480 = vdwg.mxu0
    %481 = vrot.lane.b32.xlu0 %v419, 96
    %v482 = vpop.permute.xlu0 %481
    %v484 = vsel %vm434, %v402, 0
    %v487 = vsel %vm434, %v482, 0
    %489 = vmatprep.subr.bf16.mxu0 0
    %490 = vmatpush1.bf16.xpose.msra.mxu0 %v487
    %491 = vmatprep.subr.bf16.mxu0 0
    %492 = vmatpush1.bf16.xpose.msra.mxu0 0
    %493 = vmatprep.subr.bf16.mxu0 0
    %494 = vmatpush1.bf16.xpose.msra.mxu0 0
    %495 = vmatprep.subr.bf16.mxu0 0
    %496 = vmatpush1.bf16.xpose.msra.mxu0 0
    %497 = vmatprep.subr.bf16.mxu0 0
    %498 = vmatpush1.bf16.xpose.msra.mxu0 0
    %499 = vmatprep.subr.bf16.mxu0 0
    %500 = vmatpush1.bf16.xpose.msra.mxu0 0
    %501 = vmatprep.subr.bf16.mxu0 0
    %502 = vmatpush1.bf16.xpose.msra.mxu0 0
    %503 = vmatprep.subr.bf16.mxu0 0
    %504 = vmatpush1.bf16.xpose.msra.mxu0 0
    %505 = vmatprep.subr.bf16.mxu0 0
    %506 = vmatpush1.bf16.xpose.msra.mxu0 0
    %507 = vmatprep.subr.bf16.mxu0 0
    %508 = vmatpush1.bf16.xpose.msra.mxu0 0
    %509 = vmatprep.subr.bf16.mxu0 0
    %510 = vmatpush1.bf16.xpose.msra.mxu0 0
    %511 = vmatprep.subr.bf16.mxu0 0
    %512 = vmatpush1.bf16.xpose.msra.mxu0 0
    %513 = vmatprep.subr.bf16.mxu0 0
    %514 = vmatpush1.bf16.xpose.msra.mxu0 0
    %515 = vmatprep.subr.bf16.mxu0 0
    %516 = vmatpush1.bf16.xpose.msra.mxu0 0
    %517 = vmatprep.subr.bf16.mxu0 0
    %518 = vmatpush1.bf16.xpose.msra.mxu0 0
    %519 = vmatprep.subr.bf16.mxu0 0
    %520 = vmatpush1.bf16.xpose.msra.mxu0 0
    %521 = vmatprep.mubr.bf16.mxu0 0
    %522 = vmatmul.mubr.bf16.gmra.mrb[0].mxu0 %v484
    %v523 = vpop.f32.mrb[0].mxu0
    %v524 = vadd.f32 0.0, %v523
    %v525 = vpop.f32.mrb[0].mxu0
    %v526 = vpop.f32.mrb[0].mxu0
    %v527 = vpop.f32.mrb[0].mxu0
    %528 = vdwg.mxu0
    %v529 = vunpack.c.l.b16 %v421
    %v530 = vpack.c.b16 %v529, %v529
    %531 = vrot.lane.b32.xlu0 %v530, 96
    %v532 = vpop.permute.xlu0 %531
    %v534 = vsel %vm434, %v404, 0
    %v537 = vsel %vm434, %v532, 0
    %539 = vmatprep.subr.bf16.mxu0 0
    %540 = vmatpush1.bf16.xpose.msra.mxu0 %v537
    %541 = vmatprep.subr.bf16.mxu0 0
    %542 = vmatpush1.bf16.xpose.msra.mxu0 0
    %543 = vmatprep.subr.bf16.mxu0 0
    %544 = vmatpush1.bf16.xpose.msra.mxu0 0
    %545 = vmatprep.subr.bf16.mxu0 0
    %546 = vmatpush1.bf16.xpose.msra.mxu0 0
    %547 = vmatprep.subr.bf16.mxu0 0
    %548 = vmatpush1.bf16.xpose.msra.mxu0 0
    %549 = vmatprep.subr.bf16.mxu0 0
    %550 = vmatpush1.bf16.xpose.msra.mxu0 0
    %551 = vmatprep.subr.bf16.mxu0 0
    %552 = vmatpush1.bf16.xpose.msra.mxu0 0
    %553 = vmatprep.subr.bf16.mxu0 0
    %554 = vmatpush1.bf16.xpose.msra.mxu0 0
    %555 = vmatprep.subr.bf16.mxu0 0
    %556 = vmatpush1.bf16.xpose.msra.mxu0 0
    %557 = vmatprep.subr.bf16.mxu0 0
    %558 = vmatpush1.bf16.xpose.msra.mxu0 0
    %559 = vmatprep.subr.bf16.mxu0 0
    %560 = vmatpush1.bf16.xpose.msra.mxu0 0
    %561 = vmatprep.subr.bf16.mxu0 0
    %562 = vmatpush1.bf16.xpose.msra.mxu0 0
    %563 = vmatprep.subr.bf16.mxu0 0
    %564 = vmatpush1.bf16.xpose.msra.mxu0 0
    %565 = vmatprep.subr.bf16.mxu0 0
    %566 = vmatpush1.bf16.xpose.msra.mxu0 0
    %567 = vmatprep.subr.bf16.mxu0 0
    %568 = vmatpush1.bf16.xpose.msra.mxu0 0
    %569 = vmatprep.subr.bf16.mxu0 0
    %570 = vmatpush1.bf16.xpose.msra.mxu0 0
    %571 = vmatprep.mubr.bf16.mxu0 0
    %572 = vmatmul.mubr.bf16.gmra.mrb[0].mxu0 %v534
    %v573 = vpop.f32.mrb[0].mxu0
    %v574 = vadd.f32 0.0, %v573
    %v575 = vpop.f32.mrb[0].mxu0
    %v576 = vpop.f32.mrb[0].mxu0
    %v577 = vpop.f32.mrb[0].mxu0
    %578 = vdwg.mxu0
    %v579 = vunpack.c.l.b16 %v423
    %v580 = vpack.c.b16 %v579, %v579
    %581 = vrot.lane.b32.xlu0 %v580, 96
    %v582 = vpop.permute.xlu0 %581
    %v584 = vsel %vm434, %v406, 0
    %v587 = vsel %vm434, %v582, 0
    %589 = vmatprep.subr.bf16.mxu0 0
    %590 = vmatpush1.bf16.xpose.msra.mxu0 %v587
    %591 = vmatprep.subr.bf16.mxu0 0
    %592 = vmatpush1.bf16.xpose.msra.mxu0 0
    %593 = vmatprep.subr.bf16.mxu0 0
    %594 = vmatpush1.bf16.xpose.msra.mxu0 0
    %595 = vmatprep.subr.bf16.mxu0 0
    %596 = vmatpush1.bf16.xpose.msra.mxu0 0
    %597 = vmatprep.subr.bf16.mxu0 0
    %598 = vmatpush1.bf16.xpose.msra.mxu0 0
    %599 = vmatprep.subr.bf16.mxu0 0
    %600 = vmatpush1.bf16.xpose.msra.mxu0 0
    %601 = vmatprep.subr.bf16.mxu0 0
    %602 = vmatpush1.bf16.xpose.msra.mxu0 0
    %603 = vmatprep.subr.bf16.mxu0 0
    %604 = vmatpush1.bf16.xpose.msra.mxu0 0
    %605 = vmatprep.subr.bf16.mxu0 0
    %606 = vmatpush1.bf16.xpose.msra.mxu0 0
    %607 = vmatprep.subr.bf16.mxu0 0
    %608 = vmatpush1.bf16.xpose.msra.mxu0 0
    %609 = vmatprep.subr.bf16.mxu0 0
    %610 = vmatpush1.bf16.xpose.msra.mxu0 0
    %611 = vmatprep.subr.bf16.mxu0 0
    %612 = vmatpush1.bf16.xpose.msra.mxu0 0
    %613 = vmatprep.subr.bf16.mxu0 0
    %614 = vmatpush1.bf16.xpose.msra.mxu0 0
    %615 = vmatprep.subr.bf16.mxu0 0
    %616 = vmatpush1.bf16.xpose.msra.mxu0 0
    %617 = vmatprep.subr.bf16.mxu0 0
    %618 = vmatpush1.bf16.xpose.msra.mxu0 0
    %619 = vmatprep.subr.bf16.mxu0 0
    %620 = vmatpush1.bf16.xpose.msra.mxu0 0
    %621 = vmatprep.mubr.bf16.mxu0 0
    %622 = vmatmul.mubr.bf16.gmra.mrb[0].mxu0 %v584
    %v623 = vpop.f32.mrb[0].mxu0
    %v624 = vadd.f32 0.0, %v623
    %v625 = vpop.f32.mrb[0].mxu0
    %v626 = vpop.f32.mrb[0].mxu0
    %v627 = vpop.f32.mrb[0].mxu0
    %628 = vdwg.mxu0
    %v629 = vunpack.c.l.b16 %v425
    %v630 = vpack.c.b16 %v629, %v629
    %631 = vrot.lane.b32.xlu0 %v630, 96
    %v632 = vpop.permute.xlu0 %631
    %v634 = vsel %vm434, %v408, 0
    %v637 = vsel %vm434, %v632, 0
    %639 = vmatprep.subr.bf16.mxu0 0
    %640 = vmatpush1.bf16.xpose.msra.mxu0 %v637
    %641 = vmatprep.subr.bf16.mxu0 0
    %642 = vmatpush1.bf16.xpose.msra.mxu0 0
    %643 = vmatprep.subr.bf16.mxu0 0
    %644 = vmatpush1.bf16.xpose.msra.mxu0 0
    %645 = vmatprep.subr.bf16.mxu0 0
    %646 = vmatpush1.bf16.xpose.msra.mxu0 0
    %647 = vmatprep.subr.bf16.mxu0 0
    %648 = vmatpush1.bf16.xpose.msra.mxu0 0
    %649 = vmatprep.subr.bf16.mxu0 0
    %650 = vmatpush1.bf16.xpose.msra.mxu0 0
    %651 = vmatprep.subr.bf16.mxu0 0
    %652 = vmatpush1.bf16.xpose.msra.mxu0 0
    %653 = vmatprep.subr.bf16.mxu0 0
    %654 = vmatpush1.bf16.xpose.msra.mxu0 0
    %655 = vmatprep.subr.bf16.mxu0 0
    %656 = vmatpush1.bf16.xpose.msra.mxu0 0
    %657 = vmatprep.subr.bf16.mxu0 0
    %658 = vmatpush1.bf16.xpose.msra.mxu0 0
    %659 = vmatprep.subr.bf16.mxu0 0
    %660 = vmatpush1.bf16.xpose.msra.mxu0 0
    %661 = vmatprep.subr.bf16.mxu0 0
    %662 = vmatpush1.bf16.xpose.msra.mxu0 0
    %663 = vmatprep.subr.bf16.mxu0 0
    %664 = vmatpush1.bf16.xpose.msra.mxu0 0
    %665 = vmatprep.subr.bf16.mxu0 0
    %666 = vmatpush1.bf16.xpose.msra.mxu0 0
    %667 = vmatprep.subr.bf16.mxu0 0
    %668 = vmatpush1.bf16.xpose.msra.mxu0 0
    %669 = vmatprep.subr.bf16.mxu0 0
    %670 = vmatpush1.bf16.xpose.msra.mxu0 0
    %671 = vmatprep.mubr.bf16.mxu0 0
    %672 = vmatmul.mubr.bf16.gmra.mrb[0].mxu0 %v634
    %v673 = vpop.f32.mrb[0].mxu0
    %v674 = vadd.f32 0.0, %v673
    %v675 = vpop.f32.mrb[0].mxu0
    %v676 = vpop.f32.mrb[0].mxu0
    %v677 = vpop.f32.mrb[0].mxu0
    %678 = vdwg.mxu0
    %v679 = vunpack.c.l.b16 %v427
    %v680 = vpack.c.b16 %v679, %v679
    %681 = vrot.lane.b32.xlu0 %v680, 96
    %v682 = vpop.permute.xlu0 %681
    %v684 = vsel %vm434, %v410, 0
    %v687 = vsel %vm434, %v682, 0
    %689 = vmatprep.subr.bf16.mxu0 0
    %690 = vmatpush1.bf16.xpose.msra.mxu0 %v687
    %691 = vmatprep.subr.bf16.mxu0 0
    %692 = vmatpush1.bf16.xpose.msra.mxu0 0
    %693 = vmatprep.subr.bf16.mxu0 0
    %694 = vmatpush1.bf16.xpose.msra.mxu0 0
    %695 = vmatprep.subr.bf16.mxu0 0
    %696 = vmatpush1.bf16.xpose.msra.mxu0 0
    %697 = vmatprep.subr.bf16.mxu0 0
    %698 = vmatpush1.bf16.xpose.msra.mxu0 0
    %699 = vmatprep.subr.bf16.mxu0 0
    %700 = vmatpush1.bf16.xpose.msra.mxu0 0
    %701 = vmatprep.subr.bf16.mxu0 0
    %702 = vmatpush1.bf16.xpose.msra.mxu0 0
    %703 = vmatprep.subr.bf16.mxu0 0
    %704 = vmatpush1.bf16.xpose.msra.mxu0 0
    %705 = vmatprep.subr.bf16.mxu0 0
    %706 = vmatpush1.bf16.xpose.msra.mxu0 0
    %707 = vmatprep.subr.bf16.mxu0 0
    %708 = vmatpush1.bf16.xpose.msra.mxu0 0
    %709 = vmatprep.subr.bf16.mxu0 0
    %710 = vmatpush1.bf16.xpose.msra.mxu0 0
    %711 = vmatprep.subr.bf16.mxu0 0
    %712 = vmatpush1.bf16.xpose.msra.mxu0 0
    %713 = vmatprep.subr.bf16.mxu0 0
    %714 = vmatpush1.bf16.xpose.msra.mxu0 0
    %715 = vmatprep.subr.bf16.mxu0 0
    %716 = vmatpush1.bf16.xpose.msra.mxu0 0
    %717 = vmatprep.subr.bf16.mxu0 0
    %718 = vmatpush1.bf16.xpose.msra.mxu0 0
    %719 = vmatprep.subr.bf16.mxu0 0
    %720 = vmatpush1.bf16.xpose.msra.mxu0 0
    %721 = vmatprep.mubr.bf16.mxu0 0
    %722 = vmatmul.mubr.bf16.gmra.mrb[0].mxu0 %v684
    %v723 = vpop.f32.mrb[0].mxu0
    %v724 = vadd.f32 0.0, %v723
    %v725 = vpop.f32.mrb[0].mxu0
    %v726 = vpop.f32.mrb[0].mxu0
    %v727 = vpop.f32.mrb[0].mxu0
    %728 = vdwg.mxu0
    %v729 = vunpack.c.l.b16 %v429
    %v730 = vpack.c.b16 %v729, %v729
    %731 = vrot.lane.b32.xlu0 %v730, 96
    %v732 = vpop.permute.xlu0 %731
    %v734 = vsel %vm434, %v412, 0
    %v737 = vsel %vm434, %v732, 0
    %739 = vmatprep.subr.bf16.mxu0 0
    %740 = vmatpush1.bf16.xpose.msra.mxu0 %v737
    %741 = vmatprep.subr.bf16.mxu0 0
    %742 = vmatpush1.bf16.xpose.msra.mxu0 0
    %743 = vmatprep.subr.bf16.mxu0 0
    %744 = vmatpush1.bf16.xpose.msra.mxu0 0
    %745 = vmatprep.subr.bf16.mxu0 0
    %746 = vmatpush1.bf16.xpose.msra.mxu0 0
    %747 = vmatprep.subr.bf16.mxu0 0
    %748 = vmatpush1.bf16.xpose.msra.mxu0 0
    %749 = vmatprep.subr.bf16.mxu0 0
    %750 = vmatpush1.bf16.xpose.msra.mxu0 0
    %751 = vmatprep.subr.bf16.mxu0 0
    %752 = vmatpush1.bf16.xpose.msra.mxu0 0
    %753 = vmatprep.subr.bf16.mxu0 0
    %754 = vmatpush1.bf16.xpose.msra.mxu0 0
    %755 = vmatprep.subr.bf16.mxu0 0
    %756 = vmatpush1.bf16.xpose.msra.mxu0 0
    %757 = vmatprep.subr.bf16.mxu0 0
    %758 = vmatpush1.bf16.xpose.msra.mxu0 0
    %759 = vmatprep.subr.bf16.mxu0 0
    %760 = vmatpush1.bf16.xpose.msra.mxu0 0
    %761 = vmatprep.subr.bf16.mxu0 0
    %762 = vmatpush1.bf16.xpose.msra.mxu0 0
    %763 = vmatprep.subr.bf16.mxu0 0
    %764 = vmatpush1.bf16.xpose.msra.mxu0 0
    %765 = vmatprep.subr.bf16.mxu0 0
    %766 = vmatpush1.bf16.xpose.msra.mxu0 0
    %767 = vmatprep.subr.bf16.mxu0 0
    %768 = vmatpush1.bf16.xpose.msra.mxu0 0
    %769 = vmatprep.subr.bf16.mxu0 0
    %770 = vmatpush1.bf16.xpose.msra.mxu0 0
    %771 = vmatprep.mubr.bf16.mxu0 0
    %772 = vmatmul.mubr.bf16.gmra.mrb[0].mxu0 %v734
    %v773 = vpop.f32.mrb[0].mxu0
    %v774 = vadd.f32 0.0, %v773
    %v775 = vpop.f32.mrb[0].mxu0
    %v776 = vpop.f32.mrb[0].mxu0
    %v777 = vpop.f32.mrb[0].mxu0
    %778 = vdwg.mxu0
    %v779 = vunpack.c.l.b16 %v431
    %v780 = vpack.c.b16 %v779, %v779
    %781 = vrot.lane.b32.xlu0 %v780, 96
    %v782 = vpop.permute.xlu0 %781
    %v784 = vsel %vm434, %v414, 0
    %v787 = vsel %vm434, %v782, 0
    %789 = vmatprep.subr.bf16.mxu0 0
    %790 = vmatpush1.bf16.xpose.msra.mxu0 %v787
    %791 = vmatprep.subr.bf16.mxu0 0
    %792 = vmatpush1.bf16.xpose.msra.mxu0 0
    %793 = vmatprep.subr.bf16.mxu0 0
    %794 = vmatpush1.bf16.xpose.msra.mxu0 0
    %795 = vmatprep.subr.bf16.mxu0 0
    %796 = vmatpush1.bf16.xpose.msra.mxu0 0
    %797 = vmatprep.subr.bf16.mxu0 0
    %798 = vmatpush1.bf16.xpose.msra.mxu0 0
    %799 = vmatprep.subr.bf16.mxu0 0
    %800 = vmatpush1.bf16.xpose.msra.mxu0 0
    %801 = vmatprep.subr.bf16.mxu0 0
    %802 = vmatpush1.bf16.xpose.msra.mxu0 0
    %803 = vmatprep.subr.bf16.mxu0 0
    %804 = vmatpush1.bf16.xpose.msra.mxu0 0
    %805 = vmatprep.subr.bf16.mxu0 0
    %806 = vmatpush1.bf16.xpose.msra.mxu0 0
    %807 = vmatprep.subr.bf16.mxu0 0
    %808 = vmatpush1.bf16.xpose.msra.mxu0 0
    %809 = vmatprep.subr.bf16.mxu0 0
    %810 = vmatpush1.bf16.xpose.msra.mxu0 0
    %811 = vmatprep.subr.bf16.mxu0 0
    %812 = vmatpush1.bf16.xpose.msra.mxu0 0
    %813 = vmatprep.subr.bf16.mxu0 0
    %814 = vmatpush1.bf16.xpose.msra.mxu0 0
    %815 = vmatprep.subr.bf16.mxu0 0
    %816 = vmatpush1.bf16.xpose.msra.mxu0 0
    %817 = vmatprep.subr.bf16.mxu0 0
    %818 = vmatpush1.bf16.xpose.msra.mxu0 0
    %819 = vmatprep.subr.bf16.mxu0 0
    %820 = vmatpush1.bf16.xpose.msra.mxu0 0
    %821 = vmatprep.mubr.bf16.mxu0 0
    %822 = vmatmul.mubr.bf16.gmra.mrb[0].mxu0 %v784
    %v823 = vpop.f32.mrb[0].mxu0
    %v824 = vadd.f32 0.0, %v823
    %v825 = vpop.f32.mrb[0].mxu0
    %v826 = vpop.f32.mrb[0].mxu0
    %v827 = vpop.f32.mrb[0].mxu0
    %828 = vdwg.mxu0
    %v829 = vsel %vm274, 65537, 0
    %v830 = vsel %vm275, 65537, 0
    %v831 = vunpack.c.l.b16 %v829
    %v832 = vunpack.c.l.b16 %v830
    %vm833 = vcmp.ne.s32.totalorder %v831, 0
    %vm834 = vcmp.ne.s32.totalorder %v832, 0
    %v835 = vsel %vm833, 1, 0
    %v836 = vsel %vm834, 1, 0
    %vm837 = vcmp.eq.s32.totalorder %v835, 1
    %vm838 = vcmp.eq.s32.totalorder %v836, 1
    %v839 = vsel %vm837, %v476, -1e+30
    %v840 = vsel %vm838, %v524, -1e+30
    %v841 = vsel %vm837, %v574, -1e+30
    %v842 = vsel %vm838, %v624, -1e+30
    %v843 = vsel %vm837, %v674, -1e+30
    %v844 = vsel %vm838, %v724, -1e+30
    %v845 = vsel %vm837, %v774, -1e+30
    %v846 = vsel %vm838, %v824, -1e+30
    %v847 = vsel %vm434, %v839, -inf
    %848 = vmax.xlane.f32.xlu0 %v847
    %v849 = vpop.xlane.xlu0 %848
    %v850 = vsel %vm434, %v840, -inf
    %851 = vmax.xlane.f32.xlu0 %v850
    %v852 = vpop.xlane.xlu0 %851
    %v853 = vsel %vm434, %v841, -inf
    %854 = vmax.xlane.f32.xlu0 %v853
    %v855 = vpop.xlane.xlu0 %854
    %v856 = vsel %vm434, %v842, -inf
    %857 = vmax.xlane.f32.xlu0 %v856
    %v858 = vpop.xlane.xlu0 %857
    %v859 = vsel %vm434, %v843, -inf
    %860 = vmax.xlane.f32.xlu0 %v859
    %v861 = vpop.xlane.xlu0 %860
    %v862 = vsel %vm434, %v844, -inf
    %863 = vmax.xlane.f32.xlu0 %v862
    %v864 = vpop.xlane.xlu0 %863
    %v865 = vsel %vm434, %v845, -inf
    %866 = vmax.xlane.f32.xlu0 %v865
    %v867 = vpop.xlane.xlu0 %866
    %v868 = vsel %vm434, %v846, -inf
    %869 = vmax.xlane.f32.xlu0 %v868
    %v870 = vpop.xlane.xlu0 %869
    %v871 = vsub.f32 %v839, %v849
    %v872 = vsub.f32 %v840, %v852
    %v873 = vsub.f32 %v841, %v855
    %v874 = vsub.f32 %v842, %v858
    %v875 = vsub.f32 %v843, %v861
    %v876 = vsub.f32 %v844, %v864
    %v877 = vsub.f32 %v845, %v867
    %v878 = vsub.f32 %v846, %v870
    %v879 = vmul.f32 %v871, 1.442695
    %v880 = vpow.pop %v879
    %v881 = vmul.f32 %v872, 1.442695
    %v882 = vpow.pop %v881
    %v883 = vmul.f32 %v873, 1.442695
    %v884 = vpow.pop %v883
    %v885 = vmul.f32 %v874, 1.442695
    %v886 = vpow.pop %v885
    %v887 = vmul.f32 %v875, 1.442695
    %v888 = vpow.pop %v887
    %v889 = vmul.f32 %v876, 1.442695
    %v890 = vpow.pop %v889
    %v891 = vmul.f32 %v877, 1.442695
    %v892 = vpow.pop %v891
    %v893 = vmul.f32 %v878, 1.442695
    %v894 = vpow.pop %v893
    %v895 = vsel %vm434, %v880, 0.0
    %896 = vadd.xlane.f32.xlu0 %v895
    %v897 = vpop.xlane.xlu0 %896
    %v898 = vsel %vm434, %v882, 0.0
    %899 = vadd.xlane.f32.xlu0 %v898
    %v900 = vpop.xlane.xlu0 %899
    %v901 = vsel %vm434, %v884, 0.0
    %902 = vadd.xlane.f32.xlu0 %v901
    %v903 = vpop.xlane.xlu0 %902
    %v904 = vsel %vm434, %v886, 0.0
    %905 = vadd.xlane.f32.xlu0 %v904
    %v906 = vpop.xlane.xlu0 %905
    %v907 = vsel %vm434, %v888, 0.0
    %908 = vadd.xlane.f32.xlu0 %v907
    %v909 = vpop.xlane.xlu0 %908
    %v910 = vsel %vm434, %v890, 0.0
    %911 = vadd.xlane.f32.xlu0 %v910
    %v912 = vpop.xlane.xlu0 %911
    %v913 = vsel %vm434, %v892, 0.0
    %914 = vadd.xlane.f32.xlu0 %v913
    %v915 = vpop.xlane.xlu0 %914
    %v916 = vsel %vm434, %v894, 0.0
    %917 = vadd.xlane.f32.xlu0 %v916
    %v918 = vpop.xlane.xlu0 %917
    %v919 = vrcp.pop %v897
    %v920 = vrcp.pop %v900
    %v921 = vrcp.pop %v903
    %v922 = vrcp.pop %v906
    %v923 = vrcp.pop %v909
    %v924 = vrcp.pop %v912
    %v925 = vrcp.pop %v915
    %v926 = vrcp.pop %v918
    %v927 = vmul.f32 %v880, %v919
    %v928 = vmul.f32 %v882, %v920
    %v929 = vmul.f32 %v884, %v921
    %v930 = vmul.f32 %v886, %v922
    %v931 = vmul.f32 %v888, %v923
    %v932 = vmul.f32 %v890, %v924
    %v933 = vmul.f32 %v892, %v925
    %v934 = vmul.f32 %v894, %v926
    %v935 = vsel %vm837, %v927, 0.0
    %v936 = vsel %vm838, %v928, 0.0
    %v937 = vsel %vm837, %v929, 0.0
    %v938 = vsel %vm838, %v930, 0.0
    %v939 = vsel %vm837, %v931, 0.0
    %v940 = vsel %vm838, %v932, 0.0
    %v941 = vsel %vm837, %v933, 0.0
    %v942 = vsel %vm838, %v934, 0.0
    %v943 = vpack.c.bf16 %v935, %v935
    %v944 = vpack.c.bf16 %v936, %v936
    %v945 = vpack.c.bf16 %v937, %v937
    %v946 = vpack.c.bf16 %v938, %v938
    %v947 = vpack.c.bf16 %v939, %v939
    %v948 = vpack.c.bf16 %v940, %v940
    %v949 = vpack.c.bf16 %v941, %v941
    %v950 = vpack.c.bf16 %v942, %v942
    %951 = vrot.lane.b32.xlu0 %v418, 64
    %v952 = vpop.permute.xlu0 %951
    %v954 = vsel %vm434, %v943, 0
    %vm956 = vcmask 1043456
    %v958 = vsel %vm956, %v952, 0
    %960 = vmatprep.subr.bf16.mxu0 0
    %961 = vmatpush1.bf16.msra.mxu0 %v958
    %962 = vmatprep.subr.bf16.mxu0 0
    %963 = vmatpush1.bf16.msra.mxu0 0
    %964 = vmatprep.subr.bf16.mxu0 0
    %965 = vmatpush1.bf16.msra.mxu0 0
    %966 = vmatprep.subr.bf16.mxu0 0
    %967 = vmatpush1.bf16.msra.mxu0 0
    %968 = vmatprep.subr.bf16.mxu0 0
    %969 = vmatpush1.bf16.msra.mxu0 0
    %970 = vmatprep.subr.bf16.mxu0 0
    %971 = vmatpush1.bf16.msra.mxu0 0
    %972 = vmatprep.subr.bf16.mxu0 0
    %973 = vmatpush1.bf16.msra.mxu0 0
    %974 = vmatprep.subr.bf16.mxu0 0
    %975 = vmatpush1.bf16.msra.mxu0 0
    %976 = vmatprep.subr.bf16.mxu0 0
    %977 = vmatpush1.bf16.msra.mxu0 0
    %978 = vmatprep.subr.bf16.mxu0 0
    %979 = vmatpush1.bf16.msra.mxu0 0
    %980 = vmatprep.subr.bf16.mxu0 0
    %981 = vmatpush1.bf16.msra.mxu0 0
    %982 = vmatprep.subr.bf16.mxu0 0
    %983 = vmatpush1.bf16.msra.mxu0 0
    %984 = vmatprep.subr.bf16.mxu0 0
    %985 = vmatpush1.bf16.msra.mxu0 0
    %986 = vmatprep.subr.bf16.mxu0 0
    %987 = vmatpush1.bf16.msra.mxu0 0
    %988 = vmatprep.subr.bf16.mxu0 0
    %989 = vmatpush1.bf16.msra.mxu0 0
    %990 = vmatprep.subr.bf16.mxu0 0
    %991 = vmatpush1.bf16.msra.mxu0 0
    %992 = vmatprep.mubr.bf16.mxu0 0
    %993 = vmatmul.mubr.bf16.gmra.mrb[0].mxu0 %v954
    %v994 = vpop.f32.mrb[0].mxu0
    %v995 = vadd.f32 0.0, %v994
    %v996 = vpop.f32.mrb[0].mxu0
    %v997 = vpop.f32.mrb[0].mxu0
    %v998 = vpop.f32.mrb[0].mxu0
    %999 = vdwg.mxu0
    %1000 = vrot.lane.b32.xlu0 %v419, 64
    %v1001 = vpop.permute.xlu0 %1000
    %v1003 = vsel %vm434, %v944, 0
    %v1006 = vsel %vm956, %v1001, 0
    %1008 = vmatprep.subr.bf16.mxu0 0
    %1009 = vmatpush1.bf16.msra.mxu0 %v1006
    %1010 = vmatprep.subr.bf16.mxu0 0
    %1011 = vmatpush1.bf16.msra.mxu0 0
    %1012 = vmatprep.subr.bf16.mxu0 0
    %1013 = vmatpush1.bf16.msra.mxu0 0
    %1014 = vmatprep.subr.bf16.mxu0 0
    %1015 = vmatpush1.bf16.msra.mxu0 0
    %1016 = vmatprep.subr.bf16.mxu0 0
    %1017 = vmatpush1.bf16.msra.mxu0 0
    %1018 = vmatprep.subr.bf16.mxu0 0
    %1019 = vmatpush1.bf16.msra.mxu0 0
    %1020 = vmatprep.subr.bf16.mxu0 0
    %1021 = vmatpush1.bf16.msra.mxu0 0
    %1022 = vmatprep.subr.bf16.mxu0 0
    %1023 = vmatpush1.bf16.msra.mxu0 0
    %1024 = vmatprep.subr.bf16.mxu0 0
    %1025 = vmatpush1.bf16.msra.mxu0 0
    %1026 = vmatprep.subr.bf16.mxu0 0
    %1027 = vmatpush1.bf16.msra.mxu0 0
    %1028 = vmatprep.subr.bf16.mxu0 0
    %1029 = vmatpush1.bf16.msra.mxu0 0
    %1030 = vmatprep.subr.bf16.mxu0 0
    %1031 = vmatpush1.bf16.msra.mxu0 0
    %1032 = vmatprep.subr.bf16.mxu0 0
    %1033 = vmatpush1.bf16.msra.mxu0 0
    %1034 = vmatprep.subr.bf16.mxu0 0
    %1035 = vmatpush1.bf16.msra.mxu0 0
    %1036 = vmatprep.subr.bf16.mxu0 0
    %1037 = vmatpush1.bf16.msra.mxu0 0
    %1038 = vmatprep.subr.bf16.mxu0 0
    %1039 = vmatpush1.bf16.msra.mxu0 0
    %1040 = vmatprep.mubr.bf16.mxu0 0
    %1041 = vmatmul.mubr.bf16.gmra.mrb[0].mxu0 %v1003
    %v1042 = vpop.f32.mrb[0].mxu0
    %v1043 = vadd.f32 0.0, %v1042
    %v1044 = vpop.f32.mrb[0].mxu0
    %v1045 = vpop.f32.mrb[0].mxu0
    %v1046 = vpop.f32.mrb[0].mxu0
    %1047 = vdwg.mxu0
    %1048 = vrot.lane.b32.xlu0 %v530, 64
    %v1049 = vpop.permute.xlu0 %1048
    %v1051 = vsel %vm434, %v945, 0
    %v1054 = vsel %vm956, %v1049, 0
    %1056 = vmatprep.subr.bf16.mxu0 0
    %1057 = vmatpush1.bf16.msra.mxu0 %v1054
    %1058 = vmatprep.subr.bf16.mxu0 0
    %1059 = vmatpush1.bf16.msra.mxu0 0
    %1060 = vmatprep.subr.bf16.mxu0 0
    %1061 = vmatpush1.bf16.msra.mxu0 0
    %1062 = vmatprep.subr.bf16.mxu0 0
    %1063 = vmatpush1.bf16.msra.mxu0 0
    %1064 = vmatprep.subr.bf16.mxu0 0
    %1065 = vmatpush1.bf16.msra.mxu0 0
    %1066 = vmatprep.subr.bf16.mxu0 0
    %1067 = vmatpush1.bf16.msra.mxu0 0
    %1068 = vmatprep.subr.bf16.mxu0 0
    %1069 = vmatpush1.bf16.msra.mxu0 0
    %1070 = vmatprep.subr.bf16.mxu0 0
    %1071 = vmatpush1.bf16.msra.mxu0 0
    %1072 = vmatprep.subr.bf16.mxu0 0
    %1073 = vmatpush1.bf16.msra.mxu0 0
    %1074 = vmatprep.subr.bf16.mxu0 0
    %1075 = vmatpush1.bf16.msra.mxu0 0
    %1076 = vmatprep.subr.bf16.mxu0 0
    %1077 = vmatpush1.bf16.msra.mxu0 0
    %1078 = vmatprep.subr.bf16.mxu0 0
    %1079 = vmatpush1.bf16.msra.mxu0 0
    %1080 = vmatprep.subr.bf16.mxu0 0
    %1081 = vmatpush1.bf16.msra.mxu0 0
    %1082 = vmatprep.subr.bf16.mxu0 0
    %1083 = vmatpush1.bf16.msra.mxu0 0
    %1084 = vmatprep.subr.bf16.mxu0 0
    %1085 = vmatpush1.bf16.msra.mxu0 0
    %1086 = vmatprep.subr.bf16.mxu0 0
    %1087 = vmatpush1.bf16.msra.mxu0 0
    %1088 = vmatprep.mubr.bf16.mxu0 0
    %1089 = vmatmul.mubr.bf16.gmra.mrb[0].mxu0 %v1051
    %v1090 = vpop.f32.mrb[0].mxu0
    %v1091 = vadd.f32 0.0, %v1090
    %v1092 = vpop.f32.mrb[0].mxu0
    %v1093 = vpop.f32.mrb[0].mxu0
    %v1094 = vpop.f32.mrb[0].mxu0
    %1095 = vdwg.mxu0
    %1096 = vrot.lane.b32.xlu0 %v580, 64
    %v1097 = vpop.permute.xlu0 %1096
    %v1099 = vsel %vm434, %v946, 0
    %v1102 = vsel %vm956, %v1097, 0
    %1104 = vmatprep.subr.bf16.mxu0 0
    %1105 = vmatpush1.bf16.msra.mxu0 %v1102
    %1106 = vmatprep.subr.bf16.mxu0 0
    %1107 = vmatpush1.bf16.msra.mxu0 0
    %1108 = vmatprep.subr.bf16.mxu0 0
    %1109 = vmatpush1.bf16.msra.mxu0 0
    %1110 = vmatprep.subr.bf16.mxu0 0
    %1111 = vmatpush1.bf16.msra.mxu0 0
    %1112 = vmatprep.subr.bf16.mxu0 0
    %1113 = vmatpush1.bf16.msra.mxu0 0
    %1114 = vmatprep.subr.bf16.mxu0 0
    %1115 = vmatpush1.bf16.msra.mxu0 0
    %1116 = vmatprep.subr.bf16.mxu0 0
    %1117 = vmatpush1.bf16.msra.mxu0 0
    %1118 = vmatprep.subr.bf16.mxu0 0
    %1119 = vmatpush1.bf16.msra.mxu0 0
    %1120 = vmatprep.subr.bf16.mxu0 0
    %1121 = vmatpush1.bf16.msra.mxu0 0
    %1122 = vmatprep.subr.bf16.mxu0 0
    %1123 = vmatpush1.bf16.msra.mxu0 0
    %1124 = vmatprep.subr.bf16.mxu0 0
    %1125 = vmatpush1.bf16.msra.mxu0 0
    %1126 = vmatprep.subr.bf16.mxu0 0
    %1127 = vmatpush1.bf16.msra.mxu0 0
    %1128 = vmatprep.subr.bf16.mxu0 0
    %1129 = vmatpush1.bf16.msra.mxu0 0
    %1130 = vmatprep.subr.bf16.mxu0 0
    %1131 = vmatpush1.bf16.msra.mxu0 0
    %1132 = vmatprep.subr.bf16.mxu0 0
    %1133 = vmatpush1.bf16.msra.mxu0 0
    %1134 = vmatprep.subr.bf16.mxu0 0
    %1135 = vmatpush1.bf16.msra.mxu0 0
    %1136 = vmatprep.mubr.bf16.mxu0 0
    %1137 = vmatmul.mubr.bf16.gmra.mrb[0].mxu0 %v1099
    %v1138 = vpop.f32.mrb[0].mxu0
    %v1139 = vadd.f32 0.0, %v1138
    %v1140 = vpop.f32.mrb[0].mxu0
    %v1141 = vpop.f32.mrb[0].mxu0
    %v1142 = vpop.f32.mrb[0].mxu0
    %1143 = vdwg.mxu0
    %1144 = vrot.lane.b32.xlu0 %v630, 64
    %v1145 = vpop.permute.xlu0 %1144
    %v1147 = vsel %vm434, %v947, 0
    %v1150 = vsel %vm956, %v1145, 0
    %1152 = vmatprep.subr.bf16.mxu0 0
    %1153 = vmatpush1.bf16.msra.mxu0 %v1150
    %1154 = vmatprep.subr.bf16.mxu0 0
    %1155 = vmatpush1.bf16.msra.mxu0 0
    %1156 = vmatprep.subr.bf16.mxu0 0
    %1157 = vmatpush1.bf16.msra.mxu0 0
    %1158 = vmatprep.subr.bf16.mxu0 0
    %1159 = vmatpush1.bf16.msra.mxu0 0
    %1160 = vmatprep.subr.bf16.mxu0 0
    %1161 = vmatpush1.bf16.msra.mxu0 0
    %1162 = vmatprep.subr.bf16.mxu0 0
    %1163 = vmatpush1.bf16.msra.mxu0 0
    %1164 = vmatprep.subr.bf16.mxu0 0
    %1165 = vmatpush1.bf16.msra.mxu0 0
    %1166 = vmatprep.subr.bf16.mxu0 0
    %1167 = vmatpush1.bf16.msra.mxu0 0
    %1168 = vmatprep.subr.bf16.mxu0 0
    %1169 = vmatpush1.bf16.msra.mxu0 0
    %1170 = vmatprep.subr.bf16.mxu0 0
    %1171 = vmatpush1.bf16.msra.mxu0 0
    %1172 = vmatprep.subr.bf16.mxu0 0
    %1173 = vmatpush1.bf16.msra.mxu0 0
    %1174 = vmatprep.subr.bf16.mxu0 0
    %1175 = vmatpush1.bf16.msra.mxu0 0
    %1176 = vmatprep.subr.bf16.mxu0 0
    %1177 = vmatpush1.bf16.msra.mxu0 0
    %1178 = vmatprep.subr.bf16.mxu0 0
    %1179 = vmatpush1.bf16.msra.mxu0 0
    %1180 = vmatprep.subr.bf16.mxu0 0
    %1181 = vmatpush1.bf16.msra.mxu0 0
    %1182 = vmatprep.subr.bf16.mxu0 0
    %1183 = vmatpush1.bf16.msra.mxu0 0
    %1184 = vmatprep.mubr.bf16.mxu0 0
    %1185 = vmatmul.mubr.bf16.gmra.mrb[0].mxu0 %v1147
    %v1186 = vpop.f32.mrb[0].mxu0
    %v1187 = vadd.f32 0.0, %v1186
    %v1188 = vpop.f32.mrb[0].mxu0
    %v1189 = vpop.f32.mrb[0].mxu0
    %v1190 = vpop.f32.mrb[0].mxu0
    %1191 = vdwg.mxu0
    %1192 = vrot.lane.b32.xlu0 %v680, 64
    %v1193 = vpop.permute.xlu0 %1192
    %v1195 = vsel %vm434, %v948, 0
    %v1198 = vsel %vm956, %v1193, 0
    %1200 = vmatprep.subr.bf16.mxu0 0
    %1201 = vmatpush1.bf16.msra.mxu0 %v1198
    %1202 = vmatprep.subr.bf16.mxu0 0
    %1203 = vmatpush1.bf16.msra.mxu0 0
    %1204 = vmatprep.subr.bf16.mxu0 0
    %1205 = vmatpush1.bf16.msra.mxu0 0
    %1206 = vmatprep.subr.bf16.mxu0 0
    %1207 = vmatpush1.bf16.msra.mxu0 0
    %1208 = vmatprep.subr.bf16.mxu0 0
    %1209 = vmatpush1.bf16.msra.mxu0 0
    %1210 = vmatprep.subr.bf16.mxu0 0
    %1211 = vmatpush1.bf16.msra.mxu0 0
    %1212 = vmatprep.subr.bf16.mxu0 0
    %1213 = vmatpush1.bf16.msra.mxu0 0
    %1214 = vmatprep.subr.bf16.mxu0 0
    %1215 = vmatpush1.bf16.msra.mxu0 0
    %1216 = vmatprep.subr.bf16.mxu0 0
    %1217 = vmatpush1.bf16.msra.mxu0 0
    %1218 = vmatprep.subr.bf16.mxu0 0
    %1219 = vmatpush1.bf16.msra.mxu0 0
    %1220 = vmatprep.subr.bf16.mxu0 0
    %1221 = vmatpush1.bf16.msra.mxu0 0
    %1222 = vmatprep.subr.bf16.mxu0 0
    %1223 = vmatpush1.bf16.msra.mxu0 0
    %1224 = vmatprep.subr.bf16.mxu0 0
    %1225 = vmatpush1.bf16.msra.mxu0 0
    %1226 = vmatprep.subr.bf16.mxu0 0
    %1227 = vmatpush1.bf16.msra.mxu0 0
    %1228 = vmatprep.subr.bf16.mxu0 0
    %1229 = vmatpush1.bf16.msra.mxu0 0
    %1230 = vmatprep.subr.bf16.mxu0 0
    %1231 = vmatpush1.bf16.msra.mxu0 0
    %1232 = vmatprep.mubr.bf16.mxu0 0
    %1233 = vmatmul.mubr.bf16.gmra.mrb[0].mxu0 %v1195
    %v1234 = vpop.f32.mrb[0].mxu0
    %v1235 = vadd.f32 0.0, %v1234
    %v1236 = vpop.f32.mrb[0].mxu0
    %v1237 = vpop.f32.mrb[0].mxu0
    %v1238 = vpop.f32.mrb[0].mxu0
    %1239 = vdwg.mxu0
    %1240 = vrot.lane.b32.xlu0 %v730, 64
    %v1241 = vpop.permute.xlu0 %1240
    %v1243 = vsel %vm434, %v949, 0
    %v1246 = vsel %vm956, %v1241, 0
    %1248 = vmatprep.subr.bf16.mxu0 0
    %1249 = vmatpush1.bf16.msra.mxu0 %v1246
    %1250 = vmatprep.subr.bf16.mxu0 0
    %1251 = vmatpush1.bf16.msra.mxu0 0
    %1252 = vmatprep.subr.bf16.mxu0 0
    %1253 = vmatpush1.bf16.msra.mxu0 0
    %1254 = vmatprep.subr.bf16.mxu0 0
    %1255 = vmatpush1.bf16.msra.mxu0 0
    %1256 = vmatprep.subr.bf16.mxu0 0
    %1257 = vmatpush1.bf16.msra.mxu0 0
    %1258 = vmatprep.subr.bf16.mxu0 0
    %1259 = vmatpush1.bf16.msra.mxu0 0
    %1260 = vmatprep.subr.bf16.mxu0 0
    %1261 = vmatpush1.bf16.msra.mxu0 0
    %1262 = vmatprep.subr.bf16.mxu0 0
    %1263 = vmatpush1.bf16.msra.mxu0 0
    %1264 = vmatprep.subr.bf16.mxu0 0
    %1265 = vmatpush1.bf16.msra.mxu0 0
    %1266 = vmatprep.subr.bf16.mxu0 0
    %1267 = vmatpush1.bf16.msra.mxu0 0
    %1268 = vmatprep.subr.bf16.mxu0 0
    %1269 = vmatpush1.bf16.msra.mxu0 0
    %1270 = vmatprep.subr.bf16.mxu0 0
    %1271 = vmatpush1.bf16.msra.mxu0 0
    %1272 = vmatprep.subr.bf16.mxu0 0
    %1273 = vmatpush1.bf16.msra.mxu0 0
    %1274 = vmatprep.subr.bf16.mxu0 0
    %1275 = vmatpush1.bf16.msra.mxu0 0
    %1276 = vmatprep.subr.bf16.mxu0 0
    %1277 = vmatpush1.bf16.msra.mxu0 0
    %1278 = vmatprep.subr.bf16.mxu0 0
    %1279 = vmatpush1.bf16.msra.mxu0 0
    %1280 = vmatprep.mubr.bf16.mxu0 0
    %1281 = vmatmul.mubr.bf16.gmra.mrb[0].mxu0 %v1243
    %v1282 = vpop.f32.mrb[0].mxu0
    %v1283 = vadd.f32 0.0, %v1282
    %v1284 = vpop.f32.mrb[0].mxu0
    %v1285 = vpop.f32.mrb[0].mxu0
    %v1286 = vpop.f32.mrb[0].mxu0
    %1287 = vdwg.mxu0
    %1288 = vrot.lane.b32.xlu0 %v780, 64
    %v1289 = vpop.permute.xlu0 %1288
    %v1291 = vsel %vm434, %v950, 0
    %v1294 = vsel %vm956, %v1289, 0
    %1296 = vmatprep.subr.bf16.mxu0 0
    %1297 = vmatpush1.bf16.msra.mxu0 %v1294
    %1298 = vmatprep.subr.bf16.mxu0 0
    %1299 = vmatpush1.bf16.msra.mxu0 0
    %1300 = vmatprep.subr.bf16.mxu0 0
    %1301 = vmatpush1.bf16.msra.mxu0 0
    %1302 = vmatprep.subr.bf16.mxu0 0
    %1303 = vmatpush1.bf16.msra.mxu0 0
    %1304 = vmatprep.subr.bf16.mxu0 0
    %1305 = vmatpush1.bf16.msra.mxu0 0
    %1306 = vmatprep.subr.bf16.mxu0 0
    %1307 = vmatpush1.bf16.msra.mxu0 0
    %1308 = vmatprep.subr.bf16.mxu0 0
    %1309 = vmatpush1.bf16.msra.mxu0 0
    %1310 = vmatprep.subr.bf16.mxu0 0
    %1311 = vmatpush1.bf16.msra.mxu0 0
    %1312 = vmatprep.subr.bf16.mxu0 0
    %1313 = vmatpush1.bf16.msra.mxu0 0
    %1314 = vmatprep.subr.bf16.mxu0 0
    %1315 = vmatpush1.bf16.msra.mxu0 0
    %1316 = vmatprep.subr.bf16.mxu0 0
    %1317 = vmatpush1.bf16.msra.mxu0 0
    %1318 = vmatprep.subr.bf16.mxu0 0
    %1319 = vmatpush1.bf16.msra.mxu0 0
    %1320 = vmatprep.subr.bf16.mxu0 0
    %1321 = vmatpush1.bf16.msra.mxu0 0
    %1322 = vmatprep.subr.bf16.mxu0 0
    %1323 = vmatpush1.bf16.msra.mxu0 0
    %1324 = vmatprep.subr.bf16.mxu0 0
    %1325 = vmatpush1.bf16.msra.mxu0 0
    %1326 = vmatprep.subr.bf16.mxu0 0
    %1327 = vmatpush1.bf16.msra.mxu0 0
    %1328 = vmatprep.mubr.bf16.mxu0 0
    %1329 = vmatmul.mubr.bf16.gmra.mrb[0].mxu0 %v1291
    %v1330 = vpop.f32.mrb[0].mxu0
    %v1331 = vadd.f32 0.0, %v1330
    %v1332 = vpop.f32.mrb[0].mxu0
    %v1333 = vpop.f32.mrb[0].mxu0
    %v1334 = vpop.f32.mrb[0].mxu0
    %1335 = vdwg.mxu0
    %1338 = vrot.lane.b32.xlu0 %v1091, 8
    %v1339 = vpop.permute.xlu0 %1338
    %1340 = vrot.lane.b32.xlu0 %v1139, 8
    %v1341 = vpop.permute.xlu0 %1340
    %1346 = vrot.lane.b32.xlu0 %v1187, 16
    %v1347 = vpop.permute.xlu0 %1346
    %1348 = vrot.lane.b32.xlu0 %v1235, 16
    %v1349 = vpop.permute.xlu0 %1348
    %1354 = vrot.lane.b32.xlu0 %v1283, 24
    %v1355 = vpop.permute.xlu0 %1354
    %1356 = vrot.lane.b32.xlu0 %v1331, 24
    %v1357 = vpop.permute.xlu0 %1356
    %v1360 = vsel %vm434, %v995, %v1339
    %v1361 = vsel %vm434, %v1043, %v1341
    %vm1362 = vcmask 130048
    %v1363 = vsel %vm1362, %v1360, %v1347
    %v1364 = vsel %vm1362, %v1361, %v1349
    %vm1365 = vcmask 195584
    %v1366 = vsel %vm1365, %v1363, %v1355
    %v1367 = vsel %vm1365, %v1364, %v1357
    %v1368 = vpack.c.bf16 %v1367, %v1366
    %v1369 = vld [vmem:[#allocation17] sm:$0xf]
    %v1370 = vld [vmem:[#allocation17 + $0x4] sm:$0xf]
    %v1371 = vld [vmem:[#allocation17 + $0x8] sm:$0xf]
    %v1372 = vld [vmem:[#allocation17 + $0xc] sm:$0xf]
    %v1373 = vld [vmem:[#allocation19] sm:$0x1]
    %v1375 = vlaneseq
    %v1376 = vshrl.u32 %v1375, 7
    %v1377 = vsub.s32 0, %v1376
    %v1378 = vrot.slane %v1373, %v1377
    %v1384 = vunpack.c.l.b16 %v1369
    %v1385 = vunpack.c.l.b16 %v1370
    %v1386 = vunpack.c.l.b16 %v1371
    %v1387 = vunpack.c.l.b16 %v1372
    %v1388 = vpack.c.b16 %v1385, %v1384
    %v1389 = vpack.c.b16 %v1387, %v1386
    %v1393 = vsel %vm282, %v1368, 0
    %1395 = vmatprep.subr.bf16.mxu0 0
    %1396 = vmatpush1.bf16.msra.mxu0 %v1388
    %1397 = vmatprep.subr.bf16.mxu0 0
    %1398 = vmatpush1.bf16.msra.mxu0 %v1389
    %1399 = vmatprep.subr.bf16.mxu0 0
    %1400 = vmatpush1.bf16.msra.mxu0 0
    %1401 = vmatprep.subr.bf16.mxu0 0
    %1402 = vmatpush1.bf16.msra.mxu0 0
    %1403 = vmatprep.subr.bf16.mxu0 0
    %1404 = vmatpush1.bf16.msra.mxu0 0
    %1405 = vmatprep.subr.bf16.mxu0 0
    %1406 = vmatpush1.bf16.msra.mxu0 0
    %1407 = vmatprep.subr.bf16.mxu0 0
    %1408 = vmatpush1.bf16.msra.mxu0 0
    %1409 = vmatprep.subr.bf16.mxu0 0
    %1410 = vmatpush1.bf16.msra.mxu0 0
    %1411 = vmatprep.subr.bf16.mxu0 0
    %1412 = vmatpush1.bf16.msra.mxu0 0
    %1413 = vmatprep.subr.bf16.mxu0 0
    %1414 = vmatpush1.bf16.msra.mxu0 0
    %1415 = vmatprep.subr.bf16.mxu0 0
    %1416 = vmatpush1.bf16.msra.mxu0 0
    %1417 = vmatprep.subr.bf16.mxu0 0
    %1418 = vmatpush1.bf16.msra.mxu0 0
    %1419 = vmatprep.subr.bf16.mxu0 0
    %1420 = vmatpush1.bf16.msra.mxu0 0
    %1421 = vmatprep.subr.bf16.mxu0 0
    %1422 = vmatpush1.bf16.msra.mxu0 0
    %1423 = vmatprep.subr.bf16.mxu0 0
    %1424 = vmatpush1.bf16.msra.mxu0 0
    %1425 = vmatprep.subr.bf16.mxu0 0
    %1426 = vmatpush1.bf16.msra.mxu0 0
    %1427 = vmatprep.mubr.bf16.mxu0 0
    %1428 = vmatmul.mubr.bf16.gmra.mrb[0].mxu0 %v1393
    %v1429 = vpop.f32.mrb[0].mxu0
    %v1430 = vadd.f32 %v1378, %v1429
    %v1431 = vpop.f32.mrb[0].mxu0
    %v1432 = vpop.f32.mrb[0].mxu0
    %v1433 = vadd.f32 %v1378, %v1432
    %v1434 = vpop.f32.mrb[0].mxu0
    %1435 = vdwg.mxu0
    %v1436 = vadd.f32 %v264, %v1430
    %v1437 = vadd.f32 %v265, %v1433
    %v1438 = vld [vmem:[#allocation10] sm:$0x1]
    %v1439 = vld [vmem:[#allocation11] sm:$0x1]
    %v1440 = vsel %vm282, %v1436, 0.0
    %1441 = vadd.xlane.f32.xlu0 %v1440
    %v1442 = vpop.xlane.xlu0 %1441
    %v1443 = vsel %vm282, %v1437, 0.0
    %1444 = vadd.xlane.f32.xlu0 %v1443
    %v1445 = vpop.xlane.xlu0 %1444
    %v1446 = vmul.f32 %v1442, %v289
    %v1447 = vmul.f32 %v1445, %v289
    %v1448 = vsub.f32 %v1436, %v1446
    %v1449 = vsub.f32 %v1437, %v1447
    %v1450 = vmul.f32 %v1448, %v1448
    %v1451 = vmul.f32 %v1449, %v1449
    %v1452 = vsel %vm282, %v1450, 0.0
    %1453 = vadd.xlane.f32.xlu0 %v1452
    %v1454 = vpop.xlane.xlu0 %1453
    %v1455 = vsel %vm282, %v1451, 0.0
    %1456 = vadd.xlane.f32.xlu0 %v1455
    %v1457 = vpop.xlane.xlu0 %1456
    %v1458 = vmul.f32 %v1454, %v289
    %v1459 = vmul.f32 %v1457, %v289
    %v1460 = vadd.f32 %v1458, 1e-12
    %v1461 = vadd.f32 %v1459, 1e-12
    %v1462 = vrsqrt.pop %v1460
    %v1463 = vrsqrt.pop %v1461
    %v1464 = vmul.f32 %v1448, %v1462
    %v1465 = vmul.f32 %v1449, %v1463
    %v1467 = vlaneseq
    %v1468 = vshrl.u32 %v1467, 7
    %v1469 = vsub.s32 0, %v1468
    %v1470 = vrot.slane %v1438, %v1469
    %v1472 = vmul.f32 %v1464, %v1470
    %v1473 = vmul.f32 %v1465, %v1470
    %v1475 = vlaneseq
    %v1476 = vshrl.u32 %v1475, 7
    %v1477 = vsub.s32 0, %v1476
    %v1478 = vrot.slane %v1439, %v1477
    %v1480 = vadd.f32 %v1472, %v1478
    %v1481 = vadd.f32 %v1473, %v1478
    %v1482 = vpack.c.bf16 %v1481, %v1480
    %v1483 = vld [vmem:[%s14] sm:$0xf]
    %v1484 = vld [vmem:[%s14 + $0x4] sm:$0xf]
    %v1485 = vld [vmem:[%s14 + $0x8] sm:$0xf]
    %v1486 = vld [vmem:[%s14 + $0xc] sm:$0xf]
    %v1487 = vld [vmem:[#allocation20] sm:$0x1]
    %v1489 = vlaneseq
    %v1490 = vshrl.u32 %v1489, 7
    %v1491 = vsub.s32 0, %v1490
    %v1492 = vrot.slane %v1487, %v1491
    %v1498 = vunpack.c.l.b16 %v1483
    %v1499 = vunpack.c.l.b16 %v1484
    %v1500 = vunpack.c.l.b16 %v1485
    %v1501 = vunpack.c.l.b16 %v1486
    %v1502 = vpack.c.b16 %v1499, %v1498
    %v1503 = vpack.c.b16 %v1501, %v1500
    %v1507 = vsel %vm282, %v1482, 0
    %1509 = vmatprep.subr.bf16.mxu0 0
    %1510 = vmatpush1.bf16.msra.mxu0 %v1502
    %1511 = vmatprep.subr.bf16.mxu0 0
    %1512 = vmatpush1.bf16.msra.mxu0 %v1503
    %1513 = vmatprep.subr.bf16.mxu0 0
    %1514 = vmatpush1.bf16.msra.mxu0 0
    %1515 = vmatprep.subr.bf16.mxu0 0
    %1516 = vmatpush1.bf16.msra.mxu0 0
    %1517 = vmatprep.subr.bf16.mxu0 0
    %1518 = vmatpush1.bf16.msra.mxu0 0
    %1519 = vmatprep.subr.bf16.mxu0 0
    %1520 = vmatpush1.bf16.msra.mxu0 0
    %1521 = vmatprep.subr.bf16.mxu0 0
    %1522 = vmatpush1.bf16.msra.mxu0 0
    %1523 = vmatprep.subr.bf16.mxu0 0
    %1524 = vmatpush1.bf16.msra.mxu0 0
    %1525 = vmatprep.subr.bf16.mxu0 0
    %1526 = vmatpush1.bf16.msra.mxu0 0
    %1527 = vmatprep.subr.bf16.mxu0 0
    %1528 = vmatpush1.bf16.msra.mxu0 0
    %1529 = vmatprep.subr.bf16.mxu0 0
    %1530 = vmatpush1.bf16.msra.mxu0 0
    %1531 = vmatprep.subr.bf16.mxu0 0
    %1532 = vmatpush1.bf16.msra.mxu0 0
    %1533 = vmatprep.subr.bf16.mxu0 0
    %1534 = vmatpush1.bf16.msra.mxu0 0
    %1535 = vmatprep.subr.bf16.mxu0 0
    %1536 = vmatpush1.bf16.msra.mxu0 0
    %1537 = vmatprep.subr.bf16.mxu0 0
    %1538 = vmatpush1.bf16.msra.mxu0 0
    %1539 = vmatprep.subr.bf16.mxu0 0
    %1540 = vmatpush1.bf16.msra.mxu0 0
    %1541 = vmatprep.mubr.bf16.mxu0 0
    %1542 = vmatmul.mubr.bf16.gmra.mrb[0].mxu0 %v1507
    %v1543 = vpop.f32.mrb[0].mxu0
    %v1544 = vadd.f32 %v1492, %v1543
    %v1545 = vpop.f32.mrb[0].mxu0
    %v1546 = vpop.f32.mrb[0].mxu0
    %v1547 = vadd.f32 %v1492, %v1546
    %v1548 = vpop.f32.mrb[0].mxu0
    %1549 = vdwg.mxu0
    %v1550 = vld [vmem:[#allocation22] sm:$0xf]
    %v1551 = vld [vmem:[#allocation22 + $0x4] sm:$0xf]
    %v1552 = vld [vmem:[#allocation22 + $0x8] sm:$0xf]
    %v1553 = vld [vmem:[#allocation22 + $0xc] sm:$0xf]
    %v1554 = vld [vmem:[#allocation23] sm:$0x1]
    %v1556 = vlaneseq
    %v1557 = vshrl.u32 %v1556, 7
    %v1558 = vsub.s32 0, %v1557
    %v1559 = vrot.slane %v1554, %v1558
    %v1565 = vunpack.c.l.b16 %v1550
    %v1566 = vunpack.c.l.b16 %v1551
    %v1567 = vunpack.c.l.b16 %v1552
    %v1568 = vunpack.c.l.b16 %v1553
    %v1569 = vpack.c.b16 %v1566, %v1565
    %v1570 = vpack.c.b16 %v1568, %v1567
    %v1574 = vsel %vm282, %v270, 0
    %v1577 = vsel %vm282, %v271, 0
    %1579 = vmatprep.subr.bf16.mxu0 0
    %1580 = vmatpush1.bf16.msra.mxu0 %v1569
    %1581 = vmatprep.subr.bf16.mxu0 0
    %1582 = vmatpush1.bf16.msra.mxu0 %v1570
    %1583 = vmatprep.subr.bf16.mxu0 0
    %1584 = vmatpush1.bf16.msra.mxu0 0
    %1585 = vmatprep.subr.bf16.mxu0 0
    %1586 = vmatpush1.bf16.msra.mxu0 0
    %1587 = vmatprep.subr.bf16.mxu0 0
    %1588 = vmatpush1.bf16.msra.mxu0 0
    %1589 = vmatprep.subr.bf16.mxu0 0
    %1590 = vmatpush1.bf16.msra.mxu0 0
    %1591 = vmatprep.subr.bf16.mxu0 0
    %1592 = vmatpush1.bf16.msra.mxu0 0
    %1593 = vmatprep.subr.bf16.mxu0 0
    %1594 = vmatpush1.bf16.msra.mxu0 0
    %1595 = vmatprep.subr.bf16.mxu0 0
    %1596 = vmatpush1.bf16.msra.mxu0 0
    %1597 = vmatprep.subr.bf16.mxu0 0
    %1598 = vmatpush1.bf16.msra.mxu0 0
    %1599 = vmatprep.subr.bf16.mxu0 0
    %1600 = vmatpush1.bf16.msra.mxu0 0
    %1601 = vmatprep.subr.bf16.mxu0 0
    %1602 = vmatpush1.bf16.msra.mxu0 0
    %1603 = vmatprep.subr.bf16.mxu0 0
    %1604 = vmatpush1.bf16.msra.mxu0 0
    %1605 = vmatprep.subr.bf16.mxu0 0
    %1606 = vmatpush1.bf16.msra.mxu0 0
    %1607 = vmatprep.subr.bf16.mxu0 0
    %1608 = vmatpush1.bf16.msra.mxu0 0
    %1609 = vmatprep.subr.bf16.mxu0 0
    %1610 = vmatpush1.bf16.msra.mxu0 0
    %1611 = vmatprep.mubr.bf16.mxu0 0
    %1612 = vmatmul.mubr.bf16.gmra.mrb[0].mxu0 %v1574
    %v1613 = vpop.f32.mrb[0].mxu0
    %v1614 = vadd.f32 %v1559, %v1613
    %v1615 = vpop.f32.mrb[0].mxu0
    %v1616 = vpop.f32.mrb[0].mxu0
    %v1617 = vadd.f32 %v1559, %v1616
    %v1618 = vpop.f32.mrb[0].mxu0
    %1619 = vmatprep.mubr.bf16.mxu0 0
    %1620 = vmatmul.mubr.bf16.gmra.mrb[0].mxu0 %v1577
    %v1621 = vpop.f32.mrb[0].mxu0
    %v1622 = vadd.f32 %v1559, %v1621
    %v1623 = vpop.f32.mrb[0].mxu0
    %v1624 = vpop.f32.mrb[0].mxu0
    %v1625 = vadd.f32 %v1559, %v1624
    %v1626 = vpop.f32.mrb[0].mxu0
    %1627 = vdwg.mxu0
    %v1628 = vmul.f32 %v1544, 0.35355338
    %v1629 = vmul.f32 %v1547, 0.35355338
    %v1630 = vpack.c.bf16 %v1629, %v1628
    %v1631 = vpack.c.bf16 %v1617, %v1614
    %v1632 = vpack.c.bf16 %v1625, %v1622
    %v1634 = vunpack.c.l.b16 %v1630
    %v1635 = vunpack.c.h.b16 %v1630
    %v1636 = vpack.c.b16 %v1634, %v1634
    %v1637 = vpack.c.b16 %v1635, %v1635
    %1638 = vrot.lane.b32.xlu0 %v1636, 120
    %v1639 = vpop.permute.xlu0 %1638
    %1640 = vrot.lane.b32.xlu0 %v1637, 120
    %v1641 = vpop.permute.xlu0 %1640
    %1642 = vrot.lane.b32.xlu0 %v1636, 112
    %v1643 = vpop.permute.xlu0 %1642
    %1644 = vrot.lane.b32.xlu0 %v1637, 112
    %v1645 = vpop.permute.xlu0 %1644
    %1646 = vrot.lane.b32.xlu0 %v1636, 104
    %v1647 = vpop.permute.xlu0 %1646
    %1648 = vrot.lane.b32.xlu0 %v1637, 104
    %v1649 = vpop.permute.xlu0 %1648
    %1652 = vrot.lane.b32.xlu0 %v1631, 120
    %v1653 = vpop.permute.xlu0 %1652
    %1654 = vrot.lane.b32.xlu0 %v1632, 120
    %v1655 = vpop.permute.xlu0 %1654
    %1656 = vrot.lane.b32.xlu0 %v1631, 112
    %v1657 = vpop.permute.xlu0 %1656
    %1658 = vrot.lane.b32.xlu0 %v1632, 112
    %v1659 = vpop.permute.xlu0 %1658
    %1660 = vrot.lane.b32.xlu0 %v1631, 104
    %v1661 = vpop.permute.xlu0 %1660
    %1662 = vrot.lane.b32.xlu0 %v1632, 104
    %v1663 = vpop.permute.xlu0 %1662
    %v1665 = vsel %vm434, %v1636, 0
    %v1668 = vsel %vm434, %v1631, 0
    %1670 = vmatprep.subr.bf16.mxu0 0
    %1671 = vmatpush1.bf16.xpose.msra.mxu0 %v1668
    %1672 = vmatprep.subr.bf16.mxu0 0
    %1673 = vmatpush1.bf16.xpose.msra.mxu0 0
    %1674 = vmatprep.subr.bf16.mxu0 0
    %1675 = vmatpush1.bf16.xpose.msra.mxu0 0
    %1676 = vmatprep.subr.bf16.mxu0 0
    %1677 = vmatpush1.bf16.xpose.msra.mxu0 0
    %1678 = vmatprep.subr.bf16.mxu0 0
    %1679 = vmatpush1.bf16.xpose.msra.mxu0 0
    %1680 = vmatprep.subr.bf16.mxu0 0
    %1681 = vmatpush1.bf16.xpose.msra.mxu0 0
    %1682 = vmatprep.subr.bf16.mxu0 0
    %1683 = vmatpush1.bf16.xpose.msra.mxu0 0
    %1684 = vmatprep.subr.bf16.mxu0 0
    %1685 = vmatpush1.bf16.xpose.msra.mxu0 0
    %1686 = vmatprep.subr.bf16.mxu0 0
    %1687 = vmatpush1.bf16.xpose.msra.mxu0 0
    %1688 = vmatprep.subr.bf16.mxu0 0
    %1689 = vmatpush1.bf16.xpose.msra.mxu0 0
    %1690 = vmatprep.subr.bf16.mxu0 0
    %1691 = vmatpush1.bf16.xpose.msra.mxu0 0
    %1692 = vmatprep.subr.bf16.mxu0 0
    %1693 = vmatpush1.bf16.xpose.msra.mxu0 0
    %1694 = vmatprep.subr.bf16.mxu0 0
    %1695 = vmatpush1.bf16.xpose.msra.mxu0 0
    %1696 = vmatprep.subr.bf16.mxu0 0
    %1697 = vmatpush1.bf16.xpose.msra.mxu0 0
    %1698 = vmatprep.subr.bf16.mxu0 0
    %1699 = vmatpush1.bf16.xpose.msra.mxu0 0
    %1700 = vmatprep.subr.bf16.mxu0 0
    %1701 = vmatpush1.bf16.xpose.msra.mxu0 0
    %1702 = vmatprep.mubr.bf16.mxu0 0
    %1703 = vmatmul.mubr.bf16.gmra.mrb[0].mxu0 %v1665
    %v1704 = vpop.f32.mrb[0].mxu0
    %v1705 = vadd.f32 0.0, %v1704
    %v1706 = vpop.f32.mrb[0].mxu0
    %v1707 = vpop.f32.mrb[0].mxu0
    %v1708 = vpop.f32.mrb[0].mxu0
    %1709 = vdwg.mxu0
    %v1711 = vsel %vm434, %v1637, 0
    %v1714 = vsel %vm434, %v1632, 0
    %1716 = vmatprep.subr.bf16.mxu0 0
    %1717 = vmatpush1.bf16.xpose.msra.mxu0 %v1714
    %1718 = vmatprep.subr.bf16.mxu0 0
    %1719 = vmatpush1.bf16.xpose.msra.mxu0 0
    %1720 = vmatprep.subr.bf16.mxu0 0
    %1721 = vmatpush1.bf16.xpose.msra.mxu0 0
    %1722 = vmatprep.subr.bf16.mxu0 0
    %1723 = vmatpush1.bf16.xpose.msra.mxu0 0
    %1724 = vmatprep.subr.bf16.mxu0 0
    %1725 = vmatpush1.bf16.xpose.msra.mxu0 0
    %1726 = vmatprep.subr.bf16.mxu0 0
    %1727 = vmatpush1.bf16.xpose.msra.mxu0 0
    %1728 = vmatprep.subr.bf16.mxu0 0
    %1729 = vmatpush1.bf16.xpose.msra.mxu0 0
    %1730 = vmatprep.subr.bf16.mxu0 0
    %1731 = vmatpush1.bf16.xpose.msra.mxu0 0
    %1732 = vmatprep.subr.bf16.mxu0 0
    %1733 = vmatpush1.bf16.xpose.msra.mxu0 0
    %1734 = vmatprep.subr.bf16.mxu0 0
    %1735 = vmatpush1.bf16.xpose.msra.mxu0 0
    %1736 = vmatprep.subr.bf16.mxu0 0
    %1737 = vmatpush1.bf16.xpose.msra.mxu0 0
    %1738 = vmatprep.subr.bf16.mxu0 0
    %1739 = vmatpush1.bf16.xpose.msra.mxu0 0
    %1740 = vmatprep.subr.bf16.mxu0 0
    %1741 = vmatpush1.bf16.xpose.msra.mxu0 0
    %1742 = vmatprep.subr.bf16.mxu0 0
    %1743 = vmatpush1.bf16.xpose.msra.mxu0 0
    %1744 = vmatprep.subr.bf16.mxu0 0
    %1745 = vmatpush1.bf16.xpose.msra.mxu0 0
    %1746 = vmatprep.subr.bf16.mxu0 0
    %1747 = vmatpush1.bf16.xpose.msra.mxu0 0
    %1748 = vmatprep.mubr.bf16.mxu0 0
    %1749 = vmatmul.mubr.bf16.gmra.mrb[0].mxu0 %v1711
    %v1750 = vpop.f32.mrb[0].mxu0
    %v1751 = vadd.f32 0.0, %v1750
    %v1752 = vpop.f32.mrb[0].mxu0
    %v1753 = vpop.f32.mrb[0].mxu0
    %v1754 = vpop.f32.mrb[0].mxu0
    %1755 = vdwg.mxu0
    %v1757 = vsel %vm434, %v1639, 0
    %v1760 = vsel %vm434, %v1653, 0
    %1762 = vmatprep.subr.bf16.mxu0 0
    %1763 = vmatpush1.bf16.xpose.msra.mxu0 %v1760
    %1764 = vmatprep.subr.bf16.mxu0 0
    %1765 = vmatpush1.bf16.xpose.msra.mxu0 0
    %1766 = vmatprep.subr.bf16.mxu0 0
    %1767 = vmatpush1.bf16.xpose.msra.mxu0 0
    %1768 = vmatprep.subr.bf16.mxu0 0
    %1769 = vmatpush1.bf16.xpose.msra.mxu0 0
    %1770 = vmatprep.subr.bf16.mxu0 0
    %1771 = vmatpush1.bf16.xpose.msra.mxu0 0
    %1772 = vmatprep.subr.bf16.mxu0 0
    %1773 = vmatpush1.bf16.xpose.msra.mxu0 0
    %1774 = vmatprep.subr.bf16.mxu0 0
    %1775 = vmatpush1.bf16.xpose.msra.mxu0 0
    %1776 = vmatprep.subr.bf16.mxu0 0
    %1777 = vmatpush1.bf16.xpose.msra.mxu0 0
    %1778 = vmatprep.subr.bf16.mxu0 0
    %1779 = vmatpush1.bf16.xpose.msra.mxu0 0
    %1780 = vmatprep.subr.bf16.mxu0 0
    %1781 = vmatpush1.bf16.xpose.msra.mxu0 0
    %1782 = vmatprep.subr.bf16.mxu0 0
    %1783 = vmatpush1.bf16.xpose.msra.mxu0 0
    %1784 = vmatprep.subr.bf16.mxu0 0
    %1785 = vmatpush1.bf16.xpose.msra.mxu0 0
    %1786 = vmatprep.subr.bf16.mxu0 0
    %1787 = vmatpush1.bf16.xpose.msra.mxu0 0
    %1788 = vmatprep.subr.bf16.mxu0 0
    %1789 = vmatpush1.bf16.xpose.msra.mxu0 0
    %1790 = vmatprep.subr.bf16.mxu0 0
    %1791 = vmatpush1.bf16.xpose.msra.mxu0 0
    %1792 = vmatprep.subr.bf16.mxu0 0
    %1793 = vmatpush1.bf16.xpose.msra.mxu0 0
    %1794 = vmatprep.mubr.bf16.mxu0 0
    %1795 = vmatmul.mubr.bf16.gmra.mrb[0].mxu0 %v1757
    %v1796 = vpop.f32.mrb[0].mxu0
    %v1797 = vadd.f32 0.0, %v1796
    %v1798 = vpop.f32.mrb[0].mxu0
    %v1799 = vpop.f32.mrb[0].mxu0
    %v1800 = vpop.f32.mrb[0].mxu0
    %1801 = vdwg.mxu0
    %v1803 = vsel %vm434, %v1641, 0
    %v1806 = vsel %vm434, %v1655, 0
    %1808 = vmatprep.subr.bf16.mxu0 0
    %1809 = vmatpush1.bf16.xpose.msra.mxu0 %v1806
    %1810 = vmatprep.subr.bf16.mxu0 0
    %1811 = vmatpush1.bf16.xpose.msra.mxu0 0
    %1812 = vmatprep.subr.bf16.mxu0 0
    %1813 = vmatpush1.bf16.xpose.msra.mxu0 0
    %1814 = vmatprep.subr.bf16.mxu0 0
    %1815 = vmatpush1.bf16.xpose.msra.mxu0 0
    %1816 = vmatprep.subr.bf16.mxu0 0
    %1817 = vmatpush1.bf16.xpose.msra.mxu0 0
    %1818 = vmatprep.subr.bf16.mxu0 0
    %1819 = vmatpush1.bf16.xpose.msra.mxu0 0
    %1820 = vmatprep.subr.bf16.mxu0 0
    %1821 = vmatpush1.bf16.xpose.msra.mxu0 0
    %1822 = vmatprep.subr.bf16.mxu0 0
    %1823 = vmatpush1.bf16.xpose.msra.mxu0 0
    %1824 = vmatprep.subr.bf16.mxu0 0
    %1825 = vmatpush1.bf16.xpose.msra.mxu0 0
    %1826 = vmatprep.subr.bf16.mxu0 0
    %1827 = vmatpush1.bf16.xpose.msra.mxu0 0
    %1828 = vmatprep.subr.bf16.mxu0 0
    %1829 = vmatpush1.bf16.xpose.msra.mxu0 0
    %1830 = vmatprep.subr.bf16.mxu0 0
    %1831 = vmatpush1.bf16.xpose.msra.mxu0 0
    %1832 = vmatprep.subr.bf16.mxu0 0
    %1833 = vmatpush1.bf16.xpose.msra.mxu0 0
    %1834 = vmatprep.subr.bf16.mxu0 0
    %1835 = vmatpush1.bf16.xpose.msra.mxu0 0
    %1836 = vmatprep.subr.bf16.mxu0 0
    %1837 = vmatpush1.bf16.xpose.msra.mxu0 0
    %1838 = vmatprep.subr.bf16.mxu0 0
    %1839 = vmatpush1.bf16.xpose.msra.mxu0 0
    %1840 = vmatprep.mubr.bf16.mxu0 0
    %1841 = vmatmul.mubr.bf16.gmra.mrb[0].mxu0 %v1803
    %v1842 = vpop.f32.mrb[0].mxu0
    %v1843 = vadd.f32 0.0, %v1842
    %v1844 = vpop.f32.mrb[0].mxu0
    %v1845 = vpop.f32.mrb[0].mxu0
    %v1846 = vpop.f32.mrb[0].mxu0
    %1847 = vdwg.mxu0
    %v1849 = vsel %vm434, %v1643, 0
    %v1852 = vsel %vm434, %v1657, 0
    %1854 = vmatprep.subr.bf16.mxu0 0
    %1855 = vmatpush1.bf16.xpose.msra.mxu0 %v1852
    %1856 = vmatprep.subr.bf16.mxu0 0
    %1857 = vmatpush1.bf16.xpose.msra.mxu0 0
    %1858 = vmatprep.subr.bf16.mxu0 0
    %1859 = vmatpush1.bf16.xpose.msra.mxu0 0
    %1860 = vmatprep.subr.bf16.mxu0 0
    %1861 = vmatpush1.bf16.xpose.msra.mxu0 0
    %1862 = vmatprep.subr.bf16.mxu0 0
    %1863 = vmatpush1.bf16.xpose.msra.mxu0 0
    %1864 = vmatprep.subr.bf16.mxu0 0
    %1865 = vmatpush1.bf16.xpose.msra.mxu0 0
    %1866 = vmatprep.subr.bf16.mxu0 0
    %1867 = vmatpush1.bf16.xpose.msra.mxu0 0
    %1868 = vmatprep.subr.bf16.mxu0 0
    %1869 = vmatpush1.bf16.xpose.msra.mxu0 0
    %1870 = vmatprep.subr.bf16.mxu0 0
    %1871 = vmatpush1.bf16.xpose.msra.mxu0 0
    %1872 = vmatprep.subr.bf16.mxu0 0
    %1873 = vmatpush1.bf16.xpose.msra.mxu0 0
    %1874 = vmatprep.subr.bf16.mxu0 0
    %1875 = vmatpush1.bf16.xpose.msra.mxu0 0
    %1876 = vmatprep.subr.bf16.mxu0 0
    %1877 = vmatpush1.bf16.xpose.msra.mxu0 0
    %1878 = vmatprep.subr.bf16.mxu0 0
    %1879 = vmatpush1.bf16.xpose.msra.mxu0 0
    %1880 = vmatprep.subr.bf16.mxu0 0
    %1881 = vmatpush1.bf16.xpose.msra.mxu0 0
    %1882 = vmatprep.subr.bf16.mxu0 0
    %1883 = vmatpush1.bf16.xpose.msra.mxu0 0
    %1884 = vmatprep.subr.bf16.mxu0 0
    %1885 = vmatpush1.bf16.xpose.msra.mxu0 0
    %1886 = vmatprep.mubr.bf16.mxu0 0
    %1887 = vmatmul.mubr.bf16.gmra.mrb[0].mxu0 %v1849
    %v1888 = vpop.f32.mrb[0].mxu0
    %v1889 = vadd.f32 0.0, %v1888
    %v1890 = vpop.f32.mrb[0].mxu0
    %v1891 = vpop.f32.mrb[0].mxu0
    %v1892 = vpop.f32.mrb[0].mxu0
    %1893 = vdwg.mxu0
    %v1895 = vsel %vm434, %v1645, 0
    %v1898 = vsel %vm434, %v1659, 0
    %1900 = vmatprep.subr.bf16.mxu0 0
    %1901 = vmatpush1.bf16.xpose.msra.mxu0 %v1898
    %1902 = vmatprep.subr.bf16.mxu0 0
    %1903 = vmatpush1.bf16.xpose.msra.mxu0 0
    %1904 = vmatprep.subr.bf16.mxu0 0
    %1905 = vmatpush1.bf16.xpose.msra.mxu0 0
    %1906 = vmatprep.subr.bf16.mxu0 0
    %1907 = vmatpush1.bf16.xpose.msra.mxu0 0
    %1908 = vmatprep.subr.bf16.mxu0 0
    %1909 = vmatpush1.bf16.xpose.msra.mxu0 0
    %1910 = vmatprep.subr.bf16.mxu0 0
    %1911 = vmatpush1.bf16.xpose.msra.mxu0 0
    %1912 = vmatprep.subr.bf16.mxu0 0
    %1913 = vmatpush1.bf16.xpose.msra.mxu0 0
    %1914 = vmatprep.subr.bf16.mxu0 0
    %1915 = vmatpush1.bf16.xpose.msra.mxu0 0
    %1916 = vmatprep.subr.bf16.mxu0 0
    %1917 = vmatpush1.bf16.xpose.msra.mxu0 0
    %1918 = vmatprep.subr.bf16.mxu0 0
    %1919 = vmatpush1.bf16.xpose.msra.mxu0 0
    %1920 = vmatprep.subr.bf16.mxu0 0
    %1921 = vmatpush1.bf16.xpose.msra.mxu0 0
    %1922 = vmatprep.subr.bf16.mxu0 0
    %1923 = vmatpush1.bf16.xpose.msra.mxu0 0
    %1924 = vmatprep.subr.bf16.mxu0 0
    %1925 = vmatpush1.bf16.xpose.msra.mxu0 0
    %1926 = vmatprep.subr.bf16.mxu0 0
    %1927 = vmatpush1.bf16.xpose.msra.mxu0 0
    %1928 = vmatprep.subr.bf16.mxu0 0
    %1929 = vmatpush1.bf16.xpose.msra.mxu0 0
    %1930 = vmatprep.subr.bf16.mxu0 0
    %1931 = vmatpush1.bf16.xpose.msra.mxu0 0
    %1932 = vmatprep.mubr.bf16.mxu0 0
    %1933 = vmatmul.mubr.bf16.gmra.mrb[0].mxu0 %v1895
    %v1934 = vpop.f32.mrb[0].mxu0
    %v1935 = vadd.f32 0.0, %v1934
    %v1936 = vpop.f32.mrb[0].mxu0
    %v1937 = vpop.f32.mrb[0].mxu0
    %v1938 = vpop.f32.mrb[0].mxu0
    %1939 = vdwg.mxu0
    %v1941 = vsel %vm434, %v1647, 0
    %v1944 = vsel %vm434, %v1661, 0
    %1946 = vmatprep.subr.bf16.mxu0 0
    %1947 = vmatpush1.bf16.xpose.msra.mxu0 %v1944
    %1948 = vmatprep.subr.bf16.mxu0 0
    %1949 = vmatpush1.bf16.xpose.msra.mxu0 0
    %1950 = vmatprep.subr.bf16.mxu0 0
    %1951 = vmatpush1.bf16.xpose.msra.mxu0 0
    %1952 = vmatprep.subr.bf16.mxu0 0
    %1953 = vmatpush1.bf16.xpose.msra.mxu0 0
    %1954 = vmatprep.subr.bf16.mxu0 0
    %1955 = vmatpush1.bf16.xpose.msra.mxu0 0
    %1956 = vmatprep.subr.bf16.mxu0 0
    %1957 = vmatpush1.bf16.xpose.msra.mxu0 0
    %1958 = vmatprep.subr.bf16.mxu0 0
    %1959 = vmatpush1.bf16.xpose.msra.mxu0 0
    %1960 = vmatprep.subr.bf16.mxu0 0
    %1961 = vmatpush1.bf16.xpose.msra.mxu0 0
    %1962 = vmatprep.subr.bf16.mxu0 0
    %1963 = vmatpush1.bf16.xpose.msra.mxu0 0
    %1964 = vmatprep.subr.bf16.mxu0 0
    %1965 = vmatpush1.bf16.xpose.msra.mxu0 0
    %1966 = vmatprep.subr.bf16.mxu0 0
    %1967 = vmatpush1.bf16.xpose.msra.mxu0 0
    %1968 = vmatprep.subr.bf16.mxu0 0
    %1969 = vmatpush1.bf16.xpose.msra.mxu0 0
    %1970 = vmatprep.subr.bf16.mxu0 0
    %1971 = vmatpush1.bf16.xpose.msra.mxu0 0
    %1972 = vmatprep.subr.bf16.mxu0 0
    %1973 = vmatpush1.bf16.xpose.msra.mxu0 0
    %1974 = vmatprep.subr.bf16.mxu0 0
    %1975 = vmatpush1.bf16.xpose.msra.mxu0 0
    %1976 = vmatprep.subr.bf16.mxu0 0
    %1977 = vmatpush1.bf16.xpose.msra.mxu0 0
    %1978 = vmatprep.mubr.bf16.mxu0 0
    %1979 = vmatmul.mubr.bf16.gmra.mrb[0].mxu0 %v1941
    %v1980 = vpop.f32.mrb[0].mxu0
    %v1981 = vadd.f32 0.0, %v1980
    %v1982 = vpop.f32.mrb[0].mxu0
    %v1983 = vpop.f32.mrb[0].mxu0
    %v1984 = vpop.f32.mrb[0].mxu0
    %1985 = vdwg.mxu0
    %v1987 = vsel %vm434, %v1649, 0
    %v1990 = vsel %vm434, %v1663, 0
    %1992 = vmatprep.subr.bf16.mxu0 0
    %1993 = vmatpush1.bf16.xpose.msra.mxu0 %v1990
    %1994 = vmatprep.subr.bf16.mxu0 0
    %1995 = vmatpush1.bf16.xpose.msra.mxu0 0
    %1996 = vmatprep.subr.bf16.mxu0 0
    %1997 = vmatpush1.bf16.xpose.msra.mxu0 0
    %1998 = vmatprep.subr.bf16.mxu0 0
    %1999 = vmatpush1.bf16.xpose.msra.mxu0 0
    %2000 = vmatprep.subr.bf16.mxu0 0
    %2001 = vmatpush1.bf16.xpose.msra.mxu0 0
    %2002 = vmatprep.subr.bf16.mxu0 0
    %2003 = vmatpush1.bf16.xpose.msra.mxu0 0
    %2004 = vmatprep.subr.bf16.mxu0 0
    %2005 = vmatpush1.bf16.xpose.msra.mxu0 0
    %2006 = vmatprep.subr.bf16.mxu0 0
    %2007 = vmatpush1.bf16.xpose.msra.mxu0 0
    %2008 = vmatprep.subr.bf16.mxu0 0
    %2009 = vmatpush1.bf16.xpose.msra.mxu0 0
    %2010 = vmatprep.subr.bf16.mxu0 0
    %2011 = vmatpush1.bf16.xpose.msra.mxu0 0
    %2012 = vmatprep.subr.bf16.mxu0 0
    %2013 = vmatpush1.bf16.xpose.msra.mxu0 0
    %2014 = vmatprep.subr.bf16.mxu0 0
    %2015 = vmatpush1.bf16.xpose.msra.mxu0 0
    %2016 = vmatprep.subr.bf16.mxu0 0
    %2017 = vmatpush1.bf16.xpose.msra.mxu0 0
    %2018 = vmatprep.subr.bf16.mxu0 0
    %2019 = vmatpush1.bf16.xpose.msra.mxu0 0
    %2020 = vmatprep.subr.bf16.mxu0 0
    %2021 = vmatpush1.bf16.xpose.msra.mxu0 0
    %2022 = vmatprep.subr.bf16.mxu0 0
    %2023 = vmatpush1.bf16.xpose.msra.mxu0 0
    %2024 = vmatprep.mubr.bf16.mxu0 0
    %2025 = vmatmul.mubr.bf16.gmra.mrb[0].mxu0 %v1987
    %v2026 = vpop.f32.mrb[0].mxu0
    %v2027 = vadd.f32 0.0, %v2026
    %v2028 = vpop.f32.mrb[0].mxu0
    %v2029 = vpop.f32.mrb[0].mxu0
    %v2030 = vpop.f32.mrb[0].mxu0
    %2031 = vdwg.mxu0
    %v2032 = vsel %vm278, 65537, 0
    %v2033 = vsel %vm279, 65537, 0
    %v2034 = vunpack.c.l.b16 %v2032
    %v2035 = vunpack.c.l.b16 %v2033
    %vm2036 = vcmp.ne.s32.totalorder %v2034, 0
    %vm2037 = vcmp.ne.s32.totalorder %v2035, 0
    %v2038 = vsel %vm2036, 1, 0
    %v2039 = vsel %vm2037, 1, 0
    %vm2040 = vcmp.eq.s32.totalorder %v2038, 1
    %vm2041 = vcmp.eq.s32.totalorder %v2039, 1
    %v2042 = vsel %vm2040, %v1705, -1e+30
    %v2043 = vsel %vm2041, %v1751, -1e+30
    %v2044 = vsel %vm2040, %v1797, -1e+30
    %v2045 = vsel %vm2041, %v1843, -1e+30
    %v2046 = vsel %vm2040, %v1889, -1e+30
    %v2047 = vsel %vm2041, %v1935, -1e+30
    %v2048 = vsel %vm2040, %v1981, -1e+30
    %v2049 = vsel %vm2041, %v2027, -1e+30
    %v2050 = vsel %vm1362, %v2042, -inf
    %2051 = vmax.xlane.f32.xlu0 %v2050
    %v2052 = vpop.xlane.xlu0 %2051
    %v2053 = vsel %vm1362, %v2043, -inf
    %2054 = vmax.xlane.f32.xlu0 %v2053
    %v2055 = vpop.xlane.xlu0 %2054
    %v2056 = vsel %vm1362, %v2044, -inf
    %2057 = vmax.xlane.f32.xlu0 %v2056
    %v2058 = vpop.xlane.xlu0 %2057
    %v2059 = vsel %vm1362, %v2045, -inf
    %2060 = vmax.xlane.f32.xlu0 %v2059
    %v2061 = vpop.xlane.xlu0 %2060
    %v2062 = vsel %vm1362, %v2046, -inf
    %2063 = vmax.xlane.f32.xlu0 %v2062
    %v2064 = vpop.xlane.xlu0 %2063
    %v2065 = vsel %vm1362, %v2047, -inf
    %2066 = vmax.xlane.f32.xlu0 %v2065
    %v2067 = vpop.xlane.xlu0 %2066
    %v2068 = vsel %vm1362, %v2048, -inf
    %2069 = vmax.xlane.f32.xlu0 %v2068
    %v2070 = vpop.xlane.xlu0 %2069
    %v2071 = vsel %vm1362, %v2049, -inf
    %2072 = vmax.xlane.f32.xlu0 %v2071
    %v2073 = vpop.xlane.xlu0 %2072
    %v2074 = vsub.f32 %v2042, %v2052
    %v2075 = vsub.f32 %v2043, %v2055
    %v2076 = vsub.f32 %v2044, %v2058
    %v2077 = vsub.f32 %v2045, %v2061
    %v2078 = vsub.f32 %v2046, %v2064
    %v2079 = vsub.f32 %v2047, %v2067
    %v2080 = vsub.f32 %v2048, %v2070
    %v2081 = vsub.f32 %v2049, %v2073
    %v2082 = vmul.f32 %v2074, 1.442695
    %v2083 = vpow.pop %v2082
    %v2084 = vmul.f32 %v2075, 1.442695
    %v2085 = vpow.pop %v2084
    %v2086 = vmul.f32 %v2076, 1.442695
    %v2087 = vpow.pop %v2086
    %v2088 = vmul.f32 %v2077, 1.442695
    %v2089 = vpow.pop %v2088
    %v2090 = vmul.f32 %v2078, 1.442695
    %v2091 = vpow.pop %v2090
    %v2092 = vmul.f32 %v2079, 1.442695
    %v2093 = vpow.pop %v2092
    %v2094 = vmul.f32 %v2080, 1.442695
    %v2095 = vpow.pop %v2094
    %v2096 = vmul.f32 %v2081, 1.442695
    %v2097 = vpow.pop %v2096
    %v2098 = vsel %vm1362, %v2083, 0.0
    %2099 = vadd.xlane.f32.xlu0 %v2098
    %v2100 = vpop.xlane.xlu0 %2099
    %v2101 = vsel %vm1362, %v2085, 0.0
    %2102 = vadd.xlane.f32.xlu0 %v2101
    %v2103 = vpop.xlane.xlu0 %2102
    %v2104 = vsel %vm1362, %v2087, 0.0
    %2105 = vadd.xlane.f32.xlu0 %v2104
    %v2106 = vpop.xlane.xlu0 %2105
    %v2107 = vsel %vm1362, %v2089, 0.0
    %2108 = vadd.xlane.f32.xlu0 %v2107
    %v2109 = vpop.xlane.xlu0 %2108
    %v2110 = vsel %vm1362, %v2091, 0.0
    %2111 = vadd.xlane.f32.xlu0 %v2110
    %v2112 = vpop.xlane.xlu0 %2111
    %v2113 = vsel %vm1362, %v2093, 0.0
    %2114 = vadd.xlane.f32.xlu0 %v2113
    %v2115 = vpop.xlane.xlu0 %2114
    %v2116 = vsel %vm1362, %v2095, 0.0
    %2117 = vadd.xlane.f32.xlu0 %v2116
    %v2118 = vpop.xlane.xlu0 %2117
    %v2119 = vsel %vm1362, %v2097, 0.0
    %2120 = vadd.xlane.f32.xlu0 %v2119
    %v2121 = vpop.xlane.xlu0 %2120
    %v2122 = vrcp.pop %v2100
    %v2123 = vrcp.pop %v2103
    %v2124 = vrcp.pop %v2106
    %v2125 = vrcp.pop %v2109
    %v2126 = vrcp.pop %v2112
    %v2127 = vrcp.pop %v2115
    %v2128 = vrcp.pop %v2118
    %v2129 = vrcp.pop %v2121
    %v2130 = vmul.f32 %v2083, %v2122
    %v2131 = vmul.f32 %v2085, %v2123
    %v2132 = vmul.f32 %v2087, %v2124
    %v2133 = vmul.f32 %v2089, %v2125
    %v2134 = vmul.f32 %v2091, %v2126
    %v2135 = vmul.f32 %v2093, %v2127
    %v2136 = vmul.f32 %v2095, %v2128
    %v2137 = vmul.f32 %v2097, %v2129
    %v2138 = vsel %vm2040, %v2130, 0.0
    %v2139 = vsel %vm2041, %v2131, 0.0
    %v2140 = vsel %vm2040, %v2132, 0.0
    %v2141 = vsel %vm2041, %v2133, 0.0
    %v2142 = vsel %vm2040, %v2134, 0.0
    %v2143 = vsel %vm2041, %v2135, 0.0
    %v2144 = vsel %vm2040, %v2136, 0.0
    %v2145 = vsel %vm2041, %v2137, 0.0
    %v2146 = vpack.c.bf16 %v2138, %v2138
    %v2147 = vpack.c.bf16 %v2139, %v2139
    %v2148 = vpack.c.bf16 %v2140, %v2140
    %v2149 = vpack.c.bf16 %v2141, %v2141
    %v2150 = vpack.c.bf16 %v2142, %v2142
    %v2151 = vpack.c.bf16 %v2143, %v2143
    %v2152 = vpack.c.bf16 %v2144, %v2144
    %v2153 = vpack.c.bf16 %v2145, %v2145
    %2154 = vrot.lane.b32.xlu0 %v1631, 96
    %v2155 = vpop.permute.xlu0 %2154
    %v2158 = vsel %vm1362, %v2146, 0
    %2160 = vmatprep.subr.bf16.mxu0 0
    %2161 = vmatpush1.bf16.msra.mxu0 %v2155
    %2162 = vmatprep.subr.bf16.mxu0 0
    %2163 = vmatpush1.bf16.msra.mxu0 0
    %2164 = vmatprep.subr.bf16.mxu0 0
    %2165 = vmatpush1.bf16.msra.mxu0 0
    %2166 = vmatprep.subr.bf16.mxu0 0
    %2167 = vmatpush1.bf16.msra.mxu0 0
    %2168 = vmatprep.subr.bf16.mxu0 0
    %2169 = vmatpush1.bf16.msra.mxu0 0
    %2170 = vmatprep.subr.bf16.mxu0 0
    %2171 = vmatpush1.bf16.msra.mxu0 0
    %2172 = vmatprep.subr.bf16.mxu0 0
    %2173 = vmatpush1.bf16.msra.mxu0 0
    %2174 = vmatprep.subr.bf16.mxu0 0
    %2175 = vmatpush1.bf16.msra.mxu0 0
    %2176 = vmatprep.subr.bf16.mxu0 0
    %2177 = vmatpush1.bf16.msra.mxu0 0
    %2178 = vmatprep.subr.bf16.mxu0 0
    %2179 = vmatpush1.bf16.msra.mxu0 0
    %2180 = vmatprep.subr.bf16.mxu0 0
    %2181 = vmatpush1.bf16.msra.mxu0 0
    %2182 = vmatprep.subr.bf16.mxu0 0
    %2183 = vmatpush1.bf16.msra.mxu0 0
    %2184 = vmatprep.subr.bf16.mxu0 0
    %2185 = vmatpush1.bf16.msra.mxu0 0
    %2186 = vmatprep.subr.bf16.mxu0 0
    %2187 = vmatpush1.bf16.msra.mxu0 0
    %2188 = vmatprep.subr.bf16.mxu0 0
    %2189 = vmatpush1.bf16.msra.mxu0 0
    %2190 = vmatprep.subr.bf16.mxu0 0
    %2191 = vmatpush1.bf16.msra.mxu0 0
    %2192 = vmatprep.mubr.bf16.mxu0 0
    %2193 = vmatmul.mubr.bf16.gmra.mrb[0].mxu0 %v2158
    %v2194 = vpop.f32.mrb[0].mxu0
    %v2195 = vadd.f32 0.0, %v2194
    %v2196 = vpop.f32.mrb[0].mxu0
    %v2197 = vpop.f32.mrb[0].mxu0
    %v2198 = vpop.f32.mrb[0].mxu0
    %2199 = vdwg.mxu0
    %2200 = vrot.lane.b32.xlu0 %v1632, 96
    %v2201 = vpop.permute.xlu0 %2200
    %v2204 = vsel %vm1362, %v2147, 0
    %2206 = vmatprep.subr.bf16.mxu0 0
    %2207 = vmatpush1.bf16.msra.mxu0 %v2201
    %2208 = vmatprep.subr.bf16.mxu0 0
    %2209 = vmatpush1.bf16.msra.mxu0 0
    %2210 = vmatprep.subr.bf16.mxu0 0
    %2211 = vmatpush1.bf16.msra.mxu0 0
    %2212 = vmatprep.subr.bf16.mxu0 0
    %2213 = vmatpush1.bf16.msra.mxu0 0
    %2214 = vmatprep.subr.bf16.mxu0 0
    %2215 = vmatpush1.bf16.msra.mxu0 0
    %2216 = vmatprep.subr.bf16.mxu0 0
    %2217 = vmatpush1.bf16.msra.mxu0 0
    %2218 = vmatprep.subr.bf16.mxu0 0
    %2219 = vmatpush1.bf16.msra.mxu0 0
    %2220 = vmatprep.subr.bf16.mxu0 0
    %2221 = vmatpush1.bf16.msra.mxu0 0
    %2222 = vmatprep.subr.bf16.mxu0 0
    %2223 = vmatpush1.bf16.msra.mxu0 0
    %2224 = vmatprep.subr.bf16.mxu0 0
    %2225 = vmatpush1.bf16.msra.mxu0 0
    %2226 = vmatprep.subr.bf16.mxu0 0
    %2227 = vmatpush1.bf16.msra.mxu0 0
    %2228 = vmatprep.subr.bf16.mxu0 0
    %2229 = vmatpush1.bf16.msra.mxu0 0
    %2230 = vmatprep.subr.bf16.mxu0 0
    %2231 = vmatpush1.bf16.msra.mxu0 0
    %2232 = vmatprep.subr.bf16.mxu0 0
    %2233 = vmatpush1.bf16.msra.mxu0 0
    %2234 = vmatprep.subr.bf16.mxu0 0
    %2235 = vmatpush1.bf16.msra.mxu0 0
    %2236 = vmatprep.subr.bf16.mxu0 0
    %2237 = vmatpush1.bf16.msra.mxu0 0
    %2238 = vmatprep.mubr.bf16.mxu0 0
    %2239 = vmatmul.mubr.bf16.gmra.mrb[0].mxu0 %v2204
    %v2240 = vpop.f32.mrb[0].mxu0
    %v2241 = vadd.f32 0.0, %v2240
    %v2242 = vpop.f32.mrb[0].mxu0
    %v2243 = vpop.f32.mrb[0].mxu0
    %v2244 = vpop.f32.mrb[0].mxu0
    %2245 = vdwg.mxu0
    %2246 = vrot.lane.b32.xlu0 %v1653, 96
    %v2247 = vpop.permute.xlu0 %2246
    %v2250 = vsel %vm1362, %v2148, 0
    %2252 = vmatprep.subr.bf16.mxu0 0
    %2253 = vmatpush1.bf16.msra.mxu0 %v2247
    %2254 = vmatprep.subr.bf16.mxu0 0
    %2255 = vmatpush1.bf16.msra.mxu0 0
    %2256 = vmatprep.subr.bf16.mxu0 0
    %2257 = vmatpush1.bf16.msra.mxu0 0
    %2258 = vmatprep.subr.bf16.mxu0 0
    %2259 = vmatpush1.bf16.msra.mxu0 0
    %2260 = vmatprep.subr.bf16.mxu0 0
    %2261 = vmatpush1.bf16.msra.mxu0 0
    %2262 = vmatprep.subr.bf16.mxu0 0
    %2263 = vmatpush1.bf16.msra.mxu0 0
    %2264 = vmatprep.subr.bf16.mxu0 0
    %2265 = vmatpush1.bf16.msra.mxu0 0
    %2266 = vmatprep.subr.bf16.mxu0 0
    %2267 = vmatpush1.bf16.msra.mxu0 0
    %2268 = vmatprep.subr.bf16.mxu0 0
    %2269 = vmatpush1.bf16.msra.mxu0 0
    %2270 = vmatprep.subr.bf16.mxu0 0
    %2271 = vmatpush1.bf16.msra.mxu0 0
    %2272 = vmatprep.subr.bf16.mxu0 0
    %2273 = vmatpush1.bf16.msra.mxu0 0
    %2274 = vmatprep.subr.bf16.mxu0 0
    %2275 = vmatpush1.bf16.msra.mxu0 0
    %2276 = vmatprep.subr.bf16.mxu0 0
    %2277 = vmatpush1.bf16.msra.mxu0 0
    %2278 = vmatprep.subr.bf16.mxu0 0
    %2279 = vmatpush1.bf16.msra.mxu0 0
    %2280 = vmatprep.subr.bf16.mxu0 0
    %2281 = vmatpush1.bf16.msra.mxu0 0
    %2282 = vmatprep.subr.bf16.mxu0 0
    %2283 = vmatpush1.bf16.msra.mxu0 0
    %2284 = vmatprep.mubr.bf16.mxu0 0
    %2285 = vmatmul.mubr.bf16.gmra.mrb[0].mxu0 %v2250
    %v2286 = vpop.f32.mrb[0].mxu0
    %v2287 = vadd.f32 0.0, %v2286
    %v2288 = vpop.f32.mrb[0].mxu0
    %v2289 = vpop.f32.mrb[0].mxu0
    %v2290 = vpop.f32.mrb[0].mxu0
    %2291 = vdwg.mxu0
    %2292 = vrot.lane.b32.xlu0 %v1655, 96
    %v2293 = vpop.permute.xlu0 %2292
    %v2296 = vsel %vm1362, %v2149, 0
    %2298 = vmatprep.subr.bf16.mxu0 0
    %2299 = vmatpush1.bf16.msra.mxu0 %v2293
    %2300 = vmatprep.subr.bf16.mxu0 0
    %2301 = vmatpush1.bf16.msra.mxu0 0
    %2302 = vmatprep.subr.bf16.mxu0 0
    %2303 = vmatpush1.bf16.msra.mxu0 0
    %2304 = vmatprep.subr.bf16.mxu0 0
    %2305 = vmatpush1.bf16.msra.mxu0 0
    %2306 = vmatprep.subr.bf16.mxu0 0
    %2307 = vmatpush1.bf16.msra.mxu0 0
    %2308 = vmatprep.subr.bf16.mxu0 0
    %2309 = vmatpush1.bf16.msra.mxu0 0
    %2310 = vmatprep.subr.bf16.mxu0 0
    %2311 = vmatpush1.bf16.msra.mxu0 0
    %2312 = vmatprep.subr.bf16.mxu0 0
    %2313 = vmatpush1.bf16.msra.mxu0 0
    %2314 = vmatprep.subr.bf16.mxu0 0
    %2315 = vmatpush1.bf16.msra.mxu0 0
    %2316 = vmatprep.subr.bf16.mxu0 0
    %2317 = vmatpush1.bf16.msra.mxu0 0
    %2318 = vmatprep.subr.bf16.mxu0 0
    %2319 = vmatpush1.bf16.msra.mxu0 0
    %2320 = vmatprep.subr.bf16.mxu0 0
    %2321 = vmatpush1.bf16.msra.mxu0 0
    %2322 = vmatprep.subr.bf16.mxu0 0
    %2323 = vmatpush1.bf16.msra.mxu0 0
    %2324 = vmatprep.subr.bf16.mxu0 0
    %2325 = vmatpush1.bf16.msra.mxu0 0
    %2326 = vmatprep.subr.bf16.mxu0 0
    %2327 = vmatpush1.bf16.msra.mxu0 0
    %2328 = vmatprep.subr.bf16.mxu0 0
    %2329 = vmatpush1.bf16.msra.mxu0 0
    %2330 = vmatprep.mubr.bf16.mxu0 0
    %2331 = vmatmul.mubr.bf16.gmra.mrb[0].mxu0 %v2296
    %v2332 = vpop.f32.mrb[0].mxu0
    %v2333 = vadd.f32 0.0, %v2332
    %v2334 = vpop.f32.mrb[0].mxu0
    %v2335 = vpop.f32.mrb[0].mxu0
    %v2336 = vpop.f32.mrb[0].mxu0
    %2337 = vdwg.mxu0
    %2338 = vrot.lane.b32.xlu0 %v1657, 96
    %v2339 = vpop.permute.xlu0 %2338
    %v2342 = vsel %vm1362, %v2150, 0
    %2344 = vmatprep.subr.bf16.mxu0 0
    %2345 = vmatpush1.bf16.msra.mxu0 %v2339
    %2346 = vmatprep.subr.bf16.mxu0 0
    %2347 = vmatpush1.bf16.msra.mxu0 0
    %2348 = vmatprep.subr.bf16.mxu0 0
    %2349 = vmatpush1.bf16.msra.mxu0 0
    %2350 = vmatprep.subr.bf16.mxu0 0
    %2351 = vmatpush1.bf16.msra.mxu0 0
    %2352 = vmatprep.subr.bf16.mxu0 0
    %2353 = vmatpush1.bf16.msra.mxu0 0
    %2354 = vmatprep.subr.bf16.mxu0 0
    %2355 = vmatpush1.bf16.msra.mxu0 0
    %2356 = vmatprep.subr.bf16.mxu0 0
    %2357 = vmatpush1.bf16.msra.mxu0 0
    %2358 = vmatprep.subr.bf16.mxu0 0
    %2359 = vmatpush1.bf16.msra.mxu0 0
    %2360 = vmatprep.subr.bf16.mxu0 0
    %2361 = vmatpush1.bf16.msra.mxu0 0
    %2362 = vmatprep.subr.bf16.mxu0 0
    %2363 = vmatpush1.bf16.msra.mxu0 0
    %2364 = vmatprep.subr.bf16.mxu0 0
    %2365 = vmatpush1.bf16.msra.mxu0 0
    %2366 = vmatprep.subr.bf16.mxu0 0
    %2367 = vmatpush1.bf16.msra.mxu0 0
    %2368 = vmatprep.subr.bf16.mxu0 0
    %2369 = vmatpush1.bf16.msra.mxu0 0
    %2370 = vmatprep.subr.bf16.mxu0 0
    %2371 = vmatpush1.bf16.msra.mxu0 0
    %2372 = vmatprep.subr.bf16.mxu0 0
    %2373 = vmatpush1.bf16.msra.mxu0 0
    %2374 = vmatprep.subr.bf16.mxu0 0
    %2375 = vmatpush1.bf16.msra.mxu0 0
    %2376 = vmatprep.mubr.bf16.mxu0 0
    %2377 = vmatmul.mubr.bf16.gmra.mrb[0].mxu0 %v2342
    %v2378 = vpop.f32.mrb[0].mxu0
    %v2379 = vadd.f32 0.0, %v2378
    %v2380 = vpop.f32.mrb[0].mxu0
    %v2381 = vpop.f32.mrb[0].mxu0
    %v2382 = vpop.f32.mrb[0].mxu0
    %2383 = vdwg.mxu0
    %2384 = vrot.lane.b32.xlu0 %v1659, 96
    %v2385 = vpop.permute.xlu0 %2384
    %v2388 = vsel %vm1362, %v2151, 0
    %2390 = vmatprep.subr.bf16.mxu0 0
    %2391 = vmatpush1.bf16.msra.mxu0 %v2385
    %2392 = vmatprep.subr.bf16.mxu0 0
    %2393 = vmatpush1.bf16.msra.mxu0 0
    %2394 = vmatprep.subr.bf16.mxu0 0
    %2395 = vmatpush1.bf16.msra.mxu0 0
    %2396 = vmatprep.subr.bf16.mxu0 0
    %2397 = vmatpush1.bf16.msra.mxu0 0
    %2398 = vmatprep.subr.bf16.mxu0 0
    %2399 = vmatpush1.bf16.msra.mxu0 0
    %2400 = vmatprep.subr.bf16.mxu0 0
    %2401 = vmatpush1.bf16.msra.mxu0 0
    %2402 = vmatprep.subr.bf16.mxu0 0
    %2403 = vmatpush1.bf16.msra.mxu0 0
    %2404 = vmatprep.subr.bf16.mxu0 0
    %2405 = vmatpush1.bf16.msra.mxu0 0
    %2406 = vmatprep.subr.bf16.mxu0 0
    %2407 = vmatpush1.bf16.msra.mxu0 0
    %2408 = vmatprep.subr.bf16.mxu0 0
    %2409 = vmatpush1.bf16.msra.mxu0 0
    %2410 = vmatprep.subr.bf16.mxu0 0
    %2411 = vmatpush1.bf16.msra.mxu0 0
    %2412 = vmatprep.subr.bf16.mxu0 0
    %2413 = vmatpush1.bf16.msra.mxu0 0
    %2414 = vmatprep.subr.bf16.mxu0 0
    %2415 = vmatpush1.bf16.msra.mxu0 0
    %2416 = vmatprep.subr.bf16.mxu0 0
    %2417 = vmatpush1.bf16.msra.mxu0 0
    %2418 = vmatprep.subr.bf16.mxu0 0
    %2419 = vmatpush1.bf16.msra.mxu0 0
    %2420 = vmatprep.subr.bf16.mxu0 0
    %2421 = vmatpush1.bf16.msra.mxu0 0
    %2422 = vmatprep.mubr.bf16.mxu0 0
    %2423 = vmatmul.mubr.bf16.gmra.mrb[0].mxu0 %v2388
    %v2424 = vpop.f32.mrb[0].mxu0
    %v2425 = vadd.f32 0.0, %v2424
    %v2426 = vpop.f32.mrb[0].mxu0
    %v2427 = vpop.f32.mrb[0].mxu0
    %v2428 = vpop.f32.mrb[0].mxu0
    %2429 = vdwg.mxu0
    %2430 = vrot.lane.b32.xlu0 %v1661, 96
    %v2431 = vpop.permute.xlu0 %2430
    %v2434 = vsel %vm1362, %v2152, 0
    %2436 = vmatprep.subr.bf16.mxu0 0
    %2437 = vmatpush1.bf16.msra.mxu0 %v2431
    %2438 = vmatprep.subr.bf16.mxu0 0
    %2439 = vmatpush1.bf16.msra.mxu0 0
    %2440 = vmatprep.subr.bf16.mxu0 0
    %2441 = vmatpush1.bf16.msra.mxu0 0
    %2442 = vmatprep.subr.bf16.mxu0 0
    %2443 = vmatpush1.bf16.msra.mxu0 0
    %2444 = vmatprep.subr.bf16.mxu0 0
    %2445 = vmatpush1.bf16.msra.mxu0 0
    %2446 = vmatprep.subr.bf16.mxu0 0
    %2447 = vmatpush1.bf16.msra.mxu0 0
    %2448 = vmatprep.subr.bf16.mxu0 0
    %2449 = vmatpush1.bf16.msra.mxu0 0
    %2450 = vmatprep.subr.bf16.mxu0 0
    %2451 = vmatpush1.bf16.msra.mxu0 0
    %2452 = vmatprep.subr.bf16.mxu0 0
    %2453 = vmatpush1.bf16.msra.mxu0 0
    %2454 = vmatprep.subr.bf16.mxu0 0
    %2455 = vmatpush1.bf16.msra.mxu0 0
    %2456 = vmatprep.subr.bf16.mxu0 0
    %2457 = vmatpush1.bf16.msra.mxu0 0
    %2458 = vmatprep.subr.bf16.mxu0 0
    %2459 = vmatpush1.bf16.msra.mxu0 0
    %2460 = vmatprep.subr.bf16.mxu0 0
    %2461 = vmatpush1.bf16.msra.mxu0 0
    %2462 = vmatprep.subr.bf16.mxu0 0
    %2463 = vmatpush1.bf16.msra.mxu0 0
    %2464 = vmatprep.subr.bf16.mxu0 0
    %2465 = vmatpush1.bf16.msra.mxu0 0
    %2466 = vmatprep.subr.bf16.mxu0 0
    %2467 = vmatpush1.bf16.msra.mxu0 0
    %2468 = vmatprep.mubr.bf16.mxu0 0
    %2469 = vmatmul.mubr.bf16.gmra.mrb[0].mxu0 %v2434
    %v2470 = vpop.f32.mrb[0].mxu0
    %v2471 = vadd.f32 0.0, %v2470
    %v2472 = vpop.f32.mrb[0].mxu0
    %v2473 = vpop.f32.mrb[0].mxu0
    %v2474 = vpop.f32.mrb[0].mxu0
    %2475 = vdwg.mxu0
    %2476 = vrot.lane.b32.xlu0 %v1663, 96
    %v2477 = vpop.permute.xlu0 %2476
    %v2480 = vsel %vm1362, %v2153, 0
    %2482 = vmatprep.subr.bf16.mxu0 0
    %2483 = vmatpush1.bf16.msra.mxu0 %v2477
    %2484 = vmatprep.subr.bf16.mxu0 0
    %2485 = vmatpush1.bf16.msra.mxu0 0
    %2486 = vmatprep.subr.bf16.mxu0 0
    %2487 = vmatpush1.bf16.msra.mxu0 0
    %2488 = vmatprep.subr.bf16.mxu0 0
    %2489 = vmatpush1.bf16.msra.mxu0 0
    %2490 = vmatprep.subr.bf16.mxu0 0
    %2491 = vmatpush1.bf16.msra.mxu0 0
    %2492 = vmatprep.subr.bf16.mxu0 0
    %2493 = vmatpush1.bf16.msra.mxu0 0
    %2494 = vmatprep.subr.bf16.mxu0 0
    %2495 = vmatpush1.bf16.msra.mxu0 0
    %2496 = vmatprep.subr.bf16.mxu0 0
    %2497 = vmatpush1.bf16.msra.mxu0 0
    %2498 = vmatprep.subr.bf16.mxu0 0
    %2499 = vmatpush1.bf16.msra.mxu0 0
    %2500 = vmatprep.subr.bf16.mxu0 0
    %2501 = vmatpush1.bf16.msra.mxu0 0
    %2502 = vmatprep.subr.bf16.mxu0 0
    %2503 = vmatpush1.bf16.msra.mxu0 0
    %2504 = vmatprep.subr.bf16.mxu0 0
    %2505 = vmatpush1.bf16.msra.mxu0 0
    %2506 = vmatprep.subr.bf16.mxu0 0
    %2507 = vmatpush1.bf16.msra.mxu0 0
    %2508 = vmatprep.subr.bf16.mxu0 0
    %2509 = vmatpush1.bf16.msra.mxu0 0
    %2510 = vmatprep.subr.bf16.mxu0 0
    %2511 = vmatpush1.bf16.msra.mxu0 0
    %2512 = vmatprep.subr.bf16.mxu0 0
    %2513 = vmatpush1.bf16.msra.mxu0 0
    %2514 = vmatprep.mubr.bf16.mxu0 0
    %2515 = vmatmul.mubr.bf16.gmra.mrb[0].mxu0 %v2480
    %v2516 = vpop.f32.mrb[0].mxu0
    %v2517 = vadd.f32 0.0, %v2516
    %v2518 = vpop.f32.mrb[0].mxu0
    %v2519 = vpop.f32.mrb[0].mxu0
    %v2520 = vpop.f32.mrb[0].mxu0
    %2521 = vdwg.mxu0
    %2524 = vrot.lane.b32.xlu0 %v2287, 8
    %v2525 = vpop.permute.xlu0 %2524
    %2526 = vrot.lane.b32.xlu0 %v2333, 8
    %v2527 = vpop.permute.xlu0 %2526
    %2532 = vrot.lane.b32.xlu0 %v2379, 16
    %v2533 = vpop.permute.xlu0 %2532
    %2534 = vrot.lane.b32.xlu0 %v2425, 16
    %v2535 = vpop.permute.xlu0 %2534
    %2540 = vrot.lane.b32.xlu0 %v2471, 24
    %v2541 = vpop.permute.xlu0 %2540
    %2542 = vrot.lane.b32.xlu0 %v2517, 24
    %v2543 = vpop.permute.xlu0 %2542
    %v2546 = vsel %vm434, %v2195, %v2525
    %v2547 = vsel %vm434, %v2241, %v2527
    %v2548 = vsel %vm1362, %v2546, %v2533
    %v2549 = vsel %vm1362, %v2547, %v2535
    %v2550 = vsel %vm1365, %v2548, %v2541
    %v2551 = vsel %vm1365, %v2549, %v2543
    %v2552 = vpack.c.bf16 %v2551, %v2550
    %v2553 = vld [vmem:[%s18] sm:$0xf]
    %v2554 = vld [vmem:[%s18 + $0x4] sm:$0xf]
    %v2555 = vld [vmem:[%s18 + $0x8] sm:$0xf]
    %v2556 = vld [vmem:[%s18 + $0xc] sm:$0xf]
    %v2557 = vld [vmem:[%s19] sm:$0x1]
    %v2559 = vlaneseq
    %v2560 = vshrl.u32 %v2559, 7
    %v2561 = vsub.s32 0, %v2560
    %v2562 = vrot.slane %v2557, %v2561
    %v2568 = vunpack.c.l.b16 %v2553
    %v2569 = vunpack.c.l.b16 %v2554
    %v2570 = vunpack.c.l.b16 %v2555
    %v2571 = vunpack.c.l.b16 %v2556
    %v2572 = vpack.c.b16 %v2569, %v2568
    %v2573 = vpack.c.b16 %v2571, %v2570
    %v2577 = vsel %vm282, %v2552, 0
    %2579 = vmatprep.subr.bf16.mxu0 0
    %2580 = vmatpush1.bf16.msra.mxu0 %v2572
    %2581 = vmatprep.subr.bf16.mxu0 0
    %2582 = vmatpush1.bf16.msra.mxu0 %v2573
    %2583 = vmatprep.subr.bf16.mxu0 0
    %2584 = vmatpush1.bf16.msra.mxu0 0
    %2585 = vmatprep.subr.bf16.mxu0 0
    %2586 = vmatpush1.bf16.msra.mxu0 0
    %2587 = vmatprep.subr.bf16.mxu0 0
    %2588 = vmatpush1.bf16.msra.mxu0 0
    %2589 = vmatprep.subr.bf16.mxu0 0
    %2590 = vmatpush1.bf16.msra.mxu0 0
    %2591 = vmatprep.subr.bf16.mxu0 0
    %2592 = vmatpush1.bf16.msra.mxu0 0
    %2593 = vmatprep.subr.bf16.mxu0 0
    %2594 = vmatpush1.bf16.msra.mxu0 0
    %2595 = vmatprep.subr.bf16.mxu0 0
    %2596 = vmatpush1.bf16.msra.mxu0 0
    %2597 = vmatprep.subr.bf16.mxu0 0
    %2598 = vmatpush1.bf16.msra.mxu0 0
    %2599 = vmatprep.subr.bf16.mxu0 0
    %2600 = vmatpush1.bf16.msra.mxu0 0
    %2601 = vmatprep.subr.bf16.mxu0 0
    %2602 = vmatpush1.bf16.msra.mxu0 0
    %2603 = vmatprep.subr.bf16.mxu0 0
    %2604 = vmatpush1.bf16.msra.mxu0 0
    %2605 = vmatprep.subr.bf16.mxu0 0
    %2606 = vmatpush1.bf16.msra.mxu0 0
    %2607 = vmatprep.subr.bf16.mxu0 0
    %2608 = vmatpush1.bf16.msra.mxu0 0
    %2609 = vmatprep.subr.bf16.mxu0 0
    %2610 = vmatpush1.bf16.msra.mxu0 0
    %2611 = vmatprep.mubr.bf16.mxu0 0
    %2612 = vmatmul.mubr.bf16.gmra.mrb[0].mxu0 %v2577
    %v2613 = vpop.f32.mrb[0].mxu0
    %v2614 = vadd.f32 %v2562, %v2613
    %v2615 = vpop.f32.mrb[0].mxu0
    %v2616 = vpop.f32.mrb[0].mxu0
    %v2617 = vadd.f32 %v2562, %v2616
    %v2618 = vpop.f32.mrb[0].mxu0
    %2619 = vdwg.mxu0
    %v2620 = vadd.f32 %v1436, %v2614
    %v2621 = vadd.f32 %v1437, %v2617
    %v2622 = vld [vmem:[#allocation13] sm:$0x1]
    %v2623 = vld [vmem:[#allocation14] sm:$0x1]
    %v2624 = vsel %vm282, %v2620, 0.0
    %2625 = vadd.xlane.f32.xlu0 %v2624
    %v2626 = vpop.xlane.xlu0 %2625
    %v2627 = vsel %vm282, %v2621, 0.0
    %2628 = vadd.xlane.f32.xlu0 %v2627
    %v2629 = vpop.xlane.xlu0 %2628
    %v2630 = vmul.f32 %v2626, %v289
    %v2631 = vmul.f32 %v2629, %v289
    %v2632 = vsub.f32 %v2620, %v2630
    %v2633 = vsub.f32 %v2621, %v2631
    %v2634 = vmul.f32 %v2632, %v2632
    %v2635 = vmul.f32 %v2633, %v2633
    %v2636 = vsel %vm282, %v2634, 0.0
    %2637 = vadd.xlane.f32.xlu0 %v2636
    %v2638 = vpop.xlane.xlu0 %2637
    %v2639 = vsel %vm282, %v2635, 0.0
    %2640 = vadd.xlane.f32.xlu0 %v2639
    %v2641 = vpop.xlane.xlu0 %2640
    %v2642 = vmul.f32 %v2638, %v289
    %v2643 = vmul.f32 %v2641, %v289
    %v2644 = vadd.f32 %v2642, 1e-12
    %v2645 = vadd.f32 %v2643, 1e-12
    %v2646 = vrsqrt.pop %v2644
    %v2647 = vrsqrt.pop %v2645
    %v2648 = vmul.f32 %v2632, %v2646
    %v2649 = vmul.f32 %v2633, %v2647
    %v2651 = vlaneseq
    %v2652 = vshrl.u32 %v2651, 7
    %v2653 = vsub.s32 0, %v2652
    %v2654 = vrot.slane %v2622, %v2653
    %v2656 = vmul.f32 %v2648, %v2654
    %v2657 = vmul.f32 %v2649, %v2654
    %v2659 = vlaneseq
    %v2660 = vshrl.u32 %v2659, 7
    %v2661 = vsub.s32 0, %v2660
    %v2662 = vrot.slane %v2623, %v2661
    %v2664 = vadd.f32 %v2656, %v2662
    %v2665 = vadd.f32 %v2657, %v2662
    %v2666 = vpack.c.bf16 %v2665, %v2664
    %v2667 = vld [vmem:[#allocation25] sm:$0xf]
    %v2668 = vld [vmem:[#allocation25 + $0x4] sm:$0xf]
    %v2669 = vld [vmem:[#allocation25 + $0x8] sm:$0xf]
    %v2670 = vld [vmem:[#allocation25 + $0xc] sm:$0xf]
    %v2671 = vld [vmem:[%s21] sm:$0x1]
    %v2673 = vlaneseq
    %v2674 = vshrl.u32 %v2673, 7
    %v2675 = vsub.s32 0, %v2674
    %v2676 = vrot.slane %v2671, %v2675
    %v2682 = vunpack.c.l.b16 %v2667
    %v2683 = vunpack.c.l.b16 %v2668
    %v2684 = vunpack.c.l.b16 %v2669
    %v2685 = vunpack.c.l.b16 %v2670
    %v2686 = vpack.c.b16 %v2683, %v2682
    %v2687 = vpack.c.b16 %v2685, %v2684
    %v2691 = vsel %vm282, %v2666, 0
    %2693 = vmatprep.subr.bf16.mxu0 0
    %2694 = vmatpush1.bf16.msra.mxu0 %v2686
    %2695 = vmatprep.subr.bf16.mxu0 0
    %2696 = vmatpush1.bf16.msra.mxu0 %v2687
    %2697 = vmatprep.subr.bf16.mxu0 0
    %2698 = vmatpush1.bf16.msra.mxu0 0
    %2699 = vmatprep.subr.bf16.mxu0 0
    %2700 = vmatpush1.bf16.msra.mxu0 0
    %2701 = vmatprep.subr.bf16.mxu0 0
    %2702 = vmatpush1.bf16.msra.mxu0 0
    %2703 = vmatprep.subr.bf16.mxu0 0
    %2704 = vmatpush1.bf16.msra.mxu0 0
    %2705 = vmatprep.subr.bf16.mxu0 0
    %2706 = vmatpush1.bf16.msra.mxu0 0
    %2707 = vmatprep.subr.bf16.mxu0 0
    %2708 = vmatpush1.bf16.msra.mxu0 0
    %2709 = vmatprep.subr.bf16.mxu0 0
    %2710 = vmatpush1.bf16.msra.mxu0 0
    %2711 = vmatprep.subr.bf16.mxu0 0
    %2712 = vmatpush1.bf16.msra.mxu0 0
    %2713 = vmatprep.subr.bf16.mxu0 0
    %2714 = vmatpush1.bf16.msra.mxu0 0
    %2715 = vmatprep.subr.bf16.mxu0 0
    %2716 = vmatpush1.bf16.msra.mxu0 0
    %2717 = vmatprep.subr.bf16.mxu0 0
    %2718 = vmatpush1.bf16.msra.mxu0 0
    %2719 = vmatprep.subr.bf16.mxu0 0
    %2720 = vmatpush1.bf16.msra.mxu0 0
    %2721 = vmatprep.subr.bf16.mxu0 0
    %2722 = vmatpush1.bf16.msra.mxu0 0
    %2723 = vmatprep.subr.bf16.mxu0 0
    %2724 = vmatpush1.bf16.msra.mxu0 0
    %2725 = vmatprep.mubr.bf16.mxu0 0
    %2726 = vmatmul.mubr.bf16.gmra.mrb[0].mxu0 %v2691
    %v2727 = vpop.f32.mrb[0].mxu0
    %v2728 = vadd.f32 %v2676, %v2727
    %v2729 = vpop.f32.mrb[0].mxu0
    %v2730 = vpop.f32.mrb[0].mxu0
    %v2731 = vadd.f32 %v2676, %v2730
    %v2732 = vpop.f32.mrb[0].mxu0
    %2733 = vdwg.mxu0
    %v2734 = vmax.f32 %v2728, 0.0
    %v2735 = vmax.f32 %v2731, 0.0
    %v2736 = vpack.c.bf16 %v2735, %v2734
    %v2737 = vld [vmem:[%s22] sm:$0xf]
    %v2738 = vld [vmem:[%s22 + $0x4] sm:$0xf]
    %v2739 = vld [vmem:[%s22 + $0x8] sm:$0xf]
    %v2740 = vld [vmem:[%s22 + $0xc] sm:$0xf]
    %v2741 = vld [vmem:[%s22 + $0x10] sm:$0xf]
    %v2742 = vld [vmem:[%s22 + $0x14] sm:$0xf]
    %v2743 = vld [vmem:[%s22 + $0x18] sm:$0xf]
    %v2744 = vld [vmem:[%s22 + $0x1c] sm:$0xf]
    %v2745 = vld [vmem:[%s23] sm:$0x1]
    %v2747 = vlaneseq
    %v2748 = vshrl.u32 %v2747, 7
    %v2749 = vsub.s32 0, %v2748
    %v2750 = vrot.slane %v2745, %v2749
    %v2760 = vunpack.c.l.b16 %v2737
    %v2761 = vunpack.c.l.b16 %v2738
    %v2762 = vunpack.c.l.b16 %v2739
    %v2763 = vunpack.c.l.b16 %v2740
    %v2764 = vunpack.c.l.b16 %v2741
    %v2765 = vunpack.c.l.b16 %v2742
    %v2766 = vunpack.c.l.b16 %v2743
    %v2767 = vunpack.c.l.b16 %v2744
    %v2768 = vpack.c.b16 %v2761, %v2760
    %v2769 = vpack.c.b16 %v2763, %v2762
    %v2770 = vpack.c.b16 %v2765, %v2764
    %v2771 = vpack.c.b16 %v2767, %v2766
    %vm2776 = vcmask 523264
    %v2778 = vsel %vm2776, %v2736, 0
    %2780 = vmatprep.subr.bf16.mxu0 0
    %2781 = vmatpush1.bf16.msra.mxu0 %v2768
    %2782 = vmatprep.subr.bf16.mxu0 0
    %2783 = vmatpush1.bf16.msra.mxu0 %v2769
    %2784 = vmatprep.subr.bf16.mxu0 0
    %2785 = vmatpush1.bf16.msra.mxu0 %v2770
    %2786 = vmatprep.subr.bf16.mxu0 0
    %2787 = vmatpush1.bf16.msra.mxu0 %v2771
    %2788 = vmatprep.subr.bf16.mxu0 0
    %2789 = vmatpush1.bf16.msra.mxu0 0
    %2790 = vmatprep.subr.bf16.mxu0 0
    %2791 = vmatpush1.bf16.msra.mxu0 0
    %2792 = vmatprep.subr.bf16.mxu0 0
    %2793 = vmatpush1.bf16.msra.mxu0 0
    %2794 = vmatprep.subr.bf16.mxu0 0
    %2795 = vmatpush1.bf16.msra.mxu0 0
    %2796 = vmatprep.subr.bf16.mxu0 0
    %2797 = vmatpush1.bf16.msra.mxu0 0
    %2798 = vmatprep.subr.bf16.mxu0 0
    %2799 = vmatpush1.bf16.msra.mxu0 0
    %2800 = vmatprep.subr.bf16.mxu0 0
    %2801 = vmatpush1.bf16.msra.mxu0 0
    %2802 = vmatprep.subr.bf16.mxu0 0
    %2803 = vmatpush1.bf16.msra.mxu0 0
    %2804 = vmatprep.subr.bf16.mxu0 0
    %2805 = vmatpush1.bf16.msra.mxu0 0
    %2806 = vmatprep.subr.bf16.mxu0 0
    %2807 = vmatpush1.bf16.msra.mxu0 0
    %2808 = vmatprep.subr.bf16.mxu0 0
    %2809 = vmatpush1.bf16.msra.mxu0 0
    %2810 = vmatprep.subr.bf16.mxu0 0
    %2811 = vmatpush1.bf16.msra.mxu0 0
    %2812 = vmatprep.mubr.bf16.mxu0 0
    %2813 = vmatmul.mubr.bf16.gmra.mrb[0].mxu0 %v2778
    %v2814 = vpop.f32.mrb[0].mxu0
    %v2815 = vadd.f32 %v2750, %v2814
    %v2816 = vpop.f32.mrb[0].mxu0
    %v2817 = vpop.f32.mrb[0].mxu0
    %v2818 = vadd.f32 %v2750, %v2817
    %v2819 = vpop.f32.mrb[0].mxu0
    %2820 = vdwg.mxu0
    %v2821 = vadd.f32 %v2620, %v2815
    %v2822 = vadd.f32 %v2621, %v2818
    %2823 = vst.msk [vmem:[#allocation26] sm:$0xff] %vm282, %v2821
    %2824 = vst.msk [vmem:[#allocation26 + $0x8] sm:$0xff] %vm282, %v2822
    // Predicated region
    $region158: #{tpu_custom_call.1} parent=1 // pred_check
      _
    $region159: #{tpu_custom_call.1} parent=1 // pred_check_branch
      %2826 = sbr.rel (0) target = $region161
    $region160: #{tpu_custom_call.1} parent=1 // pred_region
      %s2828 = ssub.s32 256, 256
      %2829 = vsyncadd [#allocation4], %s2828
      %s2830 = sshll.u32 [#allocation26], 4
      %s2831 = int_to_ptr.vmem [resolvable:$true] %s2830
      %2836 = dma.vmem_to_hbm [thread:$0]  %s2831, 256, %s24, [#allocation4], 128, 128, 8
    $region161: #{tpu_custom_call.1} parent=1 // pred_fallthru
      _
    // Predicated region
    $region162: #{tpu_custom_call.1} parent=1 // pred_check
      _
    $region163: #{tpu_custom_call.1} parent=1 // pred_check_branch
      %2838 = sbr.rel (0) target = $region165
    $region164: #{tpu_custom_call.1} parent=1 // pred_region
      %2839 = dma.done [#allocation4], 256
    $region165: #{tpu_custom_call.1} parent=1 // pred_fallthru
      _
    %2840 = vsyncpa [#allocation3], 1
    %2841 = vsyncpa [#allocation6], 1
    %2842 = vsyncpa [#allocation9], 1
    %2843 = vsyncpa [#allocation12], 1
    %2844 = vsyncpa [#allocation15], 1
    %2845 = vsyncpa [#allocation18], 1
    %2846 = vsyncpa [#allocation21], 1
    %2847 = vsyncpa [#allocation24], 1
    %2848 = vsyncpa [#allocation4], 1

</llo_original>
